<compile_context>
chip_gen: v6e
topology: v6e:2x2x1
jax: 0.10.0
libtpu: 0.0.40
codegen_flags: <defaults>
</compile_context>

<pallas_src>
import jax
import jax.numpy as jnp
from jax import lax
from jax.experimental import pallas as pl
from jax.experimental.pallas import tpu as pltpu

LANE = 128
BF16_PACK = 16  # sublane row pack for bf16


def _round_up(n, m):
    return ((n + m - 1) // m) * m


def _bottleneck_kernel(x_ref, w1_ref, b1_ref, w2s_ref, b2_ref, w3_ref, b3_ref,
                       o_ref, strip_ref):
    _, H, W, cin_p = x_ref.shape
    width_p = w2s_ref.shape[2]
    cout_p = w3_ref.shape[1]
    HW = H * W
    T = (strip_ref.shape[0] - HW) // 2      # top/bottom band rows (>= W, 16-aligned)

    x_bf = x_ref[0].reshape(HW, cin_p)      # bf16, lane-dense channels

    # --- conv1 (1x1, BN scale folded into weights) + bias + relu ---
    h1 = jnp.dot(x_bf, w1_ref[...], preferred_element_type=jnp.float32)
    h1 = jnp.maximum(h1 + b1_ref[...], 0.0)                 # (HW, width_p) f32
    h1b = h1.astype(jnp.bfloat16)

    # --- conv2 (3x3, pad=1, stride=1): bf16 im2col strip in persistent scratch ---
    # Strip row p, column blocks [dx=0 | dx=1 | dx=2] hold h1[p-1], h1[p], h1[p+1]
    # with the dx=+-1 taps zeroed at image-row edges.  Only two (HW, C) shifted
    # bf16 copies are materialized; the scratch zero bands provide the dy=+-1
    # spatial-row padding so the three dy windows are plain aligned views.
    q_idx = lax.broadcasted_iota(jnp.int32, (HW, 1), 0) % W
    zrow = jnp.zeros((1, width_p), jnp.bfloat16)
    left = jnp.concatenate([zrow, h1b[:HW - 1, :]], axis=0)   # h1[p, q-1]
    left = jnp.where(q_idx == 0, 0.0, left)
    right = jnp.concatenate([h1b[1:, :], zrow], axis=0)       # h1[p, q+1]
    right = jnp.where(q_idx == W - 1, 0.0, right)

    # Zero the bands every step (cheap: 2*T rows).  A pl.when(program_id == 0)
    # one-time init would be unsafe because the batch axis is "parallel"
    # (megacore-sharded): the second TensorCore never sees step 0.
    zband = jnp.zeros((T, 3 * width_p), jnp.bfloat16)
    strip_ref[pl.ds(0, T), :] = zband
    strip_ref[pl.ds(T + HW, T), :] = zband
    strip_ref[pl.ds(T, HW), pl.ds(0, width_p)] = left
    strip_ref[pl.ds(T, HW), pl.ds(width_p, width_p)] = h1b
    strip_ref[pl.ds(T, HW), pl.ds(2 * width_p, width_p)] = right

    # --- conv2 matmuls (3 dy taps, K = 3*width_p) + bias (no relu, per ref) ---
    acc = jnp.zeros((HW, width_p), jnp.float32)
    for dy in range(3):
        win = strip_ref[pl.ds(T + (dy - 1) * W, HW), :]       # aligned bf16 view
        acc = acc + jnp.dot(win, w2s_ref[dy], preferred_element_type=jnp.float32)
    h2 = acc + b2_ref[...]                                    # (HW, width_p) f32

    # --- conv3 (1x1) + bias + identity + relu ---
    h3 = jnp.dot(h2.astype(jnp.bfloat16), w3_ref[...],
                 preferred_element_type=jnp.float32)
    h3 = h3 + b3_ref[...]
    out = jnp.maximum(h3 + x_bf.astype(jnp.float32), 0.0)     # identity = x

    o_ref[0] = out.reshape(H, W, cout_p).astype(o_ref.dtype)


def bottleneck_forward(x_nhwc, params):
    """x_nhwc: (N, H, W, Cin) f32.  params (unpadded, f32, kernel layouts):
    w1 (Cin, Cw), w2 (3, 3, Cw, Cw), w3 (Cw, Cout), s*/b* (1, C)."""
    w1, s1, b1, w2, s2, b2, w3, s3, b3 = params
    N, H, W, cin = x_nhwc.shape
    width = w1.shape[1]
    cout = w3.shape[1]
    assert cin == cout, "residual path requires cin == cout (no downsample)"

    cin_p = _round_up(cin, LANE)
    width_p = _round_up(width, LANE)
    cout_p = _round_up(cout, LANE)
    HW = H * W
    T = _round_up(W, BF16_PACK)       # zero-band rows; keeps dy windows aligned

    # bf16 input, channel-padded to lane-dense size.
    xp = (jnp.zeros((N, H, W, cin_p), jnp.bfloat16)
          .at[..., :cin].set(x_nhwc.astype(jnp.bfloat16)))

    # BN scales folded into the weight output columns; bf16 MXU operands.
    w1p = (jnp.zeros((cin_p, width_p), jnp.float32)
           .at[:cin, :width].set(w1 * s1).astype(jnp.bfloat16))
    w3p = (jnp.zeros((width_p, cout_p), jnp.float32)
           .at[:width, :cout].set(w3 * s3).astype(jnp.bfloat16))
    w2p = (jnp.zeros((3, 3, width_p, width_p), jnp.float32)
           .at[:, :, :width, :width].set(w2 * s2.reshape(1, 1, 1, width)))
    w2s = w2p.reshape(3, 3 * width_p, width_p).astype(jnp.bfloat16)

    def padvec(v, cp):
        return jnp.zeros((1, cp), jnp.float32).at[:, :v.shape[1]].set(v)

    b1p, b2p, b3p = padvec(b1, width_p), padvec(b2, width_p), padvec(b3, cout_p)

    # Explicit scoped-VMEM limit: double-buffered x/out blocks + weights +
    # strip scratch + an allowance for in-kernel temporaries, with margin.
    x_blk = H * W * cin_p * 2
    o_blk = H * W * cout_p * 2
    w_bytes = (w1p.size + w2s.size + w3p.size) * 2 \
              + (b1p.size + b2p.size + b3p.size) * 4
    strip_bytes = (HW + 2 * T) * 3 * width_p * 2
    interm = HW * (6 * width_p + 3 * cout_p) * 4
    vmem_bytes = int(1.5 * (2 * (x_blk + o_blk) + 2 * w_bytes + strip_bytes + interm))
    vmem_bytes = min(max(vmem_bytes, 32 * 1024 * 1024), 100 * 1024 * 1024)

    def full(shape):
        nd = len(shape)
        return pl.BlockSpec(shape, lambda n, _nd=nd: (0,) * _nd)

    out_p = pl.pallas_call(
        _bottleneck_kernel,
        out_shape=jax.ShapeDtypeStruct((N, H, W, cout_p), jnp.bfloat16),
        grid_spec=pltpu.PrefetchScalarGridSpec(
            num_scalar_prefetch=0,
            grid=(N,),
            in_specs=[
                pl.BlockSpec((1, H, W, cin_p), lambda n: (n, 0, 0, 0)),
                full(w1p.shape), full(b1p.shape),
                full(w2s.shape), full(b2p.shape),
                full(w3p.shape), full(b3p.shape),
            ],
            out_specs=pl.BlockSpec((1, H, W, cout_p), lambda n: (n, 0, 0, 0)),
            scratch_shapes=[pltpu.VMEM((HW + 2 * T, 3 * width_p), jnp.bfloat16)],
        ),
        compiler_params=pltpu.CompilerParams(
            dimension_semantics=("parallel",),     # batch shards across v7x TCs
            vmem_limit_bytes=vmem_bytes),
    )(xp, w1p, b1p, w2s, b2p, w3p, b3p)

    return out_p[..., :cout].astype(jnp.float32)


def ref_forward(x_nhwc, params):
    """Pure-JAX f32 reference for validation."""
    w1, s1, b1, w2, s2, b2, w3, s3, b3 = params

    def c1x1(x, w):
        return jnp.einsum('nhwc,cd->nhwd', x, w)

    h1 = jnp.maximum(c1x1(x_nhwc, w1) * s1 + b1, 0.0)
    h2 = lax.conv_general_dilated(
        h1, w2, window_strides=(1, 1), padding=((1, 1), (1, 1)),
        dimension_numbers=('NHWC', 'HWIO', 'NHWC'))
    h2 = h2 * s2 + b2
    h3 = c1x1(h2, w3) * s3 + b3
    return jnp.maximum(h3 + x_nhwc, 0.0)


if __name__ == "__main__":
    key = jax.random.PRNGKey(0)
    N, H, W = 2, 16, 16
    inplanes, planes = 16, 4               # width = planes (base_width=64, groups=1)
    width = planes
    cout = planes * 4                      # == inplanes so residual add is valid
    assert cout == inplanes

    keys = jax.random.split(key, 16)
    # PyTorch-style NCHW input and (out, in, kh, kw) conv weights
    x_nchw = jax.random.normal(keys[0], (N, inplanes, H, W), jnp.float32)
    w1_t = 0.1 * jax.random.normal(keys[1], (width, inplanes, 1, 1), jnp.float32)
    w2_t = 0.1 * jax.random.normal(keys[2], (width, width, 3, 3), jnp.float32)
    w3_t = 0.1 * jax.random.normal(keys[3], (cout, width, 1, 1), jnp.float32)

    def bn_fold(kg, kb, km, kv, c, eps=1e-5):
        gamma = 1.0 + 0.1 * jax.random.normal(kg, (c,), jnp.float32)
        beta = 0.1 * jax.random.normal(kb, (c,), jnp.float32)
        mean = 0.1 * jax.random.normal(km, (c,), jnp.float32)
        var = 1.0 + 0.1 * jax.random.uniform(kv, (c,), jnp.float32)
        scale = gamma / jnp.sqrt(var + eps)
        bias = beta - mean * scale
        return scale.reshape(1, c), bias.reshape(1, c)

    s1, b1 = bn_fold(keys[4], keys[5], keys[6], keys[7], width)
    s2, b2 = bn_fold(keys[8], keys[9], keys[10], keys[11], width)
    s3, b3 = bn_fold(keys[12], keys[13], keys[14], keys[15], cout)

    # kernel layouts: (cin, cout) for 1x1, (kh, kw, in, out) for 3x3
    w1 = jnp.transpose(w1_t[:, :, 0, 0], (1, 0))
    w2 = jnp.transpose(w2_t, (2, 3, 1, 0))
    w3 = jnp.transpose(w3_t[:, :, 0, 0], (1, 0))
    params = (w1, s1, b1, w2, s2, b2, w3, s3, b3)

    x_nhwc = jnp.transpose(x_nchw, (0, 2, 3, 1))

    out = bottleneck_forward(x_nhwc, params)
    out = jax.block_until_ready(out)

    ref = ref_forward(x_nhwc, params)
    err = float(jnp.max(jnp.abs(out - ref)))
    # bf16 input/weights/output (f32 accumulate) vs f32 reference -> bf16 tolerance
    assert jnp.allclose(out, ref, atol=3e-2, rtol=3e-2), f"max abs err = {err}"
    print("KERNEL_OK")
</pallas_src>

<mosaic_0001>
module attributes {stable_mosaic.version = 11 : i64} {
  func.func @_bottleneck_kernel(%arg0: i32, %arg1: memref<1x16x16x128xbf16, #tpu.memory_space<vmem>>, %arg2: memref<128x128xbf16, #tpu.memory_space<vmem>>, %arg3: memref<1x128xf32, #tpu.memory_space<vmem>>, %arg4: memref<3x384x128xbf16, #tpu.memory_space<vmem>>, %arg5: memref<1x128xf32, #tpu.memory_space<vmem>>, %arg6: memref<128x128xbf16, #tpu.memory_space<vmem>>, %arg7: memref<1x128xf32, #tpu.memory_space<vmem>>, %arg8: memref<1x16x16x128xbf16, #tpu.memory_space<vmem>>, %arg9: memref<288x384xbf16, #tpu.memory_space<vmem>>) attributes {dimension_semantics = [#tpu.dimension_semantics<parallel>], iteration_bounds = array<i64: 2>, scalar_prefetch = 0 : i64, scratch_operands = 1 : i64, tpu.core_type = #tpu.core_type<tc>, window_params = [{transform_indices = @transform_0, window_bounds = array<i64: 1, 16, 16, 128>}, {pipeline_mode = #tpu.pipeline_mode<synchronous>, transform_indices = @transform_1, window_bounds = array<i64: 128, 128>}, {pipeline_mode = #tpu.pipeline_mode<synchronous>, transform_indices = @transform_2, window_bounds = array<i64: 1, 128>}, {pipeline_mode = #tpu.pipeline_mode<synchronous>, transform_indices = @transform_3, window_bounds = array<i64: 3, 384, 128>}, {pipeline_mode = #tpu.pipeline_mode<synchronous>, transform_indices = @transform_4, window_bounds = array<i64: 1, 128>}, {pipeline_mode = #tpu.pipeline_mode<synchronous>, transform_indices = @transform_5, window_bounds = array<i64: 128, 128>}, {pipeline_mode = #tpu.pipeline_mode<synchronous>, transform_indices = @transform_6, window_bounds = array<i64: 1, 128>}, {transform_indices = @transform_7, window_bounds = array<i64: 1, 16, 16, 128>}]} {
    %c0 = arith.constant 0 : index
    %c0_0 = arith.constant 0 : index
    %c0_1 = arith.constant 0 : index
    %c0_2 = arith.constant 0 : index
    %0 = vector.load %arg1[%c0, %c0_0, %c0_1, %c0_2] : memref<1x16x16x128xbf16, #tpu.memory_space<vmem>>, vector<1x16x16x128xbf16>
    %1 = vector.shape_cast %0 : vector<1x16x16x128xbf16> to vector<16x16x128xbf16>
    %2 = vector.shape_cast %1 : vector<16x16x128xbf16> to vector<256x128xbf16>
    %c0_3 = arith.constant 0 : index
    %c0_4 = arith.constant 0 : index
    %3 = vector.load %arg2[%c0_3, %c0_4] : memref<128x128xbf16, #tpu.memory_space<vmem>>, vector<128x128xbf16>
    %cst = arith.constant dense<0.000000e+00> : vector<256x128xf32>
    %4 = tpu.matmul %2, %3, %cst {dimension_numbers = #tpu.dot_dimension_numbers<[1], [0], [0], [1], [0, 0, 1, 1], [], []>} : vector<256x128xbf16>, vector<128x128xbf16>, vector<256x128xf32> -> vector<256x128xf32>
    %c0_5 = arith.constant 0 : index
    %c0_6 = arith.constant 0 : index
    %5 = vector.load %arg3[%c0_5, %c0_6] : memref<1x128xf32, #tpu.memory_space<vmem>>, vector<1x128xf32>
    %6 = vector.broadcast %5 : vector<1x128xf32> to vector<256x128xf32>
    %7 = arith.addf %4, %6 : vector<256x128xf32>
    %cst_7 = arith.constant 0.000000e+00 : f32
    %8 = vector.broadcast %cst_7 : f32 to vector<256x128xf32>
    %9 = arith.maximumf %7, %8 : vector<256x128xf32>
    %10 = arith.truncf %9 : vector<256x128xf32> to vector<256x128xbf16>
    %11 = tpu.iota {dimensions = array<i32: 0>} : vector<256x1xi32>
    %c16_i32 = arith.constant 16 : i32
    %c0_i32 = arith.constant 0 : i32
    %12 = arith.cmpi eq, %c16_i32, %c0_i32 : i32
    %c1_i32 = arith.constant 1 : i32
    %13 = arith.select %12, %c1_i32, %c16_i32 : i32
    %14 = vector.broadcast %13 : i32 to vector<256x1xi32>
    %15 = arith.remsi %11, %14 : vector<256x1xi32>
    %c0_i32_8 = arith.constant 0 : i32
    %16 = vector.broadcast %c0_i32_8 : i32 to vector<256x1xi32>
    %17 = arith.cmpi ne, %15, %16 : vector<256x1xi32>
    %c0_i32_9 = arith.constant 0 : i32
    %18 = vector.broadcast %c0_i32_9 : i32 to vector<256x1xi32>
    %19 = arith.cmpi slt, %15, %18 : vector<256x1xi32>
    %c0_i32_10 = arith.constant 0 : i32
    %20 = arith.cmpi slt, %13, %c0_i32_10 : i32
    %21 = vector.broadcast %20 : i1 to vector<256x1xi1>
    %22 = vector.broadcast %21 : vector<256x1xi1> to vector<256x1xi1>
    %23 = arith.xori %19, %22 : vector<256x1xi1>
    %24 = arith.andi %23, %17 : vector<256x1xi1>
    %25 = vector.broadcast %13 : i32 to vector<256x1xi32>
    %26 = arith.addi %15, %25 : vector<256x1xi32>
    %27 = arith.select %24, %26, %15 : vector<256x1xi1>, vector<256x1xi32>
    %cst_11 = arith.constant 0.000000e+00 : bf16
    %28 = vector.broadcast %cst_11 : bf16 to vector<1x128xbf16>
    %29 = vector.extract_strided_slice %10 {offsets = [0, 0], sizes = [255, 128], strides = [1, 1]} : vector<256x128xbf16> to vector<255x128xbf16>
    %30 = tpu.concatenate %28, %29 in 0 : vector<1x128xbf16>, vector<255x128xbf16> -> vector<256x128xbf16>
    %c0_i32_12 = arith.constant 0 : i32
    %31 = vector.broadcast %c0_i32_12 : i32 to vector<256x1xi32>
    %32 = arith.cmpi eq, %27, %31 : vector<256x1xi32>
    %cst_13 = arith.constant 0.000000e+00 : f32
    %33 = arith.truncf %cst_13 : f32 to bf16
    %34 = vector.shape_cast %32 : vector<256x1xi1> to vector<256x1xi1>
    %35 = vector.broadcast %34 : vector<256x1xi1> to vector<256x128xi1>
    %36 = vector.broadcast %33 : bf16 to vector<256x128xbf16>
    %37 = arith.select %35, %36, %30 : vector<256x128xi1>, vector<256x128xbf16>
    %38 = vector.extract_strided_slice %10 {offsets = [1, 0], sizes = [255, 128], strides = [1, 1]} : vector<256x128xbf16> to vector<255x128xbf16>
    %39 = tpu.concatenate %38, %28 in 0 : vector<255x128xbf16>, vector<1x128xbf16> -> vector<256x128xbf16>
    %c15_i32 = arith.constant 15 : i32
    %40 = vector.broadcast %c15_i32 : i32 to vector<256x1xi32>
    %41 = arith.cmpi eq, %27, %40 : vector<256x1xi32>
    %cst_14 = arith.constant 0.000000e+00 : f32
    %42 = arith.truncf %cst_14 : f32 to bf16
    %43 = vector.shape_cast %41 : vector<256x1xi1> to vector<256x1xi1>
    %44 = vector.broadcast %43 : vector<256x1xi1> to vector<256x128xi1>
    %45 = vector.broadcast %42 : bf16 to vector<256x128xbf16>
    %46 = arith.select %44, %45, %39 : vector<256x128xi1>, vector<256x128xbf16>
    %cst_15 = arith.constant 0.000000e+00 : bf16
    %47 = vector.broadcast %cst_15 : bf16 to vector<16x384xbf16>
    %c0_16 = arith.constant 0 : index
    %c0_17 = arith.constant 0 : index
    %48 = vector.load %arg9[%c0_16, %c0_17] : memref<288x384xbf16, #tpu.memory_space<vmem>>, vector<16x384xbf16>
    tpu.vector_store %arg9[%c0_16, %c0_17], %47 {strides = array<i32>} : memref<288x384xbf16, #tpu.memory_space<vmem>>, vector<16x384xbf16>,
    %c272 = arith.constant 272 : index
    %c0_18 = arith.constant 0 : index
    %49 = vector.load %arg9[%c272, %c0_18] : memref<288x384xbf16, #tpu.memory_space<vmem>>, vector<16x384xbf16>
    tpu.vector_store %arg9[%c272, %c0_18], %47 {strides = array<i32>} : memref<288x384xbf16, #tpu.memory_space<vmem>>, vector<16x384xbf16>,
    %c16 = arith.constant 16 : index
    %c0_19 = arith.constant 0 : index
    %50 = vector.load %arg9[%c16, %c0_19] : memref<288x384xbf16, #tpu.memory_space<vmem>>, vector<256x128xbf16>
    tpu.vector_store %arg9[%c16, %c0_19], %37 {strides = array<i32>} : memref<288x384xbf16, #tpu.memory_space<vmem>>, vector<256x128xbf16>,
    %c16_20 = arith.constant 16 : index
    %c128 = arith.constant 128 : index
    %51 = vector.load %arg9[%c16_20, %c128] : memref<288x384xbf16, #tpu.memory_space<vmem>>, vector<256x128xbf16>
    tpu.vector_store %arg9[%c16_20, %c128], %10 {strides = array<i32>} : memref<288x384xbf16, #tpu.memory_space<vmem>>, vector<256x128xbf16>,
    %c16_21 = arith.constant 16 : index
    %c256 = arith.constant 256 : index
    %52 = vector.load %arg9[%c16_21, %c256] : memref<288x384xbf16, #tpu.memory_space<vmem>>, vector<256x128xbf16>
    tpu.vector_store %arg9[%c16_21, %c256], %46 {strides = array<i32>} : memref<288x384xbf16, #tpu.memory_space<vmem>>, vector<256x128xbf16>,
    %cst_22 = arith.constant 0.000000e+00 : f32
    %53 = vector.broadcast %cst_22 : f32 to vector<256x128xf32>
    %c0_23 = arith.constant 0 : index
    %c0_24 = arith.constant 0 : index
    %54 = vector.load %arg9[%c0_23, %c0_24] : memref<288x384xbf16, #tpu.memory_space<vmem>>, vector<256x384xbf16>
    %c0_25 = arith.constant 0 : index
    %c0_26 = arith.constant 0 : index
    %c0_27 = arith.constant 0 : index
    %55 = vector.load %arg4[%c0_25, %c0_26, %c0_27] : memref<3x384x128xbf16, #tpu.memory_space<vmem>>, vector<1x384x128xbf16>
    %56 = vector.shape_cast %55 : vector<1x384x128xbf16> to vector<384x128xbf16>
    %cst_28 = arith.constant dense<0.000000e+00> : vector<256x128xf32>
    %57 = tpu.matmul %54, %56, %cst_28 {dimension_numbers = #tpu.dot_dimension_numbers<[1], [0], [0], [1], [0, 0, 1, 1], [], []>} : vector<256x384xbf16>, vector<384x128xbf16>, vector<256x128xf32> -> vector<256x128xf32>
    %58 = arith.addf %53, %57 : vector<256x128xf32>
    %c16_29 = arith.constant 16 : index
    %c0_30 = arith.constant 0 : index
    %59 = vector.load %arg9[%c16_29, %c0_30] : memref<288x384xbf16, #tpu.memory_space<vmem>>, vector<256x384xbf16>
    %c1 = arith.constant 1 : index
    %c0_31 = arith.constant 0 : index
    %c0_32 = arith.constant 0 : index
    %60 = vector.load %arg4[%c1, %c0_31, %c0_32] : memref<3x384x128xbf16, #tpu.memory_space<vmem>>, vector<1x384x128xbf16>
    %61 = vector.shape_cast %60 : vector<1x384x128xbf16> to vector<384x128xbf16>
    %cst_33 = arith.constant dense<0.000000e+00> : vector<256x128xf32>
    %62 = tpu.matmul %59, %61, %cst_33 {dimension_numbers = #tpu.dot_dimension_numbers<[1], [0], [0], [1], [0, 0, 1, 1], [], []>} : vector<256x384xbf16>, vector<384x128xbf16>, vector<256x128xf32> -> vector<256x128xf32>
    %63 = arith.addf %58, %62 : vector<256x128xf32>
    %c32 = arith.constant 32 : index
    %c0_34 = arith.constant 0 : index
    %64 = vector.load %arg9[%c32, %c0_34] : memref<288x384xbf16, #tpu.memory_space<vmem>>, vector<256x384xbf16>
    %c2 = arith.constant 2 : index
    %c0_35 = arith.constant 0 : index
    %c0_36 = arith.constant 0 : index
    %65 = vector.load %arg4[%c2, %c0_35, %c0_36] : memref<3x384x128xbf16, #tpu.memory_space<vmem>>, vector<1x384x128xbf16>
    %66 = vector.shape_cast %65 : vector<1x384x128xbf16> to vector<384x128xbf16>
    %cst_37 = arith.constant dense<0.000000e+00> : vector<256x128xf32>
    %67 = tpu.matmul %64, %66, %cst_37 {dimension_numbers = #tpu.dot_dimension_numbers<[1], [0], [0], [1], [0, 0, 1, 1], [], []>} : vector<256x384xbf16>, vector<384x128xbf16>, vector<256x128xf32> -> vector<256x128xf32>
    %68 = arith.addf %63, %67 : vector<256x128xf32>
    %c0_38 = arith.constant 0 : index
    %c0_39 = arith.constant 0 : index
    %69 = vector.load %arg5[%c0_38, %c0_39] : memref<1x128xf32, #tpu.memory_space<vmem>>, vector<1x128xf32>
    %70 = vector.broadcast %69 : vector<1x128xf32> to vector<256x128xf32>
    %71 = arith.addf %68, %70 : vector<256x128xf32>
    %72 = arith.truncf %71 : vector<256x128xf32> to vector<256x128xbf16>
    %c0_40 = arith.constant 0 : index
    %c0_41 = arith.constant 0 : index
    %73 = vector.load %arg6[%c0_40, %c0_41] : memref<128x128xbf16, #tpu.memory_space<vmem>>, vector<128x128xbf16>
    %cst_42 = arith.constant dense<0.000000e+00> : vector<256x128xf32>
    %74 = tpu.matmul %72, %73, %cst_42 {dimension_numbers = #tpu.dot_dimension_numbers<[1], [0], [0], [1], [0, 0, 1, 1], [], []>} : vector<256x128xbf16>, vector<128x128xbf16>, vector<256x128xf32> -> vector<256x128xf32>
    %c0_43 = arith.constant 0 : index
    %c0_44 = arith.constant 0 : index
    %75 = vector.load %arg7[%c0_43, %c0_44] : memref<1x128xf32, #tpu.memory_space<vmem>>, vector<1x128xf32>
    %76 = vector.broadcast %75 : vector<1x128xf32> to vector<256x128xf32>
    %77 = arith.addf %74, %76 : vector<256x128xf32>
    %78 = arith.extf %2 : vector<256x128xbf16> to vector<256x128xf32>
    %79 = arith.addf %77, %78 : vector<256x128xf32>
    %cst_45 = arith.constant 0.000000e+00 : f32
    %80 = vector.broadcast %cst_45 : f32 to vector<256x128xf32>
    %81 = arith.maximumf %79, %80 : vector<256x128xf32>
    %82 = vector.shape_cast %81 : vector<256x128xf32> to vector<16x16x128xf32>
    %83 = arith.truncf %82 : vector<16x16x128xf32> to vector<16x16x128xbf16>
    %c0_46 = arith.constant 0 : index
    %c0_47 = arith.constant 0 : index
    %c0_48 = arith.constant 0 : index
    %c0_49 = arith.constant 0 : index
    %84 = vector.load %arg8[%c0_46, %c0_47, %c0_48, %c0_49] : memref<1x16x16x128xbf16, #tpu.memory_space<vmem>>, vector<1x16x16x128xbf16>
    %85 = vector.shape_cast %84 : vector<1x16x16x128xbf16> to vector<16x16x128xbf16>
    %86 = vector.shape_cast %83 : vector<16x16x128xbf16> to vector<1x16x16x128xbf16>
    tpu.vector_store %arg8[%c0_46, %c0_47, %c0_48, %c0_49], %86 {strides = array<i32>} : memref<1x16x16x128xbf16, #tpu.memory_space<vmem>>, vector<1x16x16x128xbf16>,
    return
  }
  func.func @transform_0(%arg0: i32) -> (i32, i32, i32, i32) {
    %c0_i32 = arith.constant 0 : i32
    %c0_i32_0 = arith.constant 0 : i32
    %c0_i32_1 = arith.constant 0 : i32
    %c0_i32_2 = arith.constant 0 : i32
    return %arg0, %c0_i32, %c0_i32_0, %c0_i32_1 : i32, i32, i32, i32
  }
  func.func @transform_1(%arg0: i32) -> (i32, i32) {
    %c0_i32 = arith.constant 0 : i32
    %c0_i32_0 = arith.constant 0 : i32
    %c0_i32_1 = arith.constant 0 : i32
    return %c0_i32, %c0_i32_0 : i32, i32
  }
  func.func @transform_2(%arg0: i32) -> (i32, i32) {
    %c0_i32 = arith.constant 0 : i32
    %c0_i32_0 = arith.constant 0 : i32
    %c0_i32_1 = arith.constant 0 : i32
    return %c0_i32, %c0_i32_0 : i32, i32
  }
  func.func @transform_3(%arg0: i32) -> (i32, i32, i32) {
    %c0_i32 = arith.constant 0 : i32
    %c0_i32_0 = arith.constant 0 : i32
    %c0_i32_1 = arith.constant 0 : i32
    %c0_i32_2 = arith.constant 0 : i32
    return %c0_i32, %c0_i32_0, %c0_i32_1 : i32, i32, i32
  }
  func.func @transform_4(%arg0: i32) -> (i32, i32) {
    %c0_i32 = arith.constant 0 : i32
    %c0_i32_0 = arith.constant 0 : i32
    %c0_i32_1 = arith.constant 0 : i32
    return %c0_i32, %c0_i32_0 : i32, i32
  }
  func.func @transform_5(%arg0: i32) -> (i32, i32) {
    %c0_i32 = arith.constant 0 : i32
    %c0_i32_0 = arith.constant 0 : i32
    %c0_i32_1 = arith.constant 0 : i32
    return %c0_i32, %c0_i32_0 : i32, i32
  }
  func.func @transform_6(%arg0: i32) -> (i32, i32) {
    %c0_i32 = arith.constant 0 : i32
    %c0_i32_0 = arith.constant 0 : i32
    %c0_i32_1 = arith.constant 0 : i32
    return %c0_i32, %c0_i32_0 : i32, i32
  }
  func.func @transform_7(%arg0: i32) -> (i32, i32, i32, i32) {
    %c0_i32 = arith.constant 0 : i32
    %c0_i32_0 = arith.constant 0 : i32
    %c0_i32_1 = arith.constant 0 : i32
    %c0_i32_2 = arith.constant 0 : i32
    return %arg0, %c0_i32, %c0_i32_0, %c0_i32_1 : i32, i32, i32, i32
  }
}

</mosaic_0001>

<llo_original>
// kernel: tpu_custom_call.1
$region0: #{tpu_custom_call.1}
  #allocation0 [shape = 'u32[]', space=smem, size = 0x4, offset = 0x4, fixed_abs, tag = 'smem constant byte address 0x4 - core index']
  #allocation1 [shape = 'u32[144,128]{1,0:T(1,128)}', space=vmem, size = 0x12000, scoped, tag = 'internal scratch']
  #allocation2 [shape = 'bf16[288,384]{1,0:T(8,128)(2,1)}', space=vmem, size = 0x36000, scoped, tag = 'scratch operand']
  %s0 = inlined_call_operand.hbm [shape: bf16[2,16,16,128], index: 0, kind: input, shape index: {}]
  %s1 = inlined_call_operand.hbm [shape: bf16[128,128], index: 1, kind: input, shape index: {}]
  %s2 = inlined_call_operand.vmem [shape: f32[1,128], index: 2, kind: input, shape index: {}]
  %s3 = inlined_call_operand.hbm [shape: bf16[3,384,128], index: 3, kind: input, shape index: {}]
  %s4 = inlined_call_operand.vmem [shape: f32[1,128], index: 4, kind: input, shape index: {}]
  %s5 = inlined_call_operand.hbm [shape: bf16[128,128], index: 5, kind: input, shape index: {}]
  %s6 = inlined_call_operand.vmem [shape: f32[1,128], index: 6, kind: input, shape index: {}]
  %s7 = inlined_call_operand.hbm [shape: bf16[2,16,16,128], index: 7, kind: output, shape index: {}]
  %s8 = sld [smem:[#allocation0]]
  $region77: #{tpu_custom_call.1} parent=0
    _
  %s10 = ssub.s32 1, %s8
  %s11 = scalar_select 0, %s10, %s8
  $region1: #{tpu_custom_call.1} parent=0
    #allocation3 [shape = 'u8[131072]{0}', space=vmem, size = 0x20000, scoped, tag = 'input window, operand 0']
    #allocation4 [shape = 's32[2]{0}', space=sflag, size = 0x8, scoped, tag = 'scoped memory for tpu_custom_call.1']
    #allocation5 [shape = 's32[2]{0}', space=sflag, size = 0x8, scoped, tag = 'scoped memory for tpu_custom_call.1']
    #allocation6 [shape = 'u8[32768]{0}', space=vmem, size = 0x8000, scoped, tag = 'input window, operand 1, single buffered']
    #allocation7 [shape = 's32[1]{0}', space=sflag, size = 0x4, scoped, tag = 'scoped memory for tpu_custom_call.1']
    #allocation8 [shape = 'u8[294912]{0}', space=vmem, size = 0x48000, scoped, tag = 'input window, operand 3, single buffered']
    #allocation9 [shape = 'u8[32768]{0}', space=vmem, size = 0x8000, scoped, tag = 'input window, operand 5, single buffered']
    #allocation10 [shape = 's32[1]{0}', space=sflag, size = 0x4, scoped, tag = 'scoped memory for tpu_custom_call.1']
    #allocation11 [shape = 'u8[131072]{0}', space=vmem, size = 0x20000, scoped, tag = 'output window, operand 0']
    %12 = vsyncpa [#allocation4], 0
    %s13 = scalar_lea.sflag [#allocation4], 1
    %14 = vsyncpa %s13, 0
    %15 = vsyncpa [#allocation7], 0
    %16 = vsyncpa [#allocation10], 0
    %17 = vsyncpa [#allocation5], 0
    %s18 = scalar_lea.sflag [#allocation5], 1
    %19 = vsyncpa %s18, 0
    loop: start=0, step=1, limit=4
    $region2: #{tpu_custom_call.1} parent=1 // loop_pre_header
      _
    $region3: #{tpu_custom_call.1} parent=1 // loop_header
      %s21 = sphi 0, %s25
      %p22 = scmp.ge.s32.totalorder %s21, 4
      %s31 = sphi 0, %s33
      %s34 = sphi 0, %s31
      %s35 = sphi 0, %s34
      %s51 = sphi 0, %s35
      %s55 = sphi 0, %s55
      %s57 = sphi 0, %s55
      %s58 = sphi 0, %s57
      %s72 = sphi 0, %s58
      %s76 = sphi 0, %s76
      %s78 = sphi 0, %s76
      %s79 = sphi 0, %s78
      %s93 = sphi 0, %s79
      %s97 = sphi 0, %s97
      %s99 = sphi 0, %s97
      %s100 = sphi 0, %s99
      %s114 = sphi 0, %s100
      %s118 = sphi 0, %s118
      %s120 = sphi 0, %s118
      %s121 = sphi 0, %s120
      %s135 = sphi 0, %s121
      %s139 = sphi 0, %s139
      %s141 = sphi 0, %s139
      %s142 = sphi 0, %s141
      %s156 = sphi 0, %s142
      %s160 = sphi 0, %s160
      %s162 = sphi 0, %s160
      %s163 = sphi 0, %s162
      %s177 = sphi 0, %s163
      %s183 = sphi 0, %s185
      %s186 = sphi 0, %s183
      %s187 = sphi 0, %s186
      %s203 = sphi 0, %s187
    $region4: #{tpu_custom_call.1} parent=1 // loop_header_branch
      %24 = sbr.rel (%p22) target = $region8
    $region5: #{tpu_custom_call.1} parent=1 // loop_body
      %s26 = ssub.s32 %s21, 1
      %s27 = ssub.s32 %s21, 2
      %s28 = sadd.s32 %s21, 1
      %s29 = ssub.s32 %s21, %s28
      %p30 = scmp.eq.s32.totalorder %s29, 0
      %s32 = sadd.s32 %s31, 1
      %s33 = scalar_select %p30, %s31, %s32
      %p36 = pneg %p30
      %p37 = scmp.eq.s32.totalorder %s21, 1
      %p38 = por %p36, %p37
      %p39 = scmp.ne.s32.totalorder %s31, %s34
      %p40 = scmp.eq.s32.totalorder %s21, 0
      %p41 = por %p39, %p40
      %p42 = scmp.ne.s32.totalorder %s31, %s34
      %p43 = scmp.eq.s32.totalorder %s26, 1
      %p44 = por %p42, %p43
      %p45 = scmp.ne.s32.totalorder %s34, %s35
      %p46 = scmp.eq.s32.totalorder %s26, 0
      %p47 = por %p45, %p46
      %p48 = scmp.ne.s32.totalorder %s34, %s35
      %p49 = scmp.eq.s32.totalorder %s27, 1
      %p50 = por %p48, %p49
      %p52 = scmp.ne.s32.totalorder %s35, %s51
      %p53 = scmp.eq.s32.totalorder %s27, 0
      %p54 = por %p52, %p53
      %s56 = sadd.s32 %s55, 1
      %p59 = scmp.eq.s32.totalorder %s21, 1
      %p60 = scmp.ne.s32.totalorder %s55, %s57
      %p61 = scmp.eq.s32.totalorder %s21, 0
      %p62 = por %p60, %p61
      %p63 = scmp.ne.s32.totalorder %s55, %s57
      %p64 = scmp.eq.s32.totalorder %s26, 1
      %p65 = por %p63, %p64
      %p66 = scmp.ne.s32.totalorder %s57, %s58
      %p67 = scmp.eq.s32.totalorder %s26, 0
      %p68 = por %p66, %p67
      %p69 = scmp.ne.s32.totalorder %s57, %s58
      %p70 = scmp.eq.s32.totalorder %s27, 1
      %p71 = por %p69, %p70
      %p73 = scmp.ne.s32.totalorder %s58, %s72
      %p74 = scmp.eq.s32.totalorder %s27, 0
      %p75 = por %p73, %p74
      %s77 = sadd.s32 %s76, 1
      %p80 = scmp.eq.s32.totalorder %s21, 1
      %p81 = scmp.ne.s32.totalorder %s76, %s78
      %p82 = scmp.eq.s32.totalorder %s21, 0
      %p83 = por %p81, %p82
      %p84 = scmp.ne.s32.totalorder %s76, %s78
      %p85 = scmp.eq.s32.totalorder %s26, 1
      %p86 = por %p84, %p85
      %p87 = scmp.ne.s32.totalorder %s78, %s79
      %p88 = scmp.eq.s32.totalorder %s26, 0
      %p89 = por %p87, %p88
      %p90 = scmp.ne.s32.totalorder %s78, %s79
      %p91 = scmp.eq.s32.totalorder %s27, 1
      %p92 = por %p90, %p91
      %p94 = scmp.ne.s32.totalorder %s79, %s93
      %p95 = scmp.eq.s32.totalorder %s27, 0
      %p96 = por %p94, %p95
      %s98 = sadd.s32 %s97, 1
      %p101 = scmp.eq.s32.totalorder %s21, 1
      %p102 = scmp.ne.s32.totalorder %s97, %s99
      %p103 = scmp.eq.s32.totalorder %s21, 0
      %p104 = por %p102, %p103
      %p105 = scmp.ne.s32.totalorder %s97, %s99
      %p106 = scmp.eq.s32.totalorder %s26, 1
      %p107 = por %p105, %p106
      %p108 = scmp.ne.s32.totalorder %s99, %s100
      %p109 = scmp.eq.s32.totalorder %s26, 0
      %p110 = por %p108, %p109
      %p111 = scmp.ne.s32.totalorder %s99, %s100
      %p112 = scmp.eq.s32.totalorder %s27, 1
      %p113 = por %p111, %p112
      %p115 = scmp.ne.s32.totalorder %s100, %s114
      %p116 = scmp.eq.s32.totalorder %s27, 0
      %p117 = por %p115, %p116
      %s119 = sadd.s32 %s118, 1
      %p122 = scmp.eq.s32.totalorder %s21, 1
      %p123 = scmp.ne.s32.totalorder %s118, %s120
      %p124 = scmp.eq.s32.totalorder %s21, 0
      %p125 = por %p123, %p124
      %p126 = scmp.ne.s32.totalorder %s118, %s120
      %p127 = scmp.eq.s32.totalorder %s26, 1
      %p128 = por %p126, %p127
      %p129 = scmp.ne.s32.totalorder %s120, %s121
      %p130 = scmp.eq.s32.totalorder %s26, 0
      %p131 = por %p129, %p130
      %p132 = scmp.ne.s32.totalorder %s120, %s121
      %p133 = scmp.eq.s32.totalorder %s27, 1
      %p134 = por %p132, %p133
      %p136 = scmp.ne.s32.totalorder %s121, %s135
      %p137 = scmp.eq.s32.totalorder %s27, 0
      %p138 = por %p136, %p137
      %s140 = sadd.s32 %s139, 1
      %p143 = scmp.eq.s32.totalorder %s21, 1
      %p144 = scmp.ne.s32.totalorder %s139, %s141
      %p145 = scmp.eq.s32.totalorder %s21, 0
      %p146 = por %p144, %p145
      %p147 = scmp.ne.s32.totalorder %s139, %s141
      %p148 = scmp.eq.s32.totalorder %s26, 1
      %p149 = por %p147, %p148
      %p150 = scmp.ne.s32.totalorder %s141, %s142
      %p151 = scmp.eq.s32.totalorder %s26, 0
      %p152 = por %p150, %p151
      %p153 = scmp.ne.s32.totalorder %s141, %s142
      %p154 = scmp.eq.s32.totalorder %s27, 1
      %p155 = por %p153, %p154
      %p157 = scmp.ne.s32.totalorder %s142, %s156
      %p158 = scmp.eq.s32.totalorder %s27, 0
      %p159 = por %p157, %p158
      %s161 = sadd.s32 %s160, 1
      %p164 = scmp.eq.s32.totalorder %s21, 1
      %p165 = scmp.ne.s32.totalorder %s160, %s162
      %p166 = scmp.eq.s32.totalorder %s21, 0
      %p167 = por %p165, %p166
      %p168 = scmp.ne.s32.totalorder %s160, %s162
      %p169 = scmp.eq.s32.totalorder %s26, 1
      %p170 = por %p168, %p169
      %p171 = scmp.ne.s32.totalorder %s162, %s163
      %p172 = scmp.eq.s32.totalorder %s26, 0
      %p173 = por %p171, %p172
      %p174 = scmp.ne.s32.totalorder %s162, %s163
      %p175 = scmp.eq.s32.totalorder %s27, 1
      %p176 = por %p174, %p175
      %p178 = scmp.ne.s32.totalorder %s163, %s177
      %p179 = scmp.eq.s32.totalorder %s27, 0
      %p180 = por %p178, %p179
      %s181 = ssub.s32 %s21, %s28
      %p182 = scmp.eq.s32.totalorder %s181, 0
      %s184 = sadd.s32 %s183, 1
      %s185 = scalar_select %p182, %s183, %s184
      %p188 = pneg %p182
      %p189 = scmp.eq.s32.totalorder %s21, 1
      %p190 = por %p188, %p189
      %p191 = scmp.ne.s32.totalorder %s183, %s186
      %p192 = scmp.eq.s32.totalorder %s21, 0
      %p193 = por %p191, %p192
      %p194 = scmp.ne.s32.totalorder %s183, %s186
      %p195 = scmp.eq.s32.totalorder %s26, 1
      %p196 = por %p194, %p195
      %p197 = scmp.ne.s32.totalorder %s186, %s187
      %p198 = scmp.eq.s32.totalorder %s26, 0
      %p199 = por %p197, %p198
      %p200 = scmp.ne.s32.totalorder %s186, %s187
      %p201 = scmp.eq.s32.totalorder %s27, 1
      %p202 = por %p200, %p201
      %p204 = scmp.ne.s32.totalorder %s187, %s203
      %p205 = scmp.eq.s32.totalorder %s27, 0
      %p206 = por %p204, %p205
      %p207 = scmp.le.s32.totalorder 1, %s21
      %p208 = scmp.lt.s32.totalorder %s21, 3
      %p209 = pnand %p207, %p208
      %p210 = pneg %p209
      // Predicated region
      $region9: #{tpu_custom_call.1} parent=5 // pred_check
        _
      $region10: #{tpu_custom_call.1} parent=5 // pred_check_branch
        %212 = sbr.rel (%p209) target = $region12
      $region11: #{tpu_custom_call.1} parent=5 // pred_region
        %s213 = ssub.s32 %s21, 1
        // Predicated region
        $region13: #{tpu_custom_call.1} parent=11 // pred_check
          %p214 = pneg %p68
        $region14: #{tpu_custom_call.1} parent=11 // pred_check_branch
          %216 = sbr.rel (%p214) target = $region16
        $region15: #{tpu_custom_call.1} parent=11 // pred_region
          %s218 = ssub.s32 1024, 1024
          %219 = vsyncadd [#allocation7], %s218
          %s220 = sshll.u32 [#allocation6], 4
          %s221 = int_to_ptr.vmem [resolvable:$true] %s220
          %226 = dma.hbm_to_vmem [thread:$0]  %s1, 1024, %s221, [#allocation7], 64, 64, 4
        $region16: #{tpu_custom_call.1} parent=11 // pred_fallthru
          _
        // Predicated region
        $region17: #{tpu_custom_call.1} parent=11 // pred_check
          %p227 = pneg %p89
        $region18: #{tpu_custom_call.1} parent=11 // pred_check_branch
          %229 = sbr.rel (%p227) target = $region20
        $region19: #{tpu_custom_call.1} parent=11 // pred_region
          _
        $region20: #{tpu_custom_call.1} parent=11 // pred_fallthru
          _
        // Predicated region
        $region21: #{tpu_custom_call.1} parent=11 // pred_check
          %p230 = pneg %p110
        $region22: #{tpu_custom_call.1} parent=11 // pred_check_branch
          %232 = sbr.rel (%p230) target = $region24
        $region23: #{tpu_custom_call.1} parent=11 // pred_region
          %s234 = ssub.s32 9216, 9216
          %235 = vsyncadd [#allocation7], %s234
          %s236 = sshll.u32 [#allocation8], 4
          %s237 = int_to_ptr.vmem [resolvable:$true] %s236
          %242 = dma.hbm_to_vmem [thread:$0]  %s3, 9216, %s237, [#allocation7], 64, 64, 4
        $region24: #{tpu_custom_call.1} parent=11 // pred_fallthru
          _
        // Predicated region
        $region25: #{tpu_custom_call.1} parent=11 // pred_check
          %p243 = pneg %p131
        $region26: #{tpu_custom_call.1} parent=11 // pred_check_branch
          %245 = sbr.rel (%p243) target = $region28
        $region27: #{tpu_custom_call.1} parent=11 // pred_region
          _
        $region28: #{tpu_custom_call.1} parent=11 // pred_fallthru
          _
        // Predicated region
        $region29: #{tpu_custom_call.1} parent=11 // pred_check
          %p246 = pneg %p152
        $region30: #{tpu_custom_call.1} parent=11 // pred_check_branch
          %248 = sbr.rel (%p246) target = $region32
        $region31: #{tpu_custom_call.1} parent=11 // pred_region
          %s250 = ssub.s32 1024, 1024
          %251 = vsyncadd [#allocation10], %s250
          %s252 = sshll.u32 [#allocation9], 4
          %s253 = int_to_ptr.vmem [resolvable:$true] %s252
          %258 = dma.hbm_to_vmem [thread:$0]  %s5, 1024, %s253, [#allocation10], 64, 64, 4
        $region32: #{tpu_custom_call.1} parent=11 // pred_fallthru
          _
        // Predicated region
        $region33: #{tpu_custom_call.1} parent=11 // pred_check
          %p259 = pneg %p173
        $region34: #{tpu_custom_call.1} parent=11 // pred_check_branch
          %261 = sbr.rel (%p259) target = $region36
        $region35: #{tpu_custom_call.1} parent=11 // pred_region
          _
        $region36: #{tpu_custom_call.1} parent=11 // pred_fallthru
          _
      $region12: #{tpu_custom_call.1} parent=5 // pred_fallthru
        _
      %p262 = scmp.lt.s32.totalorder %s21, 2
      // Predicated region
      $region37: #{tpu_custom_call.1} parent=5 // pred_check
        %p263 = pneg %p262
      $region38: #{tpu_custom_call.1} parent=5 // pred_check_branch
        %265 = sbr.rel (%p263) target = $region40
      $region39: #{tpu_custom_call.1} parent=5 // pred_region
        // Predicated region
        $region41: #{tpu_custom_call.1} parent=39 // pred_check
          %p266 = pneg %p41
        $region42: #{tpu_custom_call.1} parent=39 // pred_check_branch
          %268 = sbr.rel (%p266) target = $region44
        $region43: #{tpu_custom_call.1} parent=39 // pred_region
          %s269 = sand.u32 %s31, 1
          %s270 = scalar_lea.sflag [#allocation4], %s269
          %s271 = sand.u32 %s31, 1
          %s272 = smul.addr %s271, 128
          %s273 = scalar_lea.vmem [#allocation3], %s272
          %s275 = ssub.s32 2048, 2048
          %276 = vsyncadd %s270, %s275
          %s277 = smul.addr %s21, 32
          %s278 = smul.addr %s277, 64
          %s279 = scalar_lea.hbm %s0, %s278
          %s280 = sshll.u32 %s273, 4
          %s281 = int_to_ptr.vmem [resolvable:$true] %s280
          %286 = dma.hbm_to_vmem [thread:$0]  %s279, 2048, %s281, %s270, 64, 64, 4
        $region44: #{tpu_custom_call.1} parent=39 // pred_fallthru
          _
      $region40: #{tpu_custom_call.1} parent=5 // pred_fallthru
        _
      %p287 = scmp.le.s32.totalorder 1, %s21
      %p288 = scmp.lt.s32.totalorder %s21, 3
      %p289 = pnand %p287, %p288
      %p290 = pneg %p289
      // Predicated region
      $region45: #{tpu_custom_call.1} parent=5 // pred_check
        _
      $region46: #{tpu_custom_call.1} parent=5 // pred_check_branch
        %292 = sbr.rel (%p289) target = $region48
      $region47: #{tpu_custom_call.1} parent=5 // pred_region
        %s293 = ssub.s32 %s21, 1
        %s294 = sand.u32 %s34, 1
        %s295 = scalar_lea.sflag [#allocation4], %s294
        %s296 = sand.u32 %s34, 1
        %s297 = smul.addr %s296, 128
        %s298 = scalar_lea.vmem [#allocation3], %s297
        // Predicated region
        $region49: #{tpu_custom_call.1} parent=47 // pred_check
          %p299 = pneg %p47
        $region50: #{tpu_custom_call.1} parent=47 // pred_check_branch
          %301 = sbr.rel (%p299) target = $region52
        $region51: #{tpu_custom_call.1} parent=47 // pred_region
          %302 = dma.done %s295, 2048
        $region52: #{tpu_custom_call.1} parent=47 // pred_fallthru
          _
        // Predicated region
        $region53: #{tpu_custom_call.1} parent=47 // pred_check
          %p303 = pneg %p68
        $region54: #{tpu_custom_call.1} parent=47 // pred_check_branch
          %305 = sbr.rel (%p303) target = $region56
        $region55: #{tpu_custom_call.1} parent=47 // pred_region
          %306 = dma.done [#allocation7], 1024
        $region56: #{tpu_custom_call.1} parent=47 // pred_fallthru
          _
        // Predicated region
        $region57: #{tpu_custom_call.1} parent=47 // pred_check
          %p307 = pneg %p110
        $region58: #{tpu_custom_call.1} parent=47 // pred_check_branch
          %309 = sbr.rel (%p307) target = $region60
        $region59: #{tpu_custom_call.1} parent=47 // pred_region
          %310 = dma.done [#allocation7], 9216
        $region60: #{tpu_custom_call.1} parent=47 // pred_fallthru
          _
        // Predicated region
        $region61: #{tpu_custom_call.1} parent=47 // pred_check
          %p311 = pneg %p152
        $region62: #{tpu_custom_call.1} parent=47 // pred_check_branch
          %313 = sbr.rel (%p311) target = $region64
        $region63: #{tpu_custom_call.1} parent=47 // pred_region
          %314 = dma.done [#allocation10], 1024
        $region64: #{tpu_custom_call.1} parent=47 // pred_fallthru
          _
        %s315 = sand.u32 %s34, 1
        %s316 = scalar_lea.sflag [#allocation4], %s315
        %s317 = sand.u32 %s34, 1
        %s318 = smul.addr %s317, 128
        %s319 = scalar_lea.vmem [#allocation3], %s318
        %p320 = pneg %p47
        %p321 = pneg %p44
        %p322 = pneg %p68
        %p323 = pneg %p65
        %p324 = pneg %p89
        %p325 = pneg %p86
        %p326 = pneg %p110
        %p327 = pneg %p107
        %p328 = pneg %p131
        %p329 = pneg %p128
        %p330 = pneg %p152
        %p331 = pneg %p149
        %p332 = pneg %p173
        %p333 = pneg %p170
        %p334 = pneg %p199
        %p335 = pneg %p196
        %s336 = sand.u32 %s186, 1
        %s337 = scalar_lea.sflag [#allocation5], %s336
        %s338 = sand.u32 %s186, 1
        %s339 = smul.addr %s338, 128
        %s340 = scalar_lea.vmem [#allocation11], %s339
        %v344 = vld [vmem:[%s298] sm:$0xf]
        %v345 = vld [vmem:[%s298 + $0x4] sm:$0xf]
        %v346 = vld [vmem:[%s298 + $0x8] sm:$0xf]
        %v347 = vld [vmem:[%s298 + $0xc] sm:$0xf]
        %v348 = vld [vmem:[%s298 + $0x10] sm:$0xf]
        %v349 = vld [vmem:[%s298 + $0x14] sm:$0xf]
        %v350 = vld [vmem:[%s298 + $0x18] sm:$0xf]
        %v351 = vld [vmem:[%s298 + $0x1c] sm:$0xf]
        %v352 = vld [vmem:[%s298 + $0x20] sm:$0xf]
        %v353 = vld [vmem:[%s298 + $0x24] sm:$0xf]
        %v354 = vld [vmem:[%s298 + $0x28] sm:$0xf]
        %v355 = vld [vmem:[%s298 + $0x2c] sm:$0xf]
        %v356 = vld [vmem:[%s298 + $0x30] sm:$0xf]
        %v357 = vld [vmem:[%s298 + $0x34] sm:$0xf]
        %v358 = vld [vmem:[%s298 + $0x38] sm:$0xf]
        %v359 = vld [vmem:[%s298 + $0x3c] sm:$0xf]
        %v360 = vld [vmem:[%s298 + $0x40] sm:$0xf]
        %v361 = vld [vmem:[%s298 + $0x44] sm:$0xf]
        %v362 = vld [vmem:[%s298 + $0x48] sm:$0xf]
        %v363 = vld [vmem:[%s298 + $0x4c] sm:$0xf]
        %v364 = vld [vmem:[%s298 + $0x50] sm:$0xf]
        %v365 = vld [vmem:[%s298 + $0x54] sm:$0xf]
        %v366 = vld [vmem:[%s298 + $0x58] sm:$0xf]
        %v367 = vld [vmem:[%s298 + $0x5c] sm:$0xf]
        %v368 = vld [vmem:[%s298 + $0x60] sm:$0xf]
        %v369 = vld [vmem:[%s298 + $0x64] sm:$0xf]
        %v370 = vld [vmem:[%s298 + $0x68] sm:$0xf]
        %v371 = vld [vmem:[%s298 + $0x6c] sm:$0xf]
        %v372 = vld [vmem:[%s298 + $0x70] sm:$0xf]
        %v373 = vld [vmem:[%s298 + $0x74] sm:$0xf]
        %v374 = vld [vmem:[%s298 + $0x78] sm:$0xf]
        %v375 = vld [vmem:[%s298 + $0x7c] sm:$0xf]
        %v376 = vld [vmem:[#allocation6] sm:$0xf]
        %v377 = vld [vmem:[#allocation6 + $0x4] sm:$0xf]
        %v378 = vld [vmem:[#allocation6 + $0x8] sm:$0xf]
        %v379 = vld [vmem:[#allocation6 + $0xc] sm:$0xf]
        %v380 = vld [vmem:[#allocation6 + $0x10] sm:$0xf]
        %v381 = vld [vmem:[#allocation6 + $0x14] sm:$0xf]
        %v382 = vld [vmem:[#allocation6 + $0x18] sm:$0xf]
        %v383 = vld [vmem:[#allocation6 + $0x1c] sm:$0xf]
        %v384 = vld [vmem:[#allocation6 + $0x20] sm:$0xf]
        %v385 = vld [vmem:[#allocation6 + $0x24] sm:$0xf]
        %v386 = vld [vmem:[#allocation6 + $0x28] sm:$0xf]
        %v387 = vld [vmem:[#allocation6 + $0x2c] sm:$0xf]
        %v388 = vld [vmem:[#allocation6 + $0x30] sm:$0xf]
        %v389 = vld [vmem:[#allocation6 + $0x34] sm:$0xf]
        %v390 = vld [vmem:[#allocation6 + $0x38] sm:$0xf]
        %v391 = vld [vmem:[#allocation6 + $0x3c] sm:$0xf]
        %v392 = vld [vmem:[%s2] sm:$0x1]
        %v394 = vlaneseq
        %v395 = vshrl.u32 %v394, 7
        %v396 = vsub.s32 0, %v395
        %v397 = vrot.slane %v392, %v396
        %v431 = vunpack.c.l.b16 %v344
        %v432 = vunpack.c.l.b16 %v345
        %v433 = vunpack.c.l.b16 %v346
        %v434 = vunpack.c.l.b16 %v347
        %v435 = vunpack.c.l.b16 %v348
        %v436 = vunpack.c.l.b16 %v349
        %v437 = vunpack.c.l.b16 %v350
        %v438 = vunpack.c.l.b16 %v351
        %v439 = vunpack.c.l.b16 %v352
        %v440 = vunpack.c.l.b16 %v353
        %v441 = vunpack.c.l.b16 %v354
        %v442 = vunpack.c.l.b16 %v355
        %v443 = vunpack.c.l.b16 %v356
        %v444 = vunpack.c.l.b16 %v357
        %v445 = vunpack.c.l.b16 %v358
        %v446 = vunpack.c.l.b16 %v359
        %v447 = vunpack.c.l.b16 %v360
        %v448 = vunpack.c.l.b16 %v361
        %v449 = vunpack.c.l.b16 %v362
        %v450 = vunpack.c.l.b16 %v363
        %v451 = vunpack.c.l.b16 %v364
        %v452 = vunpack.c.l.b16 %v365
        %v453 = vunpack.c.l.b16 %v366
        %v454 = vunpack.c.l.b16 %v367
        %v455 = vunpack.c.l.b16 %v368
        %v456 = vunpack.c.l.b16 %v369
        %v457 = vunpack.c.l.b16 %v370
        %v458 = vunpack.c.l.b16 %v371
        %v459 = vunpack.c.l.b16 %v372
        %v460 = vunpack.c.l.b16 %v373
        %v461 = vunpack.c.l.b16 %v374
        %v462 = vunpack.c.l.b16 %v375
        %v463 = vpack.c.b16 %v432, %v431
        %v464 = vpack.c.b16 %v434, %v433
        %v465 = vpack.c.b16 %v436, %v435
        %v466 = vpack.c.b16 %v438, %v437
        %v467 = vpack.c.b16 %v440, %v439
        %v468 = vpack.c.b16 %v442, %v441
        %v469 = vpack.c.b16 %v444, %v443
        %v470 = vpack.c.b16 %v446, %v445
        %v471 = vpack.c.b16 %v448, %v447
        %v472 = vpack.c.b16 %v450, %v449
        %v473 = vpack.c.b16 %v452, %v451
        %v474 = vpack.c.b16 %v454, %v453
        %v475 = vpack.c.b16 %v456, %v455
        %v476 = vpack.c.b16 %v458, %v457
        %v477 = vpack.c.b16 %v460, %v459
        %v478 = vpack.c.b16 %v462, %v461
        %v511 = vunpack.c.l.b16 %v376
        %v512 = vunpack.c.l.b16 %v377
        %v513 = vunpack.c.l.b16 %v378
        %v514 = vunpack.c.l.b16 %v379
        %v515 = vunpack.c.l.b16 %v380
        %v516 = vunpack.c.l.b16 %v381
        %v517 = vunpack.c.l.b16 %v382
        %v518 = vunpack.c.l.b16 %v383
        %v519 = vunpack.c.l.b16 %v384
        %v520 = vunpack.c.l.b16 %v385
        %v521 = vunpack.c.l.b16 %v386
        %v522 = vunpack.c.l.b16 %v387
        %v523 = vunpack.c.l.b16 %v388
        %v524 = vunpack.c.l.b16 %v389
        %v525 = vunpack.c.l.b16 %v390
        %v526 = vunpack.c.l.b16 %v391
        %v527 = vpack.c.b16 %v512, %v511
        %v528 = vpack.c.b16 %v514, %v513
        %v529 = vpack.c.b16 %v516, %v515
        %v530 = vpack.c.b16 %v518, %v517
        %v531 = vpack.c.b16 %v520, %v519
        %v532 = vpack.c.b16 %v522, %v521
        %v533 = vpack.c.b16 %v524, %v523
        %v534 = vpack.c.b16 %v526, %v525
        %543 = vmatprep.subr.bf16.mxu0 0
        %544 = vmatpush1.bf16.msra.mxu0 %v534
        %545 = vmatprep.subr.bf16.mxu0 0
        %546 = vmatpush1.bf16.msra.mxu0 %v533
        %547 = vmatprep.subr.bf16.mxu0 0
        %548 = vmatpush1.bf16.msra.mxu0 %v532
        %549 = vmatprep.subr.bf16.mxu0 0
        %550 = vmatpush1.bf16.msra.mxu0 %v531
        %551 = vmatprep.subr.bf16.mxu0 0
        %552 = vmatpush1.bf16.msra.mxu0 %v530
        %553 = vmatprep.subr.bf16.mxu0 0
        %554 = vmatpush1.bf16.msra.mxu0 %v529
        %555 = vmatprep.subr.bf16.mxu0 0
        %556 = vmatpush1.bf16.msra.mxu0 %v528
        %557 = vmatprep.subr.bf16.mxu0 0
        %558 = vmatpush1.bf16.msra.mxu0 %v527
        %559 = vmatprep.subr.bf16.mxu0 0
        %560 = vmatpush2.bf16.msra.mxu0 0
        %561 = vmatprep.subr.bf16.mxu0 0
        %562 = vmatpush2.bf16.msra.mxu0 0
        %563 = vmatprep.subr.bf16.mxu0 0
        %564 = vmatpush2.bf16.msra.mxu0 0
        %565 = vmatprep.subr.bf16.mxu0 0
        %566 = vmatpush2.bf16.msra.mxu0 0
        %567 = vmatprep.subr.bf16.mxu0 0
        %568 = vmatpush2.bf16.msra.mxu0 0
        %569 = vmatprep.subr.bf16.mxu0 0
        %570 = vmatpush2.bf16.msra.mxu0 0
        %571 = vmatprep.subr.bf16.mxu0 0
        %572 = vmatpush2.bf16.msra.mxu0 0
        %573 = vmatprep.subr.bf16.mxu0 0
        %574 = vmatpush2.bf16.msra.mxu0 0
        %575 = vmatprep.mubr.bf16.mxu0 0
        %576 = vmatmul.mubr.bf16.gmra.mxu0 %v463
        %v577 = vpop.f32.mrf.mxu0
        %v578 = vadd.f32 %v397, %v577
        %v579 = vpop.f32.mrf.mxu0
        %v580 = vpop.f32.mrf.mxu0
        %v581 = vadd.f32 %v397, %v580
        %v582 = vpop.f32.mrf.mxu0
        %583 = vmatprep.mubr.bf16.mxu0 0
        %584 = vmatmul.mubr.bf16.gmra.mxu0 %v464
        %v585 = vpop.f32.mrf.mxu0
        %v586 = vadd.f32 %v397, %v585
        %v587 = vpop.f32.mrf.mxu0
        %v588 = vpop.f32.mrf.mxu0
        %v589 = vadd.f32 %v397, %v588
        %v590 = vpop.f32.mrf.mxu0
        %591 = vmatprep.mubr.bf16.mxu0 0
        %592 = vmatmul.mubr.bf16.gmra.mxu0 %v465
        %v593 = vpop.f32.mrf.mxu0
        %v594 = vadd.f32 %v397, %v593
        %v595 = vpop.f32.mrf.mxu0
        %v596 = vpop.f32.mrf.mxu0
        %v597 = vadd.f32 %v397, %v596
        %v598 = vpop.f32.mrf.mxu0
        %599 = vmatprep.mubr.bf16.mxu0 0
        %600 = vmatmul.mubr.bf16.gmra.mxu0 %v466
        %v601 = vpop.f32.mrf.mxu0
        %v602 = vadd.f32 %v397, %v601
        %v603 = vpop.f32.mrf.mxu0
        %v604 = vpop.f32.mrf.mxu0
        %v605 = vadd.f32 %v397, %v604
        %v606 = vpop.f32.mrf.mxu0
        %607 = vmatprep.mubr.bf16.mxu0 0
        %608 = vmatmul.mubr.bf16.gmra.mxu0 %v467
        %v609 = vpop.f32.mrf.mxu0
        %v610 = vadd.f32 %v397, %v609
        %v611 = vpop.f32.mrf.mxu0
        %v612 = vpop.f32.mrf.mxu0
        %v613 = vadd.f32 %v397, %v612
        %v614 = vpop.f32.mrf.mxu0
        %615 = vmatprep.mubr.bf16.mxu0 0
        %616 = vmatmul.mubr.bf16.gmra.mxu0 %v468
        %v617 = vpop.f32.mrf.mxu0
        %v618 = vadd.f32 %v397, %v617
        %v619 = vpop.f32.mrf.mxu0
        %v620 = vpop.f32.mrf.mxu0
        %v621 = vadd.f32 %v397, %v620
        %v622 = vpop.f32.mrf.mxu0
        %623 = vmatprep.mubr.bf16.mxu0 0
        %624 = vmatmul.mubr.bf16.gmra.mxu0 %v469
        %v625 = vpop.f32.mrf.mxu0
        %v626 = vadd.f32 %v397, %v625
        %v627 = vpop.f32.mrf.mxu0
        %v628 = vpop.f32.mrf.mxu0
        %v629 = vadd.f32 %v397, %v628
        %v630 = vpop.f32.mrf.mxu0
        %631 = vmatprep.mubr.bf16.mxu0 0
        %632 = vmatmul.mubr.bf16.gmra.mxu0 %v470
        %v633 = vpop.f32.mrf.mxu0
        %v634 = vadd.f32 %v397, %v633
        %v635 = vpop.f32.mrf.mxu0
        %v636 = vpop.f32.mrf.mxu0
        %v637 = vadd.f32 %v397, %v636
        %v638 = vpop.f32.mrf.mxu0
        %639 = vmatprep.mubr.bf16.mxu0 0
        %640 = vmatmul.mubr.bf16.gmra.mxu0 %v471
        %v641 = vpop.f32.mrf.mxu0
        %v642 = vadd.f32 %v397, %v641
        %v643 = vpop.f32.mrf.mxu0
        %v644 = vpop.f32.mrf.mxu0
        %v645 = vadd.f32 %v397, %v644
        %v646 = vpop.f32.mrf.mxu0
        %647 = vmatprep.mubr.bf16.mxu0 0
        %648 = vmatmul.mubr.bf16.gmra.mxu0 %v472
        %v649 = vpop.f32.mrf.mxu0
        %v650 = vadd.f32 %v397, %v649
        %v651 = vpop.f32.mrf.mxu0
        %v652 = vpop.f32.mrf.mxu0
        %v653 = vadd.f32 %v397, %v652
        %v654 = vpop.f32.mrf.mxu0
        %655 = vmatprep.mubr.bf16.mxu0 0
        %656 = vmatmul.mubr.bf16.gmra.mxu0 %v473
        %v657 = vpop.f32.mrf.mxu0
        %v658 = vadd.f32 %v397, %v657
        %v659 = vpop.f32.mrf.mxu0
        %v660 = vpop.f32.mrf.mxu0
        %v661 = vadd.f32 %v397, %v660
        %v662 = vpop.f32.mrf.mxu0
        %663 = vmatprep.mubr.bf16.mxu0 0
        %664 = vmatmul.mubr.bf16.gmra.mxu0 %v474
        %v665 = vpop.f32.mrf.mxu0
        %v666 = vadd.f32 %v397, %v665
        %v667 = vpop.f32.mrf.mxu0
        %v668 = vpop.f32.mrf.mxu0
        %v669 = vadd.f32 %v397, %v668
        %v670 = vpop.f32.mrf.mxu0
        %671 = vmatprep.mubr.bf16.mxu0 0
        %672 = vmatmul.mubr.bf16.gmra.mxu0 %v475
        %v673 = vpop.f32.mrf.mxu0
        %v674 = vadd.f32 %v397, %v673
        %v675 = vpop.f32.mrf.mxu0
        %v676 = vpop.f32.mrf.mxu0
        %v677 = vadd.f32 %v397, %v676
        %v678 = vpop.f32.mrf.mxu0
        %679 = vmatprep.mubr.bf16.mxu0 0
        %680 = vmatmul.mubr.bf16.gmra.mxu0 %v476
        %v681 = vpop.f32.mrf.mxu0
        %v682 = vadd.f32 %v397, %v681
        %v683 = vpop.f32.mrf.mxu0
        %v684 = vpop.f32.mrf.mxu0
        %v685 = vadd.f32 %v397, %v684
        %v686 = vpop.f32.mrf.mxu0
        %687 = vmatprep.mubr.bf16.mxu0 0
        %688 = vmatmul.mubr.bf16.gmra.mxu0 %v477
        %v689 = vpop.f32.mrf.mxu0
        %v690 = vadd.f32 %v397, %v689
        %v691 = vpop.f32.mrf.mxu0
        %v692 = vpop.f32.mrf.mxu0
        %v693 = vadd.f32 %v397, %v692
        %v694 = vpop.f32.mrf.mxu0
        %695 = vmatprep.mubr.bf16.mxu0 0
        %696 = vmatmul.mubr.bf16.gmra.mxu0 %v478
        %v697 = vpop.f32.mrf.mxu0
        %v698 = vadd.f32 %v397, %v697
        %v699 = vpop.f32.mrf.mxu0
        %v700 = vpop.f32.mrf.mxu0
        %v701 = vadd.f32 %v397, %v700
        %v702 = vpop.f32.mrf.mxu0
        %703 = vdwg.mxu0
        %v704 = vmax.f32 %v578, 0.0
        %v705 = vmax.f32 %v581, 0.0
        %v706 = vmax.f32 %v586, 0.0
        %v707 = vmax.f32 %v589, 0.0
        %v708 = vmax.f32 %v594, 0.0
        %v709 = vmax.f32 %v597, 0.0
        %v710 = vmax.f32 %v602, 0.0
        %v711 = vmax.f32 %v605, 0.0
        %v712 = vmax.f32 %v610, 0.0
        %v713 = vmax.f32 %v613, 0.0
        %v714 = vmax.f32 %v618, 0.0
        %v715 = vmax.f32 %v621, 0.0
        %v716 = vmax.f32 %v626, 0.0
        %v717 = vmax.f32 %v629, 0.0
        %v718 = vmax.f32 %v634, 0.0
        %v719 = vmax.f32 %v637, 0.0
        %v720 = vmax.f32 %v642, 0.0
        %v721 = vmax.f32 %v645, 0.0
        %v722 = vmax.f32 %v650, 0.0
        %v723 = vmax.f32 %v653, 0.0
        %v724 = vmax.f32 %v658, 0.0
        %v725 = vmax.f32 %v661, 0.0
        %v726 = vmax.f32 %v666, 0.0
        %v727 = vmax.f32 %v669, 0.0
        %v728 = vmax.f32 %v674, 0.0
        %v729 = vmax.f32 %v677, 0.0
        %v730 = vmax.f32 %v682, 0.0
        %v731 = vmax.f32 %v685, 0.0
        %v732 = vmax.f32 %v690, 0.0
        %v733 = vmax.f32 %v693, 0.0
        %v734 = vmax.f32 %v698, 0.0
        %v735 = vmax.f32 %v701, 0.0
        %v736 = vpack.c.bf16 %v705, %v704
        %v737 = vpack.c.bf16 %v707, %v706
        %v738 = vpack.c.bf16 %v709, %v708
        %v739 = vpack.c.bf16 %v711, %v710
        %v740 = vpack.c.bf16 %v713, %v712
        %v741 = vpack.c.bf16 %v715, %v714
        %v742 = vpack.c.bf16 %v717, %v716
        %v743 = vpack.c.bf16 %v719, %v718
        %v744 = vpack.c.bf16 %v721, %v720
        %v745 = vpack.c.bf16 %v723, %v722
        %v746 = vpack.c.bf16 %v725, %v724
        %v747 = vpack.c.bf16 %v727, %v726
        %v748 = vpack.c.bf16 %v729, %v728
        %v749 = vpack.c.bf16 %v731, %v730
        %v750 = vpack.c.bf16 %v733, %v732
        %v751 = vpack.c.bf16 %v735, %v734
        %v752 = vlaneseq
        %v753 = vshrl.u32 %v752, 7
        %v754 = vadd.s32 %v753, 8
        %v755 = vadd.s32 %v753, 16
        %v756 = vadd.s32 %v753, 24
        %v757 = vadd.s32 %v753, 32
        %v758 = vadd.s32 %v753, 40
        %v759 = vadd.s32 %v753, 48
        %v760 = vadd.s32 %v753, 56
        %v761 = vadd.s32 %v753, 64
        %v762 = vadd.s32 %v753, 72
        %v763 = vadd.s32 %v753, 80
        %v764 = vadd.s32 %v753, 88
        %v765 = vadd.s32 %v753, 96
        %v766 = vadd.s32 %v753, 104
        %v767 = vadd.s32 %v753, 112
        %v768 = vadd.s32 %v753, 120
        %v769 = vadd.s32 %v753, 128
        %v770 = vadd.s32 %v753, 136
        %v771 = vadd.s32 %v753, 144
        %v772 = vadd.s32 %v753, 152
        %v773 = vadd.s32 %v753, 160
        %v774 = vadd.s32 %v753, 168
        %v775 = vadd.s32 %v753, 176
        %v776 = vadd.s32 %v753, 184
        %v777 = vadd.s32 %v753, 192
        %v778 = vadd.s32 %v753, 200
        %v779 = vadd.s32 %v753, 208
        %v780 = vadd.s32 %v753, 216
        %v781 = vadd.s32 %v753, 224
        %v782 = vadd.s32 %v753, 232
        %v783 = vadd.s32 %v753, 240
        %v784 = vadd.s32 %v753, 248
        %vm785 = vcmp.lt.s32.totalorder %v753, 0
        %v786 = vsub.s32 0, %v753
        %v787 = vsel %vm785, %v786, %v753
        %v788 = vshrl.u32 %v787, 4
        %v789 = vand.u32 %v787, 15
        %v790 = vsub.s32 0, %v789
        %v791 = vsel %vm785, %v790, %v789
        %vm792 = vcmp.lt.s32.totalorder %v754, 0
        %v793 = vsub.s32 0, %v754
        %v794 = vsel %vm792, %v793, %v754
        %v795 = vshrl.u32 %v794, 4
        %v796 = vand.u32 %v794, 15
        %v797 = vsub.s32 0, %v796
        %v798 = vsel %vm792, %v797, %v796
        %vm799 = vcmp.lt.s32.totalorder %v755, 0
        %v800 = vsub.s32 0, %v755
        %v801 = vsel %vm799, %v800, %v755
        %v802 = vshrl.u32 %v801, 4
        %v803 = vand.u32 %v801, 15
        %v804 = vsub.s32 0, %v803
        %v805 = vsel %vm799, %v804, %v803
        %vm806 = vcmp.lt.s32.totalorder %v756, 0
        %v807 = vsub.s32 0, %v756
        %v808 = vsel %vm806, %v807, %v756
        %v809 = vshrl.u32 %v808, 4
        %v810 = vand.u32 %v808, 15
        %v811 = vsub.s32 0, %v810
        %v812 = vsel %vm806, %v811, %v810
        %vm813 = vcmp.lt.s32.totalorder %v757, 0
        %v814 = vsub.s32 0, %v757
        %v815 = vsel %vm813, %v814, %v757
        %v816 = vshrl.u32 %v815, 4
        %v817 = vand.u32 %v815, 15
        %v818 = vsub.s32 0, %v817
        %v819 = vsel %vm813, %v818, %v817
        %vm820 = vcmp.lt.s32.totalorder %v758, 0
        %v821 = vsub.s32 0, %v758
        %v822 = vsel %vm820, %v821, %v758
        %v823 = vshrl.u32 %v822, 4
        %v824 = vand.u32 %v822, 15
        %v825 = vsub.s32 0, %v824
        %v826 = vsel %vm820, %v825, %v824
        %vm827 = vcmp.lt.s32.totalorder %v759, 0
        %v828 = vsub.s32 0, %v759
        %v829 = vsel %vm827, %v828, %v759
        %v830 = vshrl.u32 %v829, 4
        %v831 = vand.u32 %v829, 15
        %v832 = vsub.s32 0, %v831
        %v833 = vsel %vm827, %v832, %v831
        %vm834 = vcmp.lt.s32.totalorder %v760, 0
        %v835 = vsub.s32 0, %v760
        %v836 = vsel %vm834, %v835, %v760
        %v837 = vshrl.u32 %v836, 4
        %v838 = vand.u32 %v836, 15
        %v839 = vsub.s32 0, %v838
        %v840 = vsel %vm834, %v839, %v838
        %vm841 = vcmp.lt.s32.totalorder %v761, 0
        %v842 = vsub.s32 0, %v761
        %v843 = vsel %vm841, %v842, %v761
        %v844 = vshrl.u32 %v843, 4
        %v845 = vand.u32 %v843, 15
        %v846 = vsub.s32 0, %v845
        %v847 = vsel %vm841, %v846, %v845
        %vm848 = vcmp.lt.s32.totalorder %v762, 0
        %v849 = vsub.s32 0, %v762
        %v850 = vsel %vm848, %v849, %v762
        %v851 = vshrl.u32 %v850, 4
        %v852 = vand.u32 %v850, 15
        %v853 = vsub.s32 0, %v852
        %v854 = vsel %vm848, %v853, %v852
        %vm855 = vcmp.lt.s32.totalorder %v763, 0
        %v856 = vsub.s32 0, %v763
        %v857 = vsel %vm855, %v856, %v763
        %v858 = vshrl.u32 %v857, 4
        %v859 = vand.u32 %v857, 15
        %v860 = vsub.s32 0, %v859
        %v861 = vsel %vm855, %v860, %v859
        %vm862 = vcmp.lt.s32.totalorder %v764, 0
        %v863 = vsub.s32 0, %v764
        %v864 = vsel %vm862, %v863, %v764
        %v865 = vshrl.u32 %v864, 4
        %v866 = vand.u32 %v864, 15
        %v867 = vsub.s32 0, %v866
        %v868 = vsel %vm862, %v867, %v866
        %vm869 = vcmp.lt.s32.totalorder %v765, 0
        %v870 = vsub.s32 0, %v765
        %v871 = vsel %vm869, %v870, %v765
        %v872 = vshrl.u32 %v871, 4
        %v873 = vand.u32 %v871, 15
        %v874 = vsub.s32 0, %v873
        %v875 = vsel %vm869, %v874, %v873
        %vm876 = vcmp.lt.s32.totalorder %v766, 0
        %v877 = vsub.s32 0, %v766
        %v878 = vsel %vm876, %v877, %v766
        %v879 = vshrl.u32 %v878, 4
        %v880 = vand.u32 %v878, 15
        %v881 = vsub.s32 0, %v880
        %v882 = vsel %vm876, %v881, %v880
        %vm883 = vcmp.lt.s32.totalorder %v767, 0
        %v884 = vsub.s32 0, %v767
        %v885 = vsel %vm883, %v884, %v767
        %v886 = vshrl.u32 %v885, 4
        %v887 = vand.u32 %v885, 15
        %v888 = vsub.s32 0, %v887
        %v889 = vsel %vm883, %v888, %v887
        %vm890 = vcmp.lt.s32.totalorder %v768, 0
        %v891 = vsub.s32 0, %v768
        %v892 = vsel %vm890, %v891, %v768
        %v893 = vshrl.u32 %v892, 4
        %v894 = vand.u32 %v892, 15
        %v895 = vsub.s32 0, %v894
        %v896 = vsel %vm890, %v895, %v894
        %vm897 = vcmp.lt.s32.totalorder %v769, 0
        %v898 = vsub.s32 0, %v769
        %v899 = vsel %vm897, %v898, %v769
        %v900 = vshrl.u32 %v899, 4
        %v901 = vand.u32 %v899, 15
        %v902 = vsub.s32 0, %v901
        %v903 = vsel %vm897, %v902, %v901
        %vm904 = vcmp.lt.s32.totalorder %v770, 0
        %v905 = vsub.s32 0, %v770
        %v906 = vsel %vm904, %v905, %v770
        %v907 = vshrl.u32 %v906, 4
        %v908 = vand.u32 %v906, 15
        %v909 = vsub.s32 0, %v908
        %v910 = vsel %vm904, %v909, %v908
        %vm911 = vcmp.lt.s32.totalorder %v771, 0
        %v912 = vsub.s32 0, %v771
        %v913 = vsel %vm911, %v912, %v771
        %v914 = vshrl.u32 %v913, 4
        %v915 = vand.u32 %v913, 15
        %v916 = vsub.s32 0, %v915
        %v917 = vsel %vm911, %v916, %v915
        %vm918 = vcmp.lt.s32.totalorder %v772, 0
        %v919 = vsub.s32 0, %v772
        %v920 = vsel %vm918, %v919, %v772
        %v921 = vshrl.u32 %v920, 4
        %v922 = vand.u32 %v920, 15
        %v923 = vsub.s32 0, %v922
        %v924 = vsel %vm918, %v923, %v922
        %vm925 = vcmp.lt.s32.totalorder %v773, 0
        %v926 = vsub.s32 0, %v773
        %v927 = vsel %vm925, %v926, %v773
        %v928 = vshrl.u32 %v927, 4
        %v929 = vand.u32 %v927, 15
        %v930 = vsub.s32 0, %v929
        %v931 = vsel %vm925, %v930, %v929
        %vm932 = vcmp.lt.s32.totalorder %v774, 0
        %v933 = vsub.s32 0, %v774
        %v934 = vsel %vm932, %v933, %v774
        %v935 = vshrl.u32 %v934, 4
        %v936 = vand.u32 %v934, 15
        %v937 = vsub.s32 0, %v936
        %v938 = vsel %vm932, %v937, %v936
        %vm939 = vcmp.lt.s32.totalorder %v775, 0
        %v940 = vsub.s32 0, %v775
        %v941 = vsel %vm939, %v940, %v775
        %v942 = vshrl.u32 %v941, 4
        %v943 = vand.u32 %v941, 15
        %v944 = vsub.s32 0, %v943
        %v945 = vsel %vm939, %v944, %v943
        %vm946 = vcmp.lt.s32.totalorder %v776, 0
        %v947 = vsub.s32 0, %v776
        %v948 = vsel %vm946, %v947, %v776
        %v949 = vshrl.u32 %v948, 4
        %v950 = vand.u32 %v948, 15
        %v951 = vsub.s32 0, %v950
        %v952 = vsel %vm946, %v951, %v950
        %vm953 = vcmp.lt.s32.totalorder %v777, 0
        %v954 = vsub.s32 0, %v777
        %v955 = vsel %vm953, %v954, %v777
        %v956 = vshrl.u32 %v955, 4
        %v957 = vand.u32 %v955, 15
        %v958 = vsub.s32 0, %v957
        %v959 = vsel %vm953, %v958, %v957
        %vm960 = vcmp.lt.s32.totalorder %v778, 0
        %v961 = vsub.s32 0, %v778
        %v962 = vsel %vm960, %v961, %v778
        %v963 = vshrl.u32 %v962, 4
        %v964 = vand.u32 %v962, 15
        %v965 = vsub.s32 0, %v964
        %v966 = vsel %vm960, %v965, %v964
        %vm967 = vcmp.lt.s32.totalorder %v779, 0
        %v968 = vsub.s32 0, %v779
        %v969 = vsel %vm967, %v968, %v779
        %v970 = vshrl.u32 %v969, 4
        %v971 = vand.u32 %v969, 15
        %v972 = vsub.s32 0, %v971
        %v973 = vsel %vm967, %v972, %v971
        %vm974 = vcmp.lt.s32.totalorder %v780, 0
        %v975 = vsub.s32 0, %v780
        %v976 = vsel %vm974, %v975, %v780
        %v977 = vshrl.u32 %v976, 4
        %v978 = vand.u32 %v976, 15
        %v979 = vsub.s32 0, %v978
        %v980 = vsel %vm974, %v979, %v978
        %vm981 = vcmp.lt.s32.totalorder %v781, 0
        %v982 = vsub.s32 0, %v781
        %v983 = vsel %vm981, %v982, %v781
        %v984 = vshrl.u32 %v983, 4
        %v985 = vand.u32 %v983, 15
        %v986 = vsub.s32 0, %v985
        %v987 = vsel %vm981, %v986, %v985
        %vm988 = vcmp.lt.s32.totalorder %v782, 0
        %v989 = vsub.s32 0, %v782
        %v990 = vsel %vm988, %v989, %v782
        %v991 = vshrl.u32 %v990, 4
        %v992 = vand.u32 %v990, 15
        %v993 = vsub.s32 0, %v992
        %v994 = vsel %vm988, %v993, %v992
        %vm995 = vcmp.lt.s32.totalorder %v783, 0
        %v996 = vsub.s32 0, %v783
        %v997 = vsel %vm995, %v996, %v783
        %v998 = vshrl.u32 %v997, 4
        %v999 = vand.u32 %v997, 15
        %v1000 = vsub.s32 0, %v999
        %v1001 = vsel %vm995, %v1000, %v999
        %vm1002 = vcmp.lt.s32.totalorder %v784, 0
        %v1003 = vsub.s32 0, %v784
        %v1004 = vsel %vm1002, %v1003, %v784
        %v1005 = vshrl.u32 %v1004, 4
        %v1006 = vand.u32 %v1004, 15
        %v1007 = vsub.s32 0, %v1006
        %v1008 = vsel %vm1002, %v1007, %v1006
        %vm1009 = vcmp.ne.s32.totalorder %v791, 0
        %vm1010 = vcmp.ne.s32.totalorder %v798, 0
        %vm1011 = vcmp.ne.s32.totalorder %v805, 0
        %vm1012 = vcmp.ne.s32.totalorder %v812, 0
        %vm1013 = vcmp.ne.s32.totalorder %v819, 0
        %vm1014 = vcmp.ne.s32.totalorder %v826, 0
        %vm1015 = vcmp.ne.s32.totalorder %v833, 0
        %vm1016 = vcmp.ne.s32.totalorder %v840, 0
        %vm1017 = vcmp.ne.s32.totalorder %v847, 0
        %vm1018 = vcmp.ne.s32.totalorder %v854, 0
        %vm1019 = vcmp.ne.s32.totalorder %v861, 0
        %vm1020 = vcmp.ne.s32.totalorder %v868, 0
        %vm1021 = vcmp.ne.s32.totalorder %v875, 0
        %vm1022 = vcmp.ne.s32.totalorder %v882, 0
        %vm1023 = vcmp.ne.s32.totalorder %v889, 0
        %vm1024 = vcmp.ne.s32.totalorder %v896, 0
        %vm1025 = vcmp.ne.s32.totalorder %v903, 0
        %vm1026 = vcmp.ne.s32.totalorder %v910, 0
        %vm1027 = vcmp.ne.s32.totalorder %v917, 0
        %vm1028 = vcmp.ne.s32.totalorder %v924, 0
        %vm1029 = vcmp.ne.s32.totalorder %v931, 0
        %vm1030 = vcmp.ne.s32.totalorder %v938, 0
        %vm1031 = vcmp.ne.s32.totalorder %v945, 0
        %vm1032 = vcmp.ne.s32.totalorder %v952, 0
        %vm1033 = vcmp.ne.s32.totalorder %v959, 0
        %vm1034 = vcmp.ne.s32.totalorder %v966, 0
        %vm1035 = vcmp.ne.s32.totalorder %v973, 0
        %vm1036 = vcmp.ne.s32.totalorder %v980, 0
        %vm1037 = vcmp.ne.s32.totalorder %v987, 0
        %vm1038 = vcmp.ne.s32.totalorder %v994, 0
        %vm1039 = vcmp.ne.s32.totalorder %v1001, 0
        %vm1040 = vcmp.ne.s32.totalorder %v1008, 0
        %vm1041 = vcmp.lt.s32.totalorder %v791, 0
        %vm1042 = vcmp.lt.s32.totalorder %v798, 0
        %vm1043 = vcmp.lt.s32.totalorder %v805, 0
        %vm1044 = vcmp.lt.s32.totalorder %v812, 0
        %vm1045 = vcmp.lt.s32.totalorder %v819, 0
        %vm1046 = vcmp.lt.s32.totalorder %v826, 0
        %vm1047 = vcmp.lt.s32.totalorder %v833, 0
        %vm1048 = vcmp.lt.s32.totalorder %v840, 0
        %vm1049 = vcmp.lt.s32.totalorder %v847, 0
        %vm1050 = vcmp.lt.s32.totalorder %v854, 0
        %vm1051 = vcmp.lt.s32.totalorder %v861, 0
        %vm1052 = vcmp.lt.s32.totalorder %v868, 0
        %vm1053 = vcmp.lt.s32.totalorder %v875, 0
        %vm1054 = vcmp.lt.s32.totalorder %v882, 0
        %vm1055 = vcmp.lt.s32.totalorder %v889, 0
        %vm1056 = vcmp.lt.s32.totalorder %v896, 0
        %vm1057 = vcmp.lt.s32.totalorder %v903, 0
        %vm1058 = vcmp.lt.s32.totalorder %v910, 0
        %vm1059 = vcmp.lt.s32.totalorder %v917, 0
        %vm1060 = vcmp.lt.s32.totalorder %v924, 0
        %vm1061 = vcmp.lt.s32.totalorder %v931, 0
        %vm1062 = vcmp.lt.s32.totalorder %v938, 0
        %vm1063 = vcmp.lt.s32.totalorder %v945, 0
        %vm1064 = vcmp.lt.s32.totalorder %v952, 0
        %vm1065 = vcmp.lt.s32.totalorder %v959, 0
        %vm1066 = vcmp.lt.s32.totalorder %v966, 0
        %vm1067 = vcmp.lt.s32.totalorder %v973, 0
        %vm1068 = vcmp.lt.s32.totalorder %v980, 0
        %vm1069 = vcmp.lt.s32.totalorder %v987, 0
        %vm1070 = vcmp.lt.s32.totalorder %v994, 0
        %vm1071 = vcmp.lt.s32.totalorder %v1001, 0
        %vm1072 = vcmp.lt.s32.totalorder %v1008, 0
        %vm1073 = vmand %vm1041, %vm1009
        %vm1074 = vmand %vm1042, %vm1010
        %vm1075 = vmand %vm1043, %vm1011
        %vm1076 = vmand %vm1044, %vm1012
        %vm1077 = vmand %vm1045, %vm1013
        %vm1078 = vmand %vm1046, %vm1014
        %vm1079 = vmand %vm1047, %vm1015
        %vm1080 = vmand %vm1048, %vm1016
        %vm1081 = vmand %vm1049, %vm1017
        %vm1082 = vmand %vm1050, %vm1018
        %vm1083 = vmand %vm1051, %vm1019
        %vm1084 = vmand %vm1052, %vm1020
        %vm1085 = vmand %vm1053, %vm1021
        %vm1086 = vmand %vm1054, %vm1022
        %vm1087 = vmand %vm1055, %vm1023
        %vm1088 = vmand %vm1056, %vm1024
        %vm1089 = vmand %vm1057, %vm1025
        %vm1090 = vmand %vm1058, %vm1026
        %vm1091 = vmand %vm1059, %vm1027
        %vm1092 = vmand %vm1060, %vm1028
        %vm1093 = vmand %vm1061, %vm1029
        %vm1094 = vmand %vm1062, %vm1030
        %vm1095 = vmand %vm1063, %vm1031
        %vm1096 = vmand %vm1064, %vm1032
        %vm1097 = vmand %vm1065, %vm1033
        %vm1098 = vmand %vm1066, %vm1034
        %vm1099 = vmand %vm1067, %vm1035
        %vm1100 = vmand %vm1068, %vm1036
        %vm1101 = vmand %vm1069, %vm1037
        %vm1102 = vmand %vm1070, %vm1038
        %vm1103 = vmand %vm1071, %vm1039
        %vm1104 = vmand %vm1072, %vm1040
        %v1105 = vadd.s32 %v791, 16
        %v1106 = vadd.s32 %v798, 16
        %v1107 = vadd.s32 %v805, 16
        %v1108 = vadd.s32 %v812, 16
        %v1109 = vadd.s32 %v819, 16
        %v1110 = vadd.s32 %v826, 16
        %v1111 = vadd.s32 %v833, 16
        %v1112 = vadd.s32 %v840, 16
        %v1113 = vadd.s32 %v847, 16
        %v1114 = vadd.s32 %v854, 16
        %v1115 = vadd.s32 %v861, 16
        %v1116 = vadd.s32 %v868, 16
        %v1117 = vadd.s32 %v875, 16
        %v1118 = vadd.s32 %v882, 16
        %v1119 = vadd.s32 %v889, 16
        %v1120 = vadd.s32 %v896, 16
        %v1121 = vadd.s32 %v903, 16
        %v1122 = vadd.s32 %v910, 16
        %v1123 = vadd.s32 %v917, 16
        %v1124 = vadd.s32 %v924, 16
        %v1125 = vadd.s32 %v931, 16
        %v1126 = vadd.s32 %v938, 16
        %v1127 = vadd.s32 %v945, 16
        %v1128 = vadd.s32 %v952, 16
        %v1129 = vadd.s32 %v959, 16
        %v1130 = vadd.s32 %v966, 16
        %v1131 = vadd.s32 %v973, 16
        %v1132 = vadd.s32 %v980, 16
        %v1133 = vadd.s32 %v987, 16
        %v1134 = vadd.s32 %v994, 16
        %v1135 = vadd.s32 %v1001, 16
        %v1136 = vadd.s32 %v1008, 16
        %v1137 = vsel %vm1073, %v1105, %v791
        %v1138 = vsel %vm1074, %v1106, %v798
        %v1139 = vsel %vm1075, %v1107, %v805
        %v1140 = vsel %vm1076, %v1108, %v812
        %v1141 = vsel %vm1077, %v1109, %v819
        %v1142 = vsel %vm1078, %v1110, %v826
        %v1143 = vsel %vm1079, %v1111, %v833
        %v1144 = vsel %vm1080, %v1112, %v840
        %v1145 = vsel %vm1081, %v1113, %v847
        %v1146 = vsel %vm1082, %v1114, %v854
        %v1147 = vsel %vm1083, %v1115, %v861
        %v1148 = vsel %vm1084, %v1116, %v868
        %v1149 = vsel %vm1085, %v1117, %v875
        %v1150 = vsel %vm1086, %v1118, %v882
        %v1151 = vsel %vm1087, %v1119, %v889
        %v1152 = vsel %vm1088, %v1120, %v896
        %v1153 = vsel %vm1089, %v1121, %v903
        %v1154 = vsel %vm1090, %v1122, %v910
        %v1155 = vsel %vm1091, %v1123, %v917
        %v1156 = vsel %vm1092, %v1124, %v924
        %v1157 = vsel %vm1093, %v1125, %v931
        %v1158 = vsel %vm1094, %v1126, %v938
        %v1159 = vsel %vm1095, %v1127, %v945
        %v1160 = vsel %vm1096, %v1128, %v952
        %v1161 = vsel %vm1097, %v1129, %v959
        %v1162 = vsel %vm1098, %v1130, %v966
        %v1163 = vsel %vm1099, %v1131, %v973
        %v1164 = vsel %vm1100, %v1132, %v980
        %v1165 = vsel %vm1101, %v1133, %v987
        %v1166 = vsel %vm1102, %v1134, %v994
        %v1167 = vsel %vm1103, %v1135, %v1001
        %v1168 = vsel %vm1104, %v1136, %v1008
        %vm1169 = vsmask.f32 256
        %v1171 = vshrl.u32 %v736, 16
        %v1173 = vrot.slane %v1171, 7
        %v1174 = vshll.u32 %v736, 16
        %v1176 = vor.u32 %v1173, %v1174
        %v1178 = vshrl.u32 %v737, 16
        %v1180 = vrot.slane %v1178, 7
        %v1181 = vshll.u32 %v737, 16
        %v1183 = vor.u32 %v1180, %v1181
        %v1184 = vsel %vm1169, %v1173, %v1183
        %v1186 = vshrl.u32 %v738, 16
        %v1188 = vrot.slane %v1186, 7
        %v1189 = vshll.u32 %v738, 16
        %v1191 = vor.u32 %v1188, %v1189
        %v1192 = vsel %vm1169, %v1180, %v1191
        %v1194 = vshrl.u32 %v739, 16
        %v1196 = vrot.slane %v1194, 7
        %v1197 = vshll.u32 %v739, 16
        %v1199 = vor.u32 %v1196, %v1197
        %v1200 = vsel %vm1169, %v1188, %v1199
        %v1202 = vshrl.u32 %v740, 16
        %v1204 = vrot.slane %v1202, 7
        %v1205 = vshll.u32 %v740, 16
        %v1207 = vor.u32 %v1204, %v1205
        %v1208 = vsel %vm1169, %v1196, %v1207
        %v1210 = vshrl.u32 %v741, 16
        %v1212 = vrot.slane %v1210, 7
        %v1213 = vshll.u32 %v741, 16
        %v1215 = vor.u32 %v1212, %v1213
        %v1216 = vsel %vm1169, %v1204, %v1215
        %v1218 = vshrl.u32 %v742, 16
        %v1220 = vrot.slane %v1218, 7
        %v1221 = vshll.u32 %v742, 16
        %v1223 = vor.u32 %v1220, %v1221
        %v1224 = vsel %vm1169, %v1212, %v1223
        %v1226 = vshrl.u32 %v743, 16
        %v1228 = vrot.slane %v1226, 7
        %v1229 = vshll.u32 %v743, 16
        %v1231 = vor.u32 %v1228, %v1229
        %v1232 = vsel %vm1169, %v1220, %v1231
        %v1234 = vshrl.u32 %v744, 16
        %v1236 = vrot.slane %v1234, 7
        %v1237 = vshll.u32 %v744, 16
        %v1239 = vor.u32 %v1236, %v1237
        %v1240 = vsel %vm1169, %v1228, %v1239
        %v1242 = vshrl.u32 %v745, 16
        %v1244 = vrot.slane %v1242, 7
        %v1245 = vshll.u32 %v745, 16
        %v1247 = vor.u32 %v1244, %v1245
        %v1248 = vsel %vm1169, %v1236, %v1247
        %v1250 = vshrl.u32 %v746, 16
        %v1252 = vrot.slane %v1250, 7
        %v1253 = vshll.u32 %v746, 16
        %v1255 = vor.u32 %v1252, %v1253
        %v1256 = vsel %vm1169, %v1244, %v1255
        %v1258 = vshrl.u32 %v747, 16
        %v1260 = vrot.slane %v1258, 7
        %v1261 = vshll.u32 %v747, 16
        %v1263 = vor.u32 %v1260, %v1261
        %v1264 = vsel %vm1169, %v1252, %v1263
        %v1266 = vshrl.u32 %v748, 16
        %v1268 = vrot.slane %v1266, 7
        %v1269 = vshll.u32 %v748, 16
        %v1271 = vor.u32 %v1268, %v1269
        %v1272 = vsel %vm1169, %v1260, %v1271
        %v1274 = vshrl.u32 %v749, 16
        %v1276 = vrot.slane %v1274, 7
        %v1277 = vshll.u32 %v749, 16
        %v1279 = vor.u32 %v1276, %v1277
        %v1280 = vsel %vm1169, %v1268, %v1279
        %v1282 = vshrl.u32 %v750, 16
        %v1284 = vrot.slane %v1282, 7
        %v1285 = vshll.u32 %v750, 16
        %v1287 = vor.u32 %v1284, %v1285
        %v1288 = vsel %vm1169, %v1276, %v1287
        %v1290 = vshrl.u32 %v751, 16
        %v1292 = vrot.slane %v1290, 7
        %v1293 = vshll.u32 %v751, 16
        %v1295 = vor.u32 %v1292, %v1293
        %v1296 = vsel %vm1169, %v1284, %v1295
        %vm1313 = vcmask 1040384
        %vm1314 = vmand %vm1313, %vm1169
        %v1315 = vsel %vm1314, 0, %v1176
        %vm1316 = vcmp.eq.s32.totalorder %v1137, 0
        %vm1317 = vcmp.eq.s32.totalorder %v1138, 0
        %vm1318 = vcmp.eq.s32.totalorder %v1139, 0
        %vm1319 = vcmp.eq.s32.totalorder %v1140, 0
        %vm1320 = vcmp.eq.s32.totalorder %v1141, 0
        %vm1321 = vcmp.eq.s32.totalorder %v1142, 0
        %vm1322 = vcmp.eq.s32.totalorder %v1143, 0
        %vm1323 = vcmp.eq.s32.totalorder %v1144, 0
        %vm1324 = vcmp.eq.s32.totalorder %v1145, 0
        %vm1325 = vcmp.eq.s32.totalorder %v1146, 0
        %vm1326 = vcmp.eq.s32.totalorder %v1147, 0
        %vm1327 = vcmp.eq.s32.totalorder %v1148, 0
        %vm1328 = vcmp.eq.s32.totalorder %v1149, 0
        %vm1329 = vcmp.eq.s32.totalorder %v1150, 0
        %vm1330 = vcmp.eq.s32.totalorder %v1151, 0
        %vm1331 = vcmp.eq.s32.totalorder %v1152, 0
        %vm1332 = vcmp.eq.s32.totalorder %v1153, 0
        %vm1333 = vcmp.eq.s32.totalorder %v1154, 0
        %vm1334 = vcmp.eq.s32.totalorder %v1155, 0
        %vm1335 = vcmp.eq.s32.totalorder %v1156, 0
        %vm1336 = vcmp.eq.s32.totalorder %v1157, 0
        %vm1337 = vcmp.eq.s32.totalorder %v1158, 0
        %vm1338 = vcmp.eq.s32.totalorder %v1159, 0
        %vm1339 = vcmp.eq.s32.totalorder %v1160, 0
        %vm1340 = vcmp.eq.s32.totalorder %v1161, 0
        %vm1341 = vcmp.eq.s32.totalorder %v1162, 0
        %vm1342 = vcmp.eq.s32.totalorder %v1163, 0
        %vm1343 = vcmp.eq.s32.totalorder %v1164, 0
        %vm1344 = vcmp.eq.s32.totalorder %v1165, 0
        %vm1345 = vcmp.eq.s32.totalorder %v1166, 0
        %vm1346 = vcmp.eq.s32.totalorder %v1167, 0
        %vm1347 = vcmp.eq.s32.totalorder %v1168, 0
        %v1348 = vsel %vm1316, 1, 0
        %v1349 = vsel %vm1317, 1, 0
        %v1350 = vsel %vm1318, 1, 0
        %v1351 = vsel %vm1319, 1, 0
        %v1352 = vsel %vm1320, 1, 0
        %v1353 = vsel %vm1321, 1, 0
        %v1354 = vsel %vm1322, 1, 0
        %v1355 = vsel %vm1323, 1, 0
        %v1356 = vsel %vm1324, 1, 0
        %v1357 = vsel %vm1325, 1, 0
        %v1358 = vsel %vm1326, 1, 0
        %v1359 = vsel %vm1327, 1, 0
        %v1360 = vsel %vm1328, 1, 0
        %v1361 = vsel %vm1329, 1, 0
        %v1362 = vsel %vm1330, 1, 0
        %v1363 = vsel %vm1331, 1, 0
        %v1364 = vsel %vm1332, 1, 0
        %v1365 = vsel %vm1333, 1, 0
        %v1366 = vsel %vm1334, 1, 0
        %v1367 = vsel %vm1335, 1, 0
        %v1368 = vsel %vm1336, 1, 0
        %v1369 = vsel %vm1337, 1, 0
        %v1370 = vsel %vm1338, 1, 0
        %v1371 = vsel %vm1339, 1, 0
        %v1372 = vsel %vm1340, 1, 0
        %v1373 = vsel %vm1341, 1, 0
        %v1374 = vsel %vm1342, 1, 0
        %v1375 = vsel %vm1343, 1, 0
        %v1376 = vsel %vm1344, 1, 0
        %v1377 = vsel %vm1345, 1, 0
        %v1378 = vsel %vm1346, 1, 0
        %v1379 = vsel %vm1347, 1, 0
        %vm1380 = vcmp.eq.s32.totalorder %v1348, 1
        %vm1381 = vcmp.eq.s32.totalorder %v1349, 1
        %vm1382 = vcmp.eq.s32.totalorder %v1350, 1
        %vm1383 = vcmp.eq.s32.totalorder %v1351, 1
        %vm1384 = vcmp.eq.s32.totalorder %v1352, 1
        %vm1385 = vcmp.eq.s32.totalorder %v1353, 1
        %vm1386 = vcmp.eq.s32.totalorder %v1354, 1
        %vm1387 = vcmp.eq.s32.totalorder %v1355, 1
        %vm1388 = vcmp.eq.s32.totalorder %v1356, 1
        %vm1389 = vcmp.eq.s32.totalorder %v1357, 1
        %vm1390 = vcmp.eq.s32.totalorder %v1358, 1
        %vm1391 = vcmp.eq.s32.totalorder %v1359, 1
        %vm1392 = vcmp.eq.s32.totalorder %v1360, 1
        %vm1393 = vcmp.eq.s32.totalorder %v1361, 1
        %vm1394 = vcmp.eq.s32.totalorder %v1362, 1
        %vm1395 = vcmp.eq.s32.totalorder %v1363, 1
        %vm1396 = vcmp.eq.s32.totalorder %v1364, 1
        %vm1397 = vcmp.eq.s32.totalorder %v1365, 1
        %vm1398 = vcmp.eq.s32.totalorder %v1366, 1
        %vm1399 = vcmp.eq.s32.totalorder %v1367, 1
        %vm1400 = vcmp.eq.s32.totalorder %v1368, 1
        %vm1401 = vcmp.eq.s32.totalorder %v1369, 1
        %vm1402 = vcmp.eq.s32.totalorder %v1370, 1
        %vm1403 = vcmp.eq.s32.totalorder %v1371, 1
        %vm1404 = vcmp.eq.s32.totalorder %v1372, 1
        %vm1405 = vcmp.eq.s32.totalorder %v1373, 1
        %vm1406 = vcmp.eq.s32.totalorder %v1374, 1
        %vm1407 = vcmp.eq.s32.totalorder %v1375, 1
        %vm1408 = vcmp.eq.s32.totalorder %v1376, 1
        %vm1409 = vcmp.eq.s32.totalorder %v1377, 1
        %vm1410 = vcmp.eq.s32.totalorder %v1378, 1
        %vm1411 = vcmp.eq.s32.totalorder %v1379, 1
        %vm1412 = vmpackc.low %vm1380, %vm1380
        %vm1413 = vmpackc.low %vm1381, %vm1381
        %vm1414 = vmpackc.low %vm1382, %vm1382
        %vm1415 = vmpackc.low %vm1383, %vm1383
        %vm1416 = vmpackc.low %vm1384, %vm1384
        %vm1417 = vmpackc.low %vm1385, %vm1385
        %vm1418 = vmpackc.low %vm1386, %vm1386
        %vm1419 = vmpackc.low %vm1387, %vm1387
        %vm1420 = vmpackc.low %vm1388, %vm1388
        %vm1421 = vmpackc.low %vm1389, %vm1389
        %vm1422 = vmpackc.low %vm1390, %vm1390
        %vm1423 = vmpackc.low %vm1391, %vm1391
        %vm1424 = vmpackc.low %vm1392, %vm1392
        %vm1425 = vmpackc.low %vm1393, %vm1393
        %vm1426 = vmpackc.low %vm1394, %vm1394
        %vm1427 = vmpackc.low %vm1395, %vm1395
        %vm1428 = vmpackc.low %vm1396, %vm1396
        %vm1429 = vmpackc.low %vm1397, %vm1397
        %vm1430 = vmpackc.low %vm1398, %vm1398
        %vm1431 = vmpackc.low %vm1399, %vm1399
        %vm1432 = vmpackc.low %vm1400, %vm1400
        %vm1433 = vmpackc.low %vm1401, %vm1401
        %vm1434 = vmpackc.low %vm1402, %vm1402
        %vm1435 = vmpackc.low %vm1403, %vm1403
        %vm1436 = vmpackc.low %vm1404, %vm1404
        %vm1437 = vmpackc.low %vm1405, %vm1405
        %vm1438 = vmpackc.low %vm1406, %vm1406
        %vm1439 = vmpackc.low %vm1407, %vm1407
        %vm1440 = vmpackc.low %vm1408, %vm1408
        %vm1441 = vmpackc.low %vm1409, %vm1409
        %vm1442 = vmpackc.low %vm1410, %vm1410
        %vm1443 = vmpackc.low %vm1411, %vm1411
        %v1444 = vsel %vm1412, 65537, 0
        %v1445 = vsel %vm1413, 65537, 0
        %v1446 = vsel %vm1414, 65537, 0
        %v1447 = vsel %vm1415, 65537, 0
        %v1448 = vsel %vm1416, 65537, 0
        %v1449 = vsel %vm1417, 65537, 0
        %v1450 = vsel %vm1418, 65537, 0
        %v1451 = vsel %vm1419, 65537, 0
        %v1452 = vsel %vm1420, 65537, 0
        %v1453 = vsel %vm1421, 65537, 0
        %v1454 = vsel %vm1422, 65537, 0
        %v1455 = vsel %vm1423, 65537, 0
        %v1456 = vsel %vm1424, 65537, 0
        %v1457 = vsel %vm1425, 65537, 0
        %v1458 = vsel %vm1426, 65537, 0
        %v1459 = vsel %vm1427, 65537, 0
        %v1460 = vsel %vm1428, 65537, 0
        %v1461 = vsel %vm1429, 65537, 0
        %v1462 = vsel %vm1430, 65537, 0
        %v1463 = vsel %vm1431, 65537, 0
        %v1464 = vsel %vm1432, 65537, 0
        %v1465 = vsel %vm1433, 65537, 0
        %v1466 = vsel %vm1434, 65537, 0
        %v1467 = vsel %vm1435, 65537, 0
        %v1468 = vsel %vm1436, 65537, 0
        %v1469 = vsel %vm1437, 65537, 0
        %v1470 = vsel %vm1438, 65537, 0
        %v1471 = vsel %vm1439, 65537, 0
        %v1472 = vsel %vm1440, 65537, 0
        %v1473 = vsel %vm1441, 65537, 0
        %v1474 = vsel %vm1442, 65537, 0
        %v1475 = vsel %vm1443, 65537, 0
        %v1476 = vunpack.c.l.b16 %v1444
        %v1477 = vunpack.c.l.b16 %v1445
        %v1478 = vunpack.c.l.b16 %v1446
        %v1479 = vunpack.c.l.b16 %v1447
        %v1480 = vunpack.c.l.b16 %v1448
        %v1481 = vunpack.c.l.b16 %v1449
        %v1482 = vunpack.c.l.b16 %v1450
        %v1483 = vunpack.c.l.b16 %v1451
        %v1484 = vunpack.c.l.b16 %v1452
        %v1485 = vunpack.c.l.b16 %v1453
        %v1486 = vunpack.c.l.b16 %v1454
        %v1487 = vunpack.c.l.b16 %v1455
        %v1488 = vunpack.c.l.b16 %v1456
        %v1489 = vunpack.c.l.b16 %v1457
        %v1490 = vunpack.c.l.b16 %v1458
        %v1491 = vunpack.c.l.b16 %v1459
        %v1492 = vunpack.c.l.b16 %v1460
        %v1493 = vunpack.c.l.b16 %v1461
        %v1494 = vunpack.c.l.b16 %v1462
        %v1495 = vunpack.c.l.b16 %v1463
        %v1496 = vunpack.c.l.b16 %v1464
        %v1497 = vunpack.c.l.b16 %v1465
        %v1498 = vunpack.c.l.b16 %v1466
        %v1499 = vunpack.c.l.b16 %v1467
        %v1500 = vunpack.c.l.b16 %v1468
        %v1501 = vunpack.c.l.b16 %v1469
        %v1502 = vunpack.c.l.b16 %v1470
        %v1503 = vunpack.c.l.b16 %v1471
        %v1504 = vunpack.c.l.b16 %v1472
        %v1505 = vunpack.c.l.b16 %v1473
        %v1506 = vunpack.c.l.b16 %v1474
        %v1507 = vunpack.c.l.b16 %v1475
        %v1508 = vpack.c.b16 %v1477, %v1476
        %v1509 = vpack.c.b16 %v1479, %v1478
        %v1510 = vpack.c.b16 %v1481, %v1480
        %v1511 = vpack.c.b16 %v1483, %v1482
        %v1512 = vpack.c.b16 %v1485, %v1484
        %v1513 = vpack.c.b16 %v1487, %v1486
        %v1514 = vpack.c.b16 %v1489, %v1488
        %v1515 = vpack.c.b16 %v1491, %v1490
        %v1516 = vpack.c.b16 %v1493, %v1492
        %v1517 = vpack.c.b16 %v1495, %v1494
        %v1518 = vpack.c.b16 %v1497, %v1496
        %v1519 = vpack.c.b16 %v1499, %v1498
        %v1520 = vpack.c.b16 %v1501, %v1500
        %v1521 = vpack.c.b16 %v1503, %v1502
        %v1522 = vpack.c.b16 %v1505, %v1504
        %v1523 = vpack.c.b16 %v1507, %v1506
        %vm1524 = vcmp.ne.s16.totalorder %v1508, 0
        %vm1525 = vcmp.ne.s16.totalorder %v1509, 0
        %vm1526 = vcmp.ne.s16.totalorder %v1510, 0
        %vm1527 = vcmp.ne.s16.totalorder %v1511, 0
        %vm1528 = vcmp.ne.s16.totalorder %v1512, 0
        %vm1529 = vcmp.ne.s16.totalorder %v1513, 0
        %vm1530 = vcmp.ne.s16.totalorder %v1514, 0
        %vm1531 = vcmp.ne.s16.totalorder %v1515, 0
        %vm1532 = vcmp.ne.s16.totalorder %v1516, 0
        %vm1533 = vcmp.ne.s16.totalorder %v1517, 0
        %vm1534 = vcmp.ne.s16.totalorder %v1518, 0
        %vm1535 = vcmp.ne.s16.totalorder %v1519, 0
        %vm1536 = vcmp.ne.s16.totalorder %v1520, 0
        %vm1537 = vcmp.ne.s16.totalorder %v1521, 0
        %vm1538 = vcmp.ne.s16.totalorder %v1522, 0
        %vm1539 = vcmp.ne.s16.totalorder %v1523, 0
        %v1540 = vsel %vm1524, 0, %v1315
        %v1541 = vsel %vm1525, 0, %v1184
        %v1542 = vsel %vm1526, 0, %v1192
        %v1543 = vsel %vm1527, 0, %v1200
        %v1544 = vsel %vm1528, 0, %v1208
        %v1545 = vsel %vm1529, 0, %v1216
        %v1546 = vsel %vm1530, 0, %v1224
        %v1547 = vsel %vm1531, 0, %v1232
        %v1548 = vsel %vm1532, 0, %v1240
        %v1549 = vsel %vm1533, 0, %v1248
        %v1550 = vsel %vm1534, 0, %v1256
        %v1551 = vsel %vm1535, 0, %v1264
        %v1552 = vsel %vm1536, 0, %v1272
        %v1553 = vsel %vm1537, 0, %v1280
        %v1554 = vsel %vm1538, 0, %v1288
        %v1555 = vsel %vm1539, 0, %v1296
        %vm1556 = vsmask.f32 7424
        %v1557 = vrot.slane %v1174, 1
        %v1558 = vor.u32 %v1171, %v1557
        %v1559 = vrot.slane %v1181, 1
        %v1560 = vsel %vm1556, %v1558, %v1559
        %v1561 = vor.u32 %v1178, %v1559
        %v1562 = vrot.slane %v1189, 1
        %v1563 = vsel %vm1556, %v1561, %v1562
        %v1564 = vor.u32 %v1186, %v1562
        %v1565 = vrot.slane %v1197, 1
        %v1566 = vsel %vm1556, %v1564, %v1565
        %v1567 = vor.u32 %v1194, %v1565
        %v1568 = vrot.slane %v1205, 1
        %v1569 = vsel %vm1556, %v1567, %v1568
        %v1570 = vor.u32 %v1202, %v1568
        %v1571 = vrot.slane %v1213, 1
        %v1572 = vsel %vm1556, %v1570, %v1571
        %v1573 = vor.u32 %v1210, %v1571
        %v1574 = vrot.slane %v1221, 1
        %v1575 = vsel %vm1556, %v1573, %v1574
        %v1576 = vor.u32 %v1218, %v1574
        %v1577 = vrot.slane %v1229, 1
        %v1578 = vsel %vm1556, %v1576, %v1577
        %v1579 = vor.u32 %v1226, %v1577
        %v1580 = vrot.slane %v1237, 1
        %v1581 = vsel %vm1556, %v1579, %v1580
        %v1582 = vor.u32 %v1234, %v1580
        %v1583 = vrot.slane %v1245, 1
        %v1584 = vsel %vm1556, %v1582, %v1583
        %v1585 = vor.u32 %v1242, %v1583
        %v1586 = vrot.slane %v1253, 1
        %v1587 = vsel %vm1556, %v1585, %v1586
        %v1588 = vor.u32 %v1250, %v1586
        %v1589 = vrot.slane %v1261, 1
        %v1590 = vsel %vm1556, %v1588, %v1589
        %v1591 = vor.u32 %v1258, %v1589
        %v1592 = vrot.slane %v1269, 1
        %v1593 = vsel %vm1556, %v1591, %v1592
        %v1594 = vor.u32 %v1266, %v1592
        %v1595 = vrot.slane %v1277, 1
        %v1596 = vsel %vm1556, %v1594, %v1595
        %v1597 = vor.u32 %v1274, %v1595
        %v1598 = vrot.slane %v1285, 1
        %v1599 = vsel %vm1556, %v1597, %v1598
        %v1600 = vor.u32 %v1282, %v1598
        %v1601 = vrot.slane %v1293, 1
        %v1602 = vsel %vm1556, %v1600, %v1601
        %v1603 = vor.u32 %v1290, %v1601
        %vm1620 = vcmask 1047552
        %vm1621 = vmand %vm1620, %vm1556
        %v1622 = vsel %vm1621, %v1603, 0
        %vm1623 = vcmp.eq.s32.totalorder %v1137, 15
        %vm1624 = vcmp.eq.s32.totalorder %v1138, 15
        %vm1625 = vcmp.eq.s32.totalorder %v1139, 15
        %vm1626 = vcmp.eq.s32.totalorder %v1140, 15
        %vm1627 = vcmp.eq.s32.totalorder %v1141, 15
        %vm1628 = vcmp.eq.s32.totalorder %v1142, 15
        %vm1629 = vcmp.eq.s32.totalorder %v1143, 15
        %vm1630 = vcmp.eq.s32.totalorder %v1144, 15
        %vm1631 = vcmp.eq.s32.totalorder %v1145, 15
        %vm1632 = vcmp.eq.s32.totalorder %v1146, 15
        %vm1633 = vcmp.eq.s32.totalorder %v1147, 15
        %vm1634 = vcmp.eq.s32.totalorder %v1148, 15
        %vm1635 = vcmp.eq.s32.totalorder %v1149, 15
        %vm1636 = vcmp.eq.s32.totalorder %v1150, 15
        %vm1637 = vcmp.eq.s32.totalorder %v1151, 15
        %vm1638 = vcmp.eq.s32.totalorder %v1152, 15
        %vm1639 = vcmp.eq.s32.totalorder %v1153, 15
        %vm1640 = vcmp.eq.s32.totalorder %v1154, 15
        %vm1641 = vcmp.eq.s32.totalorder %v1155, 15
        %vm1642 = vcmp.eq.s32.totalorder %v1156, 15
        %vm1643 = vcmp.eq.s32.totalorder %v1157, 15
        %vm1644 = vcmp.eq.s32.totalorder %v1158, 15
        %vm1645 = vcmp.eq.s32.totalorder %v1159, 15
        %vm1646 = vcmp.eq.s32.totalorder %v1160, 15
        %vm1647 = vcmp.eq.s32.totalorder %v1161, 15
        %vm1648 = vcmp.eq.s32.totalorder %v1162, 15
        %vm1649 = vcmp.eq.s32.totalorder %v1163, 15
        %vm1650 = vcmp.eq.s32.totalorder %v1164, 15
        %vm1651 = vcmp.eq.s32.totalorder %v1165, 15
        %vm1652 = vcmp.eq.s32.totalorder %v1166, 15
        %vm1653 = vcmp.eq.s32.totalorder %v1167, 15
        %vm1654 = vcmp.eq.s32.totalorder %v1168, 15
        %v1655 = vsel %vm1623, 1, 0
        %v1656 = vsel %vm1624, 1, 0
        %v1657 = vsel %vm1625, 1, 0
        %v1658 = vsel %vm1626, 1, 0
        %v1659 = vsel %vm1627, 1, 0
        %v1660 = vsel %vm1628, 1, 0
        %v1661 = vsel %vm1629, 1, 0
        %v1662 = vsel %vm1630, 1, 0
        %v1663 = vsel %vm1631, 1, 0
        %v1664 = vsel %vm1632, 1, 0
        %v1665 = vsel %vm1633, 1, 0
        %v1666 = vsel %vm1634, 1, 0
        %v1667 = vsel %vm1635, 1, 0
        %v1668 = vsel %vm1636, 1, 0
        %v1669 = vsel %vm1637, 1, 0
        %v1670 = vsel %vm1638, 1, 0
        %v1671 = vsel %vm1639, 1, 0
        %v1672 = vsel %vm1640, 1, 0
        %v1673 = vsel %vm1641, 1, 0
        %v1674 = vsel %vm1642, 1, 0
        %v1675 = vsel %vm1643, 1, 0
        %v1676 = vsel %vm1644, 1, 0
        %v1677 = vsel %vm1645, 1, 0
        %v1678 = vsel %vm1646, 1, 0
        %v1679 = vsel %vm1647, 1, 0
        %v1680 = vsel %vm1648, 1, 0
        %v1681 = vsel %vm1649, 1, 0
        %v1682 = vsel %vm1650, 1, 0
        %v1683 = vsel %vm1651, 1, 0
        %v1684 = vsel %vm1652, 1, 0
        %v1685 = vsel %vm1653, 1, 0
        %v1686 = vsel %vm1654, 1, 0
        %vm1687 = vcmp.eq.s32.totalorder %v1655, 1
        %vm1688 = vcmp.eq.s32.totalorder %v1656, 1
        %vm1689 = vcmp.eq.s32.totalorder %v1657, 1
        %vm1690 = vcmp.eq.s32.totalorder %v1658, 1
        %vm1691 = vcmp.eq.s32.totalorder %v1659, 1
        %vm1692 = vcmp.eq.s32.totalorder %v1660, 1
        %vm1693 = vcmp.eq.s32.totalorder %v1661, 1
        %vm1694 = vcmp.eq.s32.totalorder %v1662, 1
        %vm1695 = vcmp.eq.s32.totalorder %v1663, 1
        %vm1696 = vcmp.eq.s32.totalorder %v1664, 1
        %vm1697 = vcmp.eq.s32.totalorder %v1665, 1
        %vm1698 = vcmp.eq.s32.totalorder %v1666, 1
        %vm1699 = vcmp.eq.s32.totalorder %v1667, 1
        %vm1700 = vcmp.eq.s32.totalorder %v1668, 1
        %vm1701 = vcmp.eq.s32.totalorder %v1669, 1
        %vm1702 = vcmp.eq.s32.totalorder %v1670, 1
        %vm1703 = vcmp.eq.s32.totalorder %v1671, 1
        %vm1704 = vcmp.eq.s32.totalorder %v1672, 1
        %vm1705 = vcmp.eq.s32.totalorder %v1673, 1
        %vm1706 = vcmp.eq.s32.totalorder %v1674, 1
        %vm1707 = vcmp.eq.s32.totalorder %v1675, 1
        %vm1708 = vcmp.eq.s32.totalorder %v1676, 1
        %vm1709 = vcmp.eq.s32.totalorder %v1677, 1
        %vm1710 = vcmp.eq.s32.totalorder %v1678, 1
        %vm1711 = vcmp.eq.s32.totalorder %v1679, 1
        %vm1712 = vcmp.eq.s32.totalorder %v1680, 1
        %vm1713 = vcmp.eq.s32.totalorder %v1681, 1
        %vm1714 = vcmp.eq.s32.totalorder %v1682, 1
        %vm1715 = vcmp.eq.s32.totalorder %v1683, 1
        %vm1716 = vcmp.eq.s32.totalorder %v1684, 1
        %vm1717 = vcmp.eq.s32.totalorder %v1685, 1
        %vm1718 = vcmp.eq.s32.totalorder %v1686, 1
        %vm1719 = vmpackc.low %vm1687, %vm1687
        %vm1720 = vmpackc.low %vm1688, %vm1688
        %vm1721 = vmpackc.low %vm1689, %vm1689
        %vm1722 = vmpackc.low %vm1690, %vm1690
        %vm1723 = vmpackc.low %vm1691, %vm1691
        %vm1724 = vmpackc.low %vm1692, %vm1692
        %vm1725 = vmpackc.low %vm1693, %vm1693
        %vm1726 = vmpackc.low %vm1694, %vm1694
        %vm1727 = vmpackc.low %vm1695, %vm1695
        %vm1728 = vmpackc.low %vm1696, %vm1696
        %vm1729 = vmpackc.low %vm1697, %vm1697
        %vm1730 = vmpackc.low %vm1698, %vm1698
        %vm1731 = vmpackc.low %vm1699, %vm1699
        %vm1732 = vmpackc.low %vm1700, %vm1700
        %vm1733 = vmpackc.low %vm1701, %vm1701
        %vm1734 = vmpackc.low %vm1702, %vm1702
        %vm1735 = vmpackc.low %vm1703, %vm1703
        %vm1736 = vmpackc.low %vm1704, %vm1704
        %vm1737 = vmpackc.low %vm1705, %vm1705
        %vm1738 = vmpackc.low %vm1706, %vm1706
        %vm1739 = vmpackc.low %vm1707, %vm1707
        %vm1740 = vmpackc.low %vm1708, %vm1708
        %vm1741 = vmpackc.low %vm1709, %vm1709
        %vm1742 = vmpackc.low %vm1710, %vm1710
        %vm1743 = vmpackc.low %vm1711, %vm1711
        %vm1744 = vmpackc.low %vm1712, %vm1712
        %vm1745 = vmpackc.low %vm1713, %vm1713
        %vm1746 = vmpackc.low %vm1714, %vm1714
        %vm1747 = vmpackc.low %vm1715, %vm1715
        %vm1748 = vmpackc.low %vm1716, %vm1716
        %vm1749 = vmpackc.low %vm1717, %vm1717
        %vm1750 = vmpackc.low %vm1718, %vm1718
        %v1751 = vsel %vm1719, 65537, 0
        %v1752 = vsel %vm1720, 65537, 0
        %v1753 = vsel %vm1721, 65537, 0
        %v1754 = vsel %vm1722, 65537, 0
        %v1755 = vsel %vm1723, 65537, 0
        %v1756 = vsel %vm1724, 65537, 0
        %v1757 = vsel %vm1725, 65537, 0
        %v1758 = vsel %vm1726, 65537, 0
        %v1759 = vsel %vm1727, 65537, 0
        %v1760 = vsel %vm1728, 65537, 0
        %v1761 = vsel %vm1729, 65537, 0
        %v1762 = vsel %vm1730, 65537, 0
        %v1763 = vsel %vm1731, 65537, 0
        %v1764 = vsel %vm1732, 65537, 0
        %v1765 = vsel %vm1733, 65537, 0
        %v1766 = vsel %vm1734, 65537, 0
        %v1767 = vsel %vm1735, 65537, 0
        %v1768 = vsel %vm1736, 65537, 0
        %v1769 = vsel %vm1737, 65537, 0
        %v1770 = vsel %vm1738, 65537, 0
        %v1771 = vsel %vm1739, 65537, 0
        %v1772 = vsel %vm1740, 65537, 0
        %v1773 = vsel %vm1741, 65537, 0
        %v1774 = vsel %vm1742, 65537, 0
        %v1775 = vsel %vm1743, 65537, 0
        %v1776 = vsel %vm1744, 65537, 0
        %v1777 = vsel %vm1745, 65537, 0
        %v1778 = vsel %vm1746, 65537, 0
        %v1779 = vsel %vm1747, 65537, 0
        %v1780 = vsel %vm1748, 65537, 0
        %v1781 = vsel %vm1749, 65537, 0
        %v1782 = vsel %vm1750, 65537, 0
        %v1783 = vunpack.c.l.b16 %v1751
        %v1784 = vunpack.c.l.b16 %v1752
        %v1785 = vunpack.c.l.b16 %v1753
        %v1786 = vunpack.c.l.b16 %v1754
        %v1787 = vunpack.c.l.b16 %v1755
        %v1788 = vunpack.c.l.b16 %v1756
        %v1789 = vunpack.c.l.b16 %v1757
        %v1790 = vunpack.c.l.b16 %v1758
        %v1791 = vunpack.c.l.b16 %v1759
        %v1792 = vunpack.c.l.b16 %v1760
        %v1793 = vunpack.c.l.b16 %v1761
        %v1794 = vunpack.c.l.b16 %v1762
        %v1795 = vunpack.c.l.b16 %v1763
        %v1796 = vunpack.c.l.b16 %v1764
        %v1797 = vunpack.c.l.b16 %v1765
        %v1798 = vunpack.c.l.b16 %v1766
        %v1799 = vunpack.c.l.b16 %v1767
        %v1800 = vunpack.c.l.b16 %v1768
        %v1801 = vunpack.c.l.b16 %v1769
        %v1802 = vunpack.c.l.b16 %v1770
        %v1803 = vunpack.c.l.b16 %v1771
        %v1804 = vunpack.c.l.b16 %v1772
        %v1805 = vunpack.c.l.b16 %v1773
        %v1806 = vunpack.c.l.b16 %v1774
        %v1807 = vunpack.c.l.b16 %v1775
        %v1808 = vunpack.c.l.b16 %v1776
        %v1809 = vunpack.c.l.b16 %v1777
        %v1810 = vunpack.c.l.b16 %v1778
        %v1811 = vunpack.c.l.b16 %v1779
        %v1812 = vunpack.c.l.b16 %v1780
        %v1813 = vunpack.c.l.b16 %v1781
        %v1814 = vunpack.c.l.b16 %v1782
        %v1815 = vpack.c.b16 %v1784, %v1783
        %v1816 = vpack.c.b16 %v1786, %v1785
        %v1817 = vpack.c.b16 %v1788, %v1787
        %v1818 = vpack.c.b16 %v1790, %v1789
        %v1819 = vpack.c.b16 %v1792, %v1791
        %v1820 = vpack.c.b16 %v1794, %v1793
        %v1821 = vpack.c.b16 %v1796, %v1795
        %v1822 = vpack.c.b16 %v1798, %v1797
        %v1823 = vpack.c.b16 %v1800, %v1799
        %v1824 = vpack.c.b16 %v1802, %v1801
        %v1825 = vpack.c.b16 %v1804, %v1803
        %v1826 = vpack.c.b16 %v1806, %v1805
        %v1827 = vpack.c.b16 %v1808, %v1807
        %v1828 = vpack.c.b16 %v1810, %v1809
        %v1829 = vpack.c.b16 %v1812, %v1811
        %v1830 = vpack.c.b16 %v1814, %v1813
        %vm1831 = vcmp.ne.s16.totalorder %v1815, 0
        %vm1832 = vcmp.ne.s16.totalorder %v1816, 0
        %vm1833 = vcmp.ne.s16.totalorder %v1817, 0
        %vm1834 = vcmp.ne.s16.totalorder %v1818, 0
        %vm1835 = vcmp.ne.s16.totalorder %v1819, 0
        %vm1836 = vcmp.ne.s16.totalorder %v1820, 0
        %vm1837 = vcmp.ne.s16.totalorder %v1821, 0
        %vm1838 = vcmp.ne.s16.totalorder %v1822, 0
        %vm1839 = vcmp.ne.s16.totalorder %v1823, 0
        %vm1840 = vcmp.ne.s16.totalorder %v1824, 0
        %vm1841 = vcmp.ne.s16.totalorder %v1825, 0
        %vm1842 = vcmp.ne.s16.totalorder %v1826, 0
        %vm1843 = vcmp.ne.s16.totalorder %v1827, 0
        %vm1844 = vcmp.ne.s16.totalorder %v1828, 0
        %vm1845 = vcmp.ne.s16.totalorder %v1829, 0
        %vm1846 = vcmp.ne.s16.totalorder %v1830, 0
        %v1847 = vsel %vm1831, 0, %v1560
        %v1848 = vsel %vm1832, 0, %v1563
        %v1849 = vsel %vm1833, 0, %v1566
        %v1850 = vsel %vm1834, 0, %v1569
        %v1851 = vsel %vm1835, 0, %v1572
        %v1852 = vsel %vm1836, 0, %v1575
        %v1853 = vsel %vm1837, 0, %v1578
        %v1854 = vsel %vm1838, 0, %v1581
        %v1855 = vsel %vm1839, 0, %v1584
        %v1856 = vsel %vm1840, 0, %v1587
        %v1857 = vsel %vm1841, 0, %v1590
        %v1858 = vsel %vm1842, 0, %v1593
        %v1859 = vsel %vm1843, 0, %v1596
        %v1860 = vsel %vm1844, 0, %v1599
        %v1861 = vsel %vm1845, 0, %v1602
        %v1862 = vsel %vm1846, 0, %v1622
        %1863 = vst [vmem:[#allocation2] sm:$0xff] 0
        %1864 = vst [vmem:[#allocation2 + $0x8] sm:$0xf] 0
        %1865 = vst [vmem:[#allocation2 + $0xc] sm:$0xff] 0
        %1866 = vst [vmem:[#allocation2 + $0x14] sm:$0xf] 0
        %1867 = vst [vmem:[#allocation2 + $0x198] sm:$0xff] 0
        %1868 = vst [vmem:[#allocation2 + $0x1a0] sm:$0xf] 0
        %1869 = vst [vmem:[#allocation2 + $0x1a4] sm:$0xff] 0
        %1870 = vst [vmem:[#allocation2 + $0x1ac] sm:$0xf] 0
        %v1887 = vunpack.c.l.b16 %v1540
        %v1888 = vunpack.c.h.b16 %v1540
        %v1889 = vunpack.c.l.b16 %v1541
        %v1890 = vunpack.c.h.b16 %v1541
        %v1891 = vunpack.c.l.b16 %v1542
        %v1892 = vunpack.c.h.b16 %v1542
        %v1893 = vunpack.c.l.b16 %v1543
        %v1894 = vunpack.c.h.b16 %v1543
        %v1895 = vunpack.c.l.b16 %v1544
        %v1896 = vunpack.c.h.b16 %v1544
        %v1897 = vunpack.c.l.b16 %v1545
        %v1898 = vunpack.c.h.b16 %v1545
        %v1899 = vunpack.c.l.b16 %v1546
        %v1900 = vunpack.c.h.b16 %v1546
        %v1901 = vunpack.c.l.b16 %v1547
        %v1902 = vunpack.c.h.b16 %v1547
        %v1903 = vunpack.c.l.b16 %v1548
        %v1904 = vunpack.c.h.b16 %v1548
        %v1905 = vunpack.c.l.b16 %v1549
        %v1906 = vunpack.c.h.b16 %v1549
        %v1907 = vunpack.c.l.b16 %v1550
        %v1908 = vunpack.c.h.b16 %v1550
        %v1909 = vunpack.c.l.b16 %v1551
        %v1910 = vunpack.c.h.b16 %v1551
        %v1911 = vunpack.c.l.b16 %v1552
        %v1912 = vunpack.c.h.b16 %v1552
        %v1913 = vunpack.c.l.b16 %v1553
        %v1914 = vunpack.c.h.b16 %v1553
        %v1915 = vunpack.c.l.b16 %v1554
        %v1916 = vunpack.c.h.b16 %v1554
        %v1917 = vunpack.c.l.b16 %v1555
        %v1918 = vunpack.c.h.b16 %v1555
        %v1919 = vpack.c.b16 %v1887, %v1887
        %v1920 = vpack.c.b16 %v1888, %v1888
        %v1921 = vpack.c.b16 %v1889, %v1889
        %v1922 = vpack.c.b16 %v1890, %v1890
        %v1923 = vpack.c.b16 %v1891, %v1891
        %v1924 = vpack.c.b16 %v1892, %v1892
        %v1925 = vpack.c.b16 %v1893, %v1893
        %v1926 = vpack.c.b16 %v1894, %v1894
        %v1927 = vpack.c.b16 %v1895, %v1895
        %v1928 = vpack.c.b16 %v1896, %v1896
        %v1929 = vpack.c.b16 %v1897, %v1897
        %v1930 = vpack.c.b16 %v1898, %v1898
        %v1931 = vpack.c.b16 %v1899, %v1899
        %v1932 = vpack.c.b16 %v1900, %v1900
        %v1933 = vpack.c.b16 %v1901, %v1901
        %v1934 = vpack.c.b16 %v1902, %v1902
        %v1935 = vpack.c.b16 %v1903, %v1903
        %v1936 = vpack.c.b16 %v1904, %v1904
        %v1937 = vpack.c.b16 %v1905, %v1905
        %v1938 = vpack.c.b16 %v1906, %v1906
        %v1939 = vpack.c.b16 %v1907, %v1907
        %v1940 = vpack.c.b16 %v1908, %v1908
        %v1941 = vpack.c.b16 %v1909, %v1909
        %v1942 = vpack.c.b16 %v1910, %v1910
        %v1943 = vpack.c.b16 %v1911, %v1911
        %v1944 = vpack.c.b16 %v1912, %v1912
        %v1945 = vpack.c.b16 %v1913, %v1913
        %v1946 = vpack.c.b16 %v1914, %v1914
        %v1947 = vpack.c.b16 %v1915, %v1915
        %v1948 = vpack.c.b16 %v1916, %v1916
        %v1949 = vpack.c.b16 %v1917, %v1917
        %v1950 = vpack.c.b16 %v1918, %v1918
        %1983 = vst [vmem:[#allocation2 + $0x18] sm:$0xf] %v1919
        %1984 = vst [vmem:[#allocation2 + $0x24] sm:$0xf] %v1920
        %1985 = vst [vmem:[#allocation2 + $0x30] sm:$0xf] %v1921
        %1986 = vst [vmem:[#allocation2 + $0x3c] sm:$0xf] %v1922
        %1987 = vst [vmem:[#allocation2 + $0x48] sm:$0xf] %v1923
        %1988 = vst [vmem:[#allocation2 + $0x54] sm:$0xf] %v1924
        %1989 = vst [vmem:[#allocation2 + $0x60] sm:$0xf] %v1925
        %1990 = vst [vmem:[#allocation2 + $0x6c] sm:$0xf] %v1926
        %1991 = vst [vmem:[#allocation2 + $0x78] sm:$0xf] %v1927
        %1992 = vst [vmem:[#allocation2 + $0x84] sm:$0xf] %v1928
        %1993 = vst [vmem:[#allocation2 + $0x90] sm:$0xf] %v1929
        %1994 = vst [vmem:[#allocation2 + $0x9c] sm:$0xf] %v1930
        %1995 = vst [vmem:[#allocation2 + $0xa8] sm:$0xf] %v1931
        %1996 = vst [vmem:[#allocation2 + $0xb4] sm:$0xf] %v1932
        %1997 = vst [vmem:[#allocation2 + $0xc0] sm:$0xf] %v1933
        %1998 = vst [vmem:[#allocation2 + $0xcc] sm:$0xf] %v1934
        %1999 = vst [vmem:[#allocation2 + $0xd8] sm:$0xf] %v1935
        %2000 = vst [vmem:[#allocation2 + $0xe4] sm:$0xf] %v1936
        %2001 = vst [vmem:[#allocation2 + $0xf0] sm:$0xf] %v1937
        %2002 = vst [vmem:[#allocation2 + $0xfc] sm:$0xf] %v1938
        %2003 = vst [vmem:[#allocation2 + $0x108] sm:$0xf] %v1939
        %2004 = vst [vmem:[#allocation2 + $0x114] sm:$0xf] %v1940
        %2005 = vst [vmem:[#allocation2 + $0x120] sm:$0xf] %v1941
        %2006 = vst [vmem:[#allocation2 + $0x12c] sm:$0xf] %v1942
        %2007 = vst [vmem:[#allocation2 + $0x138] sm:$0xf] %v1943
        %2008 = vst [vmem:[#allocation2 + $0x144] sm:$0xf] %v1944
        %2009 = vst [vmem:[#allocation2 + $0x150] sm:$0xf] %v1945
        %2010 = vst [vmem:[#allocation2 + $0x15c] sm:$0xf] %v1946
        %2011 = vst [vmem:[#allocation2 + $0x168] sm:$0xf] %v1947
        %2012 = vst [vmem:[#allocation2 + $0x174] sm:$0xf] %v1948
        %2013 = vst [vmem:[#allocation2 + $0x180] sm:$0xf] %v1949
        %2014 = vst [vmem:[#allocation2 + $0x18c] sm:$0xf] %v1950
        %v2031 = vunpack.c.l.b16 %v736
        %v2032 = vunpack.c.h.b16 %v736
        %v2033 = vunpack.c.l.b16 %v737
        %v2034 = vunpack.c.h.b16 %v737
        %v2035 = vunpack.c.l.b16 %v738
        %v2036 = vunpack.c.h.b16 %v738
        %v2037 = vunpack.c.l.b16 %v739
        %v2038 = vunpack.c.h.b16 %v739
        %v2039 = vunpack.c.l.b16 %v740
        %v2040 = vunpack.c.h.b16 %v740
        %v2041 = vunpack.c.l.b16 %v741
        %v2042 = vunpack.c.h.b16 %v741
        %v2043 = vunpack.c.l.b16 %v742
        %v2044 = vunpack.c.h.b16 %v742
        %v2045 = vunpack.c.l.b16 %v743
        %v2046 = vunpack.c.h.b16 %v743
        %v2047 = vunpack.c.l.b16 %v744
        %v2048 = vunpack.c.h.b16 %v744
        %v2049 = vunpack.c.l.b16 %v745
        %v2050 = vunpack.c.h.b16 %v745
        %v2051 = vunpack.c.l.b16 %v746
        %v2052 = vunpack.c.h.b16 %v746
        %v2053 = vunpack.c.l.b16 %v747
        %v2054 = vunpack.c.h.b16 %v747
        %v2055 = vunpack.c.l.b16 %v748
        %v2056 = vunpack.c.h.b16 %v748
        %v2057 = vunpack.c.l.b16 %v749
        %v2058 = vunpack.c.h.b16 %v749
        %v2059 = vunpack.c.l.b16 %v750
        %v2060 = vunpack.c.h.b16 %v750
        %v2061 = vunpack.c.l.b16 %v751
        %v2062 = vunpack.c.h.b16 %v751
        %v2063 = vpack.c.b16 %v2031, %v2031
        %v2064 = vpack.c.b16 %v2032, %v2032
        %v2065 = vpack.c.b16 %v2033, %v2033
        %v2066 = vpack.c.b16 %v2034, %v2034
        %v2067 = vpack.c.b16 %v2035, %v2035
        %v2068 = vpack.c.b16 %v2036, %v2036
        %v2069 = vpack.c.b16 %v2037, %v2037
        %v2070 = vpack.c.b16 %v2038, %v2038
        %v2071 = vpack.c.b16 %v2039, %v2039
        %v2072 = vpack.c.b16 %v2040, %v2040
        %v2073 = vpack.c.b16 %v2041, %v2041
        %v2074 = vpack.c.b16 %v2042, %v2042
        %v2075 = vpack.c.b16 %v2043, %v2043
        %v2076 = vpack.c.b16 %v2044, %v2044
        %v2077 = vpack.c.b16 %v2045, %v2045
        %v2078 = vpack.c.b16 %v2046, %v2046
        %v2079 = vpack.c.b16 %v2047, %v2047
        %v2080 = vpack.c.b16 %v2048, %v2048
        %v2081 = vpack.c.b16 %v2049, %v2049
        %v2082 = vpack.c.b16 %v2050, %v2050
        %v2083 = vpack.c.b16 %v2051, %v2051
        %v2084 = vpack.c.b16 %v2052, %v2052
        %v2085 = vpack.c.b16 %v2053, %v2053
        %v2086 = vpack.c.b16 %v2054, %v2054
        %v2087 = vpack.c.b16 %v2055, %v2055
        %v2088 = vpack.c.b16 %v2056, %v2056
        %v2089 = vpack.c.b16 %v2057, %v2057
        %v2090 = vpack.c.b16 %v2058, %v2058
        %v2091 = vpack.c.b16 %v2059, %v2059
        %v2092 = vpack.c.b16 %v2060, %v2060
        %v2093 = vpack.c.b16 %v2061, %v2061
        %v2094 = vpack.c.b16 %v2062, %v2062
        %2127 = vst [vmem:[#allocation2 + $0x1c] sm:$0xf] %v2063
        %2128 = vst [vmem:[#allocation2 + $0x28] sm:$0xf] %v2064
        %2129 = vst [vmem:[#allocation2 + $0x34] sm:$0xf] %v2065
        %2130 = vst [vmem:[#allocation2 + $0x40] sm:$0xf] %v2066
        %2131 = vst [vmem:[#allocation2 + $0x4c] sm:$0xf] %v2067
        %2132 = vst [vmem:[#allocation2 + $0x58] sm:$0xf] %v2068
        %2133 = vst [vmem:[#allocation2 + $0x64] sm:$0xf] %v2069
        %2134 = vst [vmem:[#allocation2 + $0x70] sm:$0xf] %v2070
        %2135 = vst [vmem:[#allocation2 + $0x7c] sm:$0xf] %v2071
        %2136 = vst [vmem:[#allocation2 + $0x88] sm:$0xf] %v2072
        %2137 = vst [vmem:[#allocation2 + $0x94] sm:$0xf] %v2073
        %2138 = vst [vmem:[#allocation2 + $0xa0] sm:$0xf] %v2074
        %2139 = vst [vmem:[#allocation2 + $0xac] sm:$0xf] %v2075
        %2140 = vst [vmem:[#allocation2 + $0xb8] sm:$0xf] %v2076
        %2141 = vst [vmem:[#allocation2 + $0xc4] sm:$0xf] %v2077
        %2142 = vst [vmem:[#allocation2 + $0xd0] sm:$0xf] %v2078
        %2143 = vst [vmem:[#allocation2 + $0xdc] sm:$0xf] %v2079
        %2144 = vst [vmem:[#allocation2 + $0xe8] sm:$0xf] %v2080
        %2145 = vst [vmem:[#allocation2 + $0xf4] sm:$0xf] %v2081
        %2146 = vst [vmem:[#allocation2 + $0x100] sm:$0xf] %v2082
        %2147 = vst [vmem:[#allocation2 + $0x10c] sm:$0xf] %v2083
        %2148 = vst [vmem:[#allocation2 + $0x118] sm:$0xf] %v2084
        %2149 = vst [vmem:[#allocation2 + $0x124] sm:$0xf] %v2085
        %2150 = vst [vmem:[#allocation2 + $0x130] sm:$0xf] %v2086
        %2151 = vst [vmem:[#allocation2 + $0x13c] sm:$0xf] %v2087
        %2152 = vst [vmem:[#allocation2 + $0x148] sm:$0xf] %v2088
        %2153 = vst [vmem:[#allocation2 + $0x154] sm:$0xf] %v2089
        %2154 = vst [vmem:[#allocation2 + $0x160] sm:$0xf] %v2090
        %2155 = vst [vmem:[#allocation2 + $0x16c] sm:$0xf] %v2091
        %2156 = vst [vmem:[#allocation2 + $0x178] sm:$0xf] %v2092
        %2157 = vst [vmem:[#allocation2 + $0x184] sm:$0xf] %v2093
        %2158 = vst [vmem:[#allocation2 + $0x190] sm:$0xf] %v2094
        %v2175 = vunpack.c.l.b16 %v1847
        %v2176 = vunpack.c.h.b16 %v1847
        %v2177 = vunpack.c.l.b16 %v1848
        %v2178 = vunpack.c.h.b16 %v1848
        %v2179 = vunpack.c.l.b16 %v1849
        %v2180 = vunpack.c.h.b16 %v1849
        %v2181 = vunpack.c.l.b16 %v1850
        %v2182 = vunpack.c.h.b16 %v1850
        %v2183 = vunpack.c.l.b16 %v1851
        %v2184 = vunpack.c.h.b16 %v1851
        %v2185 = vunpack.c.l.b16 %v1852
        %v2186 = vunpack.c.h.b16 %v1852
        %v2187 = vunpack.c.l.b16 %v1853
        %v2188 = vunpack.c.h.b16 %v1853
        %v2189 = vunpack.c.l.b16 %v1854
        %v2190 = vunpack.c.h.b16 %v1854
        %v2191 = vunpack.c.l.b16 %v1855
        %v2192 = vunpack.c.h.b16 %v1855
        %v2193 = vunpack.c.l.b16 %v1856
        %v2194 = vunpack.c.h.b16 %v1856
        %v2195 = vunpack.c.l.b16 %v1857
        %v2196 = vunpack.c.h.b16 %v1857
        %v2197 = vunpack.c.l.b16 %v1858
        %v2198 = vunpack.c.h.b16 %v1858
        %v2199 = vunpack.c.l.b16 %v1859
        %v2200 = vunpack.c.h.b16 %v1859
        %v2201 = vunpack.c.l.b16 %v1860
        %v2202 = vunpack.c.h.b16 %v1860
        %v2203 = vunpack.c.l.b16 %v1861
        %v2204 = vunpack.c.h.b16 %v1861
        %v2205 = vunpack.c.l.b16 %v1862
        %v2206 = vunpack.c.h.b16 %v1862
        %v2207 = vpack.c.b16 %v2175, %v2175
        %v2208 = vpack.c.b16 %v2176, %v2176
        %v2209 = vpack.c.b16 %v2177, %v2177
        %v2210 = vpack.c.b16 %v2178, %v2178
        %v2211 = vpack.c.b16 %v2179, %v2179
        %v2212 = vpack.c.b16 %v2180, %v2180
        %v2213 = vpack.c.b16 %v2181, %v2181
        %v2214 = vpack.c.b16 %v2182, %v2182
        %v2215 = vpack.c.b16 %v2183, %v2183
        %v2216 = vpack.c.b16 %v2184, %v2184
        %v2217 = vpack.c.b16 %v2185, %v2185
        %v2218 = vpack.c.b16 %v2186, %v2186
        %v2219 = vpack.c.b16 %v2187, %v2187
        %v2220 = vpack.c.b16 %v2188, %v2188
        %v2221 = vpack.c.b16 %v2189, %v2189
        %v2222 = vpack.c.b16 %v2190, %v2190
        %v2223 = vpack.c.b16 %v2191, %v2191
        %v2224 = vpack.c.b16 %v2192, %v2192
        %v2225 = vpack.c.b16 %v2193, %v2193
        %v2226 = vpack.c.b16 %v2194, %v2194
        %v2227 = vpack.c.b16 %v2195, %v2195
        %v2228 = vpack.c.b16 %v2196, %v2196
        %v2229 = vpack.c.b16 %v2197, %v2197
        %v2230 = vpack.c.b16 %v2198, %v2198
        %v2231 = vpack.c.b16 %v2199, %v2199
        %v2232 = vpack.c.b16 %v2200, %v2200
        %v2233 = vpack.c.b16 %v2201, %v2201
        %v2234 = vpack.c.b16 %v2202, %v2202
        %v2235 = vpack.c.b16 %v2203, %v2203
        %v2236 = vpack.c.b16 %v2204, %v2204
        %v2237 = vpack.c.b16 %v2205, %v2205
        %v2238 = vpack.c.b16 %v2206, %v2206
        %2271 = vst [vmem:[#allocation2 + $0x20] sm:$0xf] %v2207
        %2272 = vst [vmem:[#allocation2 + $0x2c] sm:$0xf] %v2208
        %2273 = vst [vmem:[#allocation2 + $0x38] sm:$0xf] %v2209
        %2274 = vst [vmem:[#allocation2 + $0x44] sm:$0xf] %v2210
        %2275 = vst [vmem:[#allocation2 + $0x50] sm:$0xf] %v2211
        %2276 = vst [vmem:[#allocation2 + $0x5c] sm:$0xf] %v2212
        %2277 = vst [vmem:[#allocation2 + $0x68] sm:$0xf] %v2213
        %2278 = vst [vmem:[#allocation2 + $0x74] sm:$0xf] %v2214
        %2279 = vst [vmem:[#allocation2 + $0x80] sm:$0xf] %v2215
        %2280 = vst [vmem:[#allocation2 + $0x8c] sm:$0xf] %v2216
        %2281 = vst [vmem:[#allocation2 + $0x98] sm:$0xf] %v2217
        %2282 = vst [vmem:[#allocation2 + $0xa4] sm:$0xf] %v2218
        %2283 = vst [vmem:[#allocation2 + $0xb0] sm:$0xf] %v2219
        %2284 = vst [vmem:[#allocation2 + $0xbc] sm:$0xf] %v2220
        %2285 = vst [vmem:[#allocation2 + $0xc8] sm:$0xf] %v2221
        %2286 = vst [vmem:[#allocation2 + $0xd4] sm:$0xf] %v2222
        %2287 = vst [vmem:[#allocation2 + $0xe0] sm:$0xf] %v2223
        %2288 = vst [vmem:[#allocation2 + $0xec] sm:$0xf] %v2224
        %2289 = vst [vmem:[#allocation2 + $0xf8] sm:$0xf] %v2225
        %2290 = vst [vmem:[#allocation2 + $0x104] sm:$0xf] %v2226
        %2291 = vst [vmem:[#allocation2 + $0x110] sm:$0xf] %v2227
        %2292 = vst [vmem:[#allocation2 + $0x11c] sm:$0xf] %v2228
        %2293 = vst [vmem:[#allocation2 + $0x128] sm:$0xf] %v2229
        %2294 = vst [vmem:[#allocation2 + $0x134] sm:$0xf] %v2230
        %2295 = vst [vmem:[#allocation2 + $0x140] sm:$0xf] %v2231
        %2296 = vst [vmem:[#allocation2 + $0x14c] sm:$0xf] %v2232
        %2297 = vst [vmem:[#allocation2 + $0x158] sm:$0xf] %v2233
        %2298 = vst [vmem:[#allocation2 + $0x164] sm:$0xf] %v2234
        %2299 = vst [vmem:[#allocation2 + $0x170] sm:$0xf] %v2235
        %2300 = vst [vmem:[#allocation2 + $0x17c] sm:$0xf] %v2236
        %2301 = vst [vmem:[#allocation2 + $0x188] sm:$0xf] %v2237
        %2302 = vst [vmem:[#allocation2 + $0x194] sm:$0xf] %v2238
        %v2303 = vld [vmem:[#allocation2] sm:$0xff]
        %v2304 = vld [vmem:[#allocation2 + $0x8] sm:$0xf]
        %v2305 = vld [vmem:[#allocation2 + $0xc] sm:$0xff]
        %v2306 = vld [vmem:[#allocation2 + $0x14] sm:$0xf]
        %v2307 = vld [vmem:[#allocation2 + $0x18] sm:$0xff]
        %v2308 = vld [vmem:[#allocation2 + $0x20] sm:$0xf]
        %v2309 = vld [vmem:[#allocation2 + $0x24] sm:$0xff]
        %v2310 = vld [vmem:[#allocation2 + $0x2c] sm:$0xf]
        %v2311 = vld [vmem:[#allocation2 + $0x30] sm:$0xff]
        %v2312 = vld [vmem:[#allocation2 + $0x38] sm:$0xf]
        %v2313 = vld [vmem:[#allocation2 + $0x3c] sm:$0xff]
        %v2314 = vld [vmem:[#allocation2 + $0x44] sm:$0xf]
        %v2315 = vld [vmem:[#allocation2 + $0x48] sm:$0xff]
        %v2316 = vld [vmem:[#allocation2 + $0x50] sm:$0xf]
        %v2317 = vld [vmem:[#allocation2 + $0x54] sm:$0xff]
        %v2318 = vld [vmem:[#allocation2 + $0x5c] sm:$0xf]
        %v2319 = vld [vmem:[#allocation2 + $0x60] sm:$0xff]
        %v2320 = vld [vmem:[#allocation2 + $0x68] sm:$0xf]
        %v2321 = vld [vmem:[#allocation2 + $0x6c] sm:$0xff]
        %v2322 = vld [vmem:[#allocation2 + $0x74] sm:$0xf]
        %v2323 = vld [vmem:[#allocation2 + $0x78] sm:$0xff]
        %v2324 = vld [vmem:[#allocation2 + $0x80] sm:$0xf]
        %v2325 = vld [vmem:[#allocation2 + $0x84] sm:$0xff]
        %v2326 = vld [vmem:[#allocation2 + $0x8c] sm:$0xf]
        %v2327 = vld [vmem:[#allocation2 + $0x90] sm:$0xff]
        %v2328 = vld [vmem:[#allocation2 + $0x98] sm:$0xf]
        %v2329 = vld [vmem:[#allocation2 + $0x9c] sm:$0xff]
        %v2330 = vld [vmem:[#allocation2 + $0xa4] sm:$0xf]
        %v2331 = vld [vmem:[#allocation2 + $0xa8] sm:$0xff]
        %v2332 = vld [vmem:[#allocation2 + $0xb0] sm:$0xf]
        %v2333 = vld [vmem:[#allocation2 + $0xb4] sm:$0xff]
        %v2334 = vld [vmem:[#allocation2 + $0xbc] sm:$0xf]
        %v2335 = vld [vmem:[#allocation2 + $0xc0] sm:$0xff]
        %v2336 = vld [vmem:[#allocation2 + $0xc8] sm:$0xf]
        %v2337 = vld [vmem:[#allocation2 + $0xcc] sm:$0xff]
        %v2338 = vld [vmem:[#allocation2 + $0xd4] sm:$0xf]
        %v2339 = vld [vmem:[#allocation2 + $0xd8] sm:$0xff]
        %v2340 = vld [vmem:[#allocation2 + $0xe0] sm:$0xf]
        %v2341 = vld [vmem:[#allocation2 + $0xe4] sm:$0xff]
        %v2342 = vld [vmem:[#allocation2 + $0xec] sm:$0xf]
        %v2343 = vld [vmem:[#allocation2 + $0xf0] sm:$0xff]
        %v2344 = vld [vmem:[#allocation2 + $0xf8] sm:$0xf]
        %v2345 = vld [vmem:[#allocation2 + $0xfc] sm:$0xff]
        %v2346 = vld [vmem:[#allocation2 + $0x104] sm:$0xf]
        %v2347 = vld [vmem:[#allocation2 + $0x108] sm:$0xff]
        %v2348 = vld [vmem:[#allocation2 + $0x110] sm:$0xf]
        %v2349 = vld [vmem:[#allocation2 + $0x114] sm:$0xff]
        %v2350 = vld [vmem:[#allocation2 + $0x11c] sm:$0xf]
        %v2351 = vld [vmem:[#allocation2 + $0x120] sm:$0xff]
        %v2352 = vld [vmem:[#allocation2 + $0x128] sm:$0xf]
        %v2353 = vld [vmem:[#allocation2 + $0x12c] sm:$0xff]
        %v2354 = vld [vmem:[#allocation2 + $0x134] sm:$0xf]
        %v2355 = vld [vmem:[#allocation2 + $0x138] sm:$0xff]
        %v2356 = vld [vmem:[#allocation2 + $0x140] sm:$0xf]
        %v2357 = vld [vmem:[#allocation2 + $0x144] sm:$0xff]
        %v2358 = vld [vmem:[#allocation2 + $0x14c] sm:$0xf]
        %v2359 = vld [vmem:[#allocation2 + $0x150] sm:$0xff]
        %v2360 = vld [vmem:[#allocation2 + $0x158] sm:$0xf]
        %v2361 = vld [vmem:[#allocation2 + $0x15c] sm:$0xff]
        %v2362 = vld [vmem:[#allocation2 + $0x164] sm:$0xf]
        %v2363 = vld [vmem:[#allocation2 + $0x168] sm:$0xff]
        %v2364 = vld [vmem:[#allocation2 + $0x170] sm:$0xf]
        %v2365 = vld [vmem:[#allocation2 + $0x174] sm:$0xff]
        %v2366 = vld [vmem:[#allocation2 + $0x17c] sm:$0xf]
        %v2367 = vld [vmem:[#allocation8] sm:$0xf]
        %v2368 = vld [vmem:[#allocation8 + $0x4] sm:$0xf]
        %v2369 = vld [vmem:[#allocation8 + $0x8] sm:$0xf]
        %v2370 = vld [vmem:[#allocation8 + $0xc] sm:$0xf]
        %v2371 = vld [vmem:[#allocation8 + $0x10] sm:$0xf]
        %v2372 = vld [vmem:[#allocation8 + $0x14] sm:$0xf]
        %v2373 = vld [vmem:[#allocation8 + $0x18] sm:$0xf]
        %v2374 = vld [vmem:[#allocation8 + $0x1c] sm:$0xf]
        %v2375 = vld [vmem:[#allocation8 + $0x20] sm:$0xf]
        %v2376 = vld [vmem:[#allocation8 + $0x24] sm:$0xf]
        %v2377 = vld [vmem:[#allocation8 + $0x28] sm:$0xf]
        %v2378 = vld [vmem:[#allocation8 + $0x2c] sm:$0xf]
        %v2379 = vld [vmem:[#allocation8 + $0x30] sm:$0xf]
        %v2380 = vld [vmem:[#allocation8 + $0x34] sm:$0xf]
        %v2381 = vld [vmem:[#allocation8 + $0x38] sm:$0xf]
        %v2382 = vld [vmem:[#allocation8 + $0x3c] sm:$0xf]
        %v2383 = vld [vmem:[#allocation8 + $0x40] sm:$0xf]
        %v2384 = vld [vmem:[#allocation8 + $0x44] sm:$0xf]
        %v2385 = vld [vmem:[#allocation8 + $0x48] sm:$0xf]
        %v2386 = vld [vmem:[#allocation8 + $0x4c] sm:$0xf]
        %v2387 = vld [vmem:[#allocation8 + $0x50] sm:$0xf]
        %v2388 = vld [vmem:[#allocation8 + $0x54] sm:$0xf]
        %v2389 = vld [vmem:[#allocation8 + $0x58] sm:$0xf]
        %v2390 = vld [vmem:[#allocation8 + $0x5c] sm:$0xf]
        %v2391 = vld [vmem:[#allocation8 + $0x60] sm:$0xf]
        %v2392 = vld [vmem:[#allocation8 + $0x64] sm:$0xf]
        %v2393 = vld [vmem:[#allocation8 + $0x68] sm:$0xf]
        %v2394 = vld [vmem:[#allocation8 + $0x6c] sm:$0xf]
        %v2395 = vld [vmem:[#allocation8 + $0x70] sm:$0xf]
        %v2396 = vld [vmem:[#allocation8 + $0x74] sm:$0xf]
        %v2397 = vld [vmem:[#allocation8 + $0x78] sm:$0xf]
        %v2398 = vld [vmem:[#allocation8 + $0x7c] sm:$0xf]
        %v2399 = vld [vmem:[#allocation8 + $0x80] sm:$0xf]
        %v2400 = vld [vmem:[#allocation8 + $0x84] sm:$0xf]
        %v2401 = vld [vmem:[#allocation8 + $0x88] sm:$0xf]
        %v2402 = vld [vmem:[#allocation8 + $0x8c] sm:$0xf]
        %v2403 = vld [vmem:[#allocation8 + $0x90] sm:$0xf]
        %v2404 = vld [vmem:[#allocation8 + $0x94] sm:$0xf]
        %v2405 = vld [vmem:[#allocation8 + $0x98] sm:$0xf]
        %v2406 = vld [vmem:[#allocation8 + $0x9c] sm:$0xf]
        %v2407 = vld [vmem:[#allocation8 + $0xa0] sm:$0xf]
        %v2408 = vld [vmem:[#allocation8 + $0xa4] sm:$0xf]
        %v2409 = vld [vmem:[#allocation8 + $0xa8] sm:$0xf]
        %v2410 = vld [vmem:[#allocation8 + $0xac] sm:$0xf]
        %v2411 = vld [vmem:[#allocation8 + $0xb0] sm:$0xf]
        %v2412 = vld [vmem:[#allocation8 + $0xb4] sm:$0xf]
        %v2413 = vld [vmem:[#allocation8 + $0xb8] sm:$0xf]
        %v2414 = vld [vmem:[#allocation8 + $0xbc] sm:$0xf]
        %v2415 = vld [vmem:[#allocation2 + $0x180] sm:$0xff]
        %v2416 = vld [vmem:[#allocation2 + $0x188] sm:$0xf]
        %v2417 = vld [vmem:[#allocation2 + $0x18c] sm:$0xff]
        %v2418 = vld [vmem:[#allocation2 + $0x194] sm:$0xf]
        %s2419 = scalar_lea.vmem [#allocation8], 192
        %v2420 = vld [vmem:[%s2419] sm:$0xf]
        %v2421 = vld [vmem:[%s2419 + $0x4] sm:$0xf]
        %v2422 = vld [vmem:[%s2419 + $0x8] sm:$0xf]
        %v2423 = vld [vmem:[%s2419 + $0xc] sm:$0xf]
        %v2424 = vld [vmem:[%s2419 + $0x10] sm:$0xf]
        %v2425 = vld [vmem:[%s2419 + $0x14] sm:$0xf]
        %v2426 = vld [vmem:[%s2419 + $0x18] sm:$0xf]
        %v2427 = vld [vmem:[%s2419 + $0x1c] sm:$0xf]
        %v2428 = vld [vmem:[%s2419 + $0x20] sm:$0xf]
        %v2429 = vld [vmem:[%s2419 + $0x24] sm:$0xf]
        %v2430 = vld [vmem:[%s2419 + $0x28] sm:$0xf]
        %v2431 = vld [vmem:[%s2419 + $0x2c] sm:$0xf]
        %v2432 = vld [vmem:[%s2419 + $0x30] sm:$0xf]
        %v2433 = vld [vmem:[%s2419 + $0x34] sm:$0xf]
        %v2434 = vld [vmem:[%s2419 + $0x38] sm:$0xf]
        %v2435 = vld [vmem:[%s2419 + $0x3c] sm:$0xf]
        %v2436 = vld [vmem:[%s2419 + $0x40] sm:$0xf]
        %v2437 = vld [vmem:[%s2419 + $0x44] sm:$0xf]
        %v2438 = vld [vmem:[%s2419 + $0x48] sm:$0xf]
        %v2439 = vld [vmem:[%s2419 + $0x4c] sm:$0xf]
        %v2440 = vld [vmem:[%s2419 + $0x50] sm:$0xf]
        %v2441 = vld [vmem:[%s2419 + $0x54] sm:$0xf]
        %v2442 = vld [vmem:[%s2419 + $0x58] sm:$0xf]
        %v2443 = vld [vmem:[%s2419 + $0x5c] sm:$0xf]
        %v2444 = vld [vmem:[%s2419 + $0x60] sm:$0xf]
        %v2445 = vld [vmem:[%s2419 + $0x64] sm:$0xf]
        %v2446 = vld [vmem:[%s2419 + $0x68] sm:$0xf]
        %v2447 = vld [vmem:[%s2419 + $0x6c] sm:$0xf]
        %v2448 = vld [vmem:[%s2419 + $0x70] sm:$0xf]
        %v2449 = vld [vmem:[%s2419 + $0x74] sm:$0xf]
        %v2450 = vld [vmem:[%s2419 + $0x78] sm:$0xf]
        %v2451 = vld [vmem:[%s2419 + $0x7c] sm:$0xf]
        %v2452 = vld [vmem:[%s2419 + $0x80] sm:$0xf]
        %v2453 = vld [vmem:[%s2419 + $0x84] sm:$0xf]
        %v2454 = vld [vmem:[%s2419 + $0x88] sm:$0xf]
        %v2455 = vld [vmem:[%s2419 + $0x8c] sm:$0xf]
        %v2456 = vld [vmem:[%s2419 + $0x90] sm:$0xf]
        %v2457 = vld [vmem:[%s2419 + $0x94] sm:$0xf]
        %v2458 = vld [vmem:[%s2419 + $0x98] sm:$0xf]
        %v2459 = vld [vmem:[%s2419 + $0x9c] sm:$0xf]
        %v2460 = vld [vmem:[%s2419 + $0xa0] sm:$0xf]
        %v2461 = vld [vmem:[%s2419 + $0xa4] sm:$0xf]
        %v2462 = vld [vmem:[%s2419 + $0xa8] sm:$0xf]
        %v2463 = vld [vmem:[%s2419 + $0xac] sm:$0xf]
        %v2464 = vld [vmem:[%s2419 + $0xb0] sm:$0xf]
        %v2465 = vld [vmem:[%s2419 + $0xb4] sm:$0xf]
        %v2466 = vld [vmem:[%s2419 + $0xb8] sm:$0xf]
        %v2467 = vld [vmem:[%s2419 + $0xbc] sm:$0xf]
        %v2532 = vunpack.c.l.b16 %v2307
        %v2533 = vunpack.c.h.b16 %v2307
        %v2534 = vunpack.c.l.b16 %v2308
        %v2535 = vunpack.c.l.b16 %v2309
        %v2536 = vunpack.c.h.b16 %v2309
        %v2537 = vunpack.c.l.b16 %v2310
        %v2538 = vunpack.c.l.b16 %v2311
        %v2539 = vunpack.c.h.b16 %v2311
        %v2540 = vunpack.c.l.b16 %v2312
        %v2541 = vunpack.c.l.b16 %v2313
        %v2542 = vunpack.c.h.b16 %v2313
        %v2543 = vunpack.c.l.b16 %v2314
        %v2544 = vunpack.c.l.b16 %v2315
        %v2545 = vunpack.c.h.b16 %v2315
        %v2546 = vunpack.c.l.b16 %v2316
        %v2547 = vunpack.c.l.b16 %v2317
        %v2548 = vunpack.c.h.b16 %v2317
        %v2549 = vunpack.c.l.b16 %v2318
        %v2550 = vunpack.c.l.b16 %v2319
        %v2551 = vunpack.c.h.b16 %v2319
        %v2552 = vunpack.c.l.b16 %v2320
        %v2553 = vunpack.c.l.b16 %v2321
        %v2554 = vunpack.c.h.b16 %v2321
        %v2555 = vunpack.c.l.b16 %v2322
        %v2556 = vunpack.c.l.b16 %v2323
        %v2557 = vunpack.c.h.b16 %v2323
        %v2558 = vunpack.c.l.b16 %v2324
        %v2559 = vunpack.c.l.b16 %v2325
        %v2560 = vunpack.c.h.b16 %v2325
        %v2561 = vunpack.c.l.b16 %v2326
        %v2562 = vunpack.c.l.b16 %v2327
        %v2563 = vunpack.c.h.b16 %v2327
        %v2564 = vunpack.c.l.b16 %v2328
        %v2565 = vunpack.c.l.b16 %v2329
        %v2566 = vunpack.c.h.b16 %v2329
        %v2567 = vunpack.c.l.b16 %v2330
        %v2568 = vunpack.c.l.b16 %v2331
        %v2569 = vunpack.c.h.b16 %v2331
        %v2570 = vunpack.c.l.b16 %v2332
        %v2571 = vunpack.c.l.b16 %v2333
        %v2572 = vunpack.c.h.b16 %v2333
        %v2573 = vunpack.c.l.b16 %v2334
        %v2574 = vunpack.c.l.b16 %v2335
        %v2575 = vunpack.c.h.b16 %v2335
        %v2576 = vunpack.c.l.b16 %v2336
        %v2577 = vunpack.c.l.b16 %v2337
        %v2578 = vunpack.c.h.b16 %v2337
        %v2579 = vunpack.c.l.b16 %v2338
        %v2580 = vunpack.c.l.b16 %v2339
        %v2581 = vunpack.c.h.b16 %v2339
        %v2582 = vunpack.c.l.b16 %v2340
        %v2583 = vunpack.c.l.b16 %v2341
        %v2584 = vunpack.c.h.b16 %v2341
        %v2585 = vunpack.c.l.b16 %v2342
        %v2586 = vunpack.c.l.b16 %v2343
        %v2587 = vunpack.c.h.b16 %v2343
        %v2588 = vunpack.c.l.b16 %v2344
        %v2589 = vunpack.c.l.b16 %v2345
        %v2590 = vunpack.c.h.b16 %v2345
        %v2591 = vunpack.c.l.b16 %v2346
        %v2592 = vunpack.c.l.b16 %v2347
        %v2593 = vunpack.c.h.b16 %v2347
        %v2594 = vunpack.c.l.b16 %v2348
        %v2595 = vunpack.c.l.b16 %v2349
        %v2596 = vunpack.c.h.b16 %v2349
        %v2597 = vunpack.c.l.b16 %v2350
        %v2598 = vunpack.c.l.b16 %v2351
        %v2599 = vunpack.c.h.b16 %v2351
        %v2600 = vunpack.c.l.b16 %v2352
        %v2601 = vunpack.c.l.b16 %v2353
        %v2602 = vunpack.c.h.b16 %v2353
        %v2603 = vunpack.c.l.b16 %v2354
        %v2604 = vunpack.c.l.b16 %v2355
        %v2605 = vunpack.c.h.b16 %v2355
        %v2606 = vunpack.c.l.b16 %v2356
        %v2607 = vunpack.c.l.b16 %v2357
        %v2608 = vunpack.c.h.b16 %v2357
        %v2609 = vunpack.c.l.b16 %v2358
        %v2610 = vunpack.c.l.b16 %v2359
        %v2611 = vunpack.c.h.b16 %v2359
        %v2612 = vunpack.c.l.b16 %v2360
        %v2613 = vunpack.c.l.b16 %v2361
        %v2614 = vunpack.c.h.b16 %v2361
        %v2615 = vunpack.c.l.b16 %v2362
        %v2616 = vunpack.c.l.b16 %v2363
        %v2617 = vunpack.c.h.b16 %v2363
        %v2618 = vunpack.c.l.b16 %v2364
        %v2619 = vunpack.c.l.b16 %v2365
        %v2620 = vunpack.c.h.b16 %v2365
        %v2621 = vunpack.c.l.b16 %v2366
        %v2622 = vunpack.c.l.b16 %v2415
        %v2623 = vunpack.c.h.b16 %v2415
        %v2624 = vunpack.c.l.b16 %v2416
        %v2625 = vunpack.c.l.b16 %v2417
        %v2626 = vunpack.c.h.b16 %v2417
        %v2627 = vunpack.c.l.b16 %v2418
        %v2628 = vpack.c.b16 %v2535, %v2532
        %v2629 = vpack.c.b16 %v2536, %v2533
        %v2630 = vpack.c.b16 %v2537, %v2534
        %v2631 = vpack.c.b16 %v2541, %v2538
        %v2632 = vpack.c.b16 %v2542, %v2539
        %v2633 = vpack.c.b16 %v2543, %v2540
        %v2634 = vpack.c.b16 %v2547, %v2544
        %v2635 = vpack.c.b16 %v2548, %v2545
        %v2636 = vpack.c.b16 %v2549, %v2546
        %v2637 = vpack.c.b16 %v2553, %v2550
        %v2638 = vpack.c.b16 %v2554, %v2551
        %v2639 = vpack.c.b16 %v2555, %v2552
        %v2640 = vpack.c.b16 %v2559, %v2556
        %v2641 = vpack.c.b16 %v2560, %v2557
        %v2642 = vpack.c.b16 %v2561, %v2558
        %v2643 = vpack.c.b16 %v2565, %v2562
        %v2644 = vpack.c.b16 %v2566, %v2563
        %v2645 = vpack.c.b16 %v2567, %v2564
        %v2646 = vpack.c.b16 %v2571, %v2568
        %v2647 = vpack.c.b16 %v2572, %v2569
        %v2648 = vpack.c.b16 %v2573, %v2570
        %v2649 = vpack.c.b16 %v2577, %v2574
        %v2650 = vpack.c.b16 %v2578, %v2575
        %v2651 = vpack.c.b16 %v2579, %v2576
        %v2652 = vpack.c.b16 %v2583, %v2580
        %v2653 = vpack.c.b16 %v2584, %v2581
        %v2654 = vpack.c.b16 %v2585, %v2582
        %v2655 = vpack.c.b16 %v2589, %v2586
        %v2656 = vpack.c.b16 %v2590, %v2587
        %v2657 = vpack.c.b16 %v2591, %v2588
        %v2658 = vpack.c.b16 %v2595, %v2592
        %v2659 = vpack.c.b16 %v2596, %v2593
        %v2660 = vpack.c.b16 %v2597, %v2594
        %v2661 = vpack.c.b16 %v2601, %v2598
        %v2662 = vpack.c.b16 %v2602, %v2599
        %v2663 = vpack.c.b16 %v2603, %v2600
        %v2664 = vpack.c.b16 %v2607, %v2604
        %v2665 = vpack.c.b16 %v2608, %v2605
        %v2666 = vpack.c.b16 %v2609, %v2606
        %v2667 = vpack.c.b16 %v2613, %v2610
        %v2668 = vpack.c.b16 %v2614, %v2611
        %v2669 = vpack.c.b16 %v2615, %v2612
        %v2670 = vpack.c.b16 %v2619, %v2616
        %v2671 = vpack.c.b16 %v2620, %v2617
        %v2672 = vpack.c.b16 %v2621, %v2618
        %v2673 = vpack.c.b16 %v2625, %v2622
        %v2674 = vpack.c.b16 %v2626, %v2623
        %v2675 = vpack.c.b16 %v2627, %v2624
        %v2772 = vunpack.c.l.b16 %v2420
        %v2773 = vunpack.c.l.b16 %v2421
        %v2774 = vunpack.c.l.b16 %v2422
        %v2775 = vunpack.c.l.b16 %v2423
        %v2776 = vunpack.c.l.b16 %v2424
        %v2777 = vunpack.c.l.b16 %v2425
        %v2778 = vunpack.c.l.b16 %v2426
        %v2779 = vunpack.c.l.b16 %v2427
        %v2780 = vunpack.c.l.b16 %v2428
        %v2781 = vunpack.c.l.b16 %v2429
        %v2782 = vunpack.c.l.b16 %v2430
        %v2783 = vunpack.c.l.b16 %v2431
        %v2784 = vunpack.c.l.b16 %v2432
        %v2785 = vunpack.c.l.b16 %v2433
        %v2786 = vunpack.c.l.b16 %v2434
        %v2787 = vunpack.c.l.b16 %v2435
        %v2788 = vunpack.c.l.b16 %v2436
        %v2789 = vunpack.c.l.b16 %v2437
        %v2790 = vunpack.c.l.b16 %v2438
        %v2791 = vunpack.c.l.b16 %v2439
        %v2792 = vunpack.c.l.b16 %v2440
        %v2793 = vunpack.c.l.b16 %v2441
        %v2794 = vunpack.c.l.b16 %v2442
        %v2795 = vunpack.c.l.b16 %v2443
        %v2796 = vunpack.c.l.b16 %v2444
        %v2797 = vunpack.c.l.b16 %v2445
        %v2798 = vunpack.c.l.b16 %v2446
        %v2799 = vunpack.c.l.b16 %v2447
        %v2800 = vunpack.c.l.b16 %v2448
        %v2801 = vunpack.c.l.b16 %v2449
        %v2802 = vunpack.c.l.b16 %v2450
        %v2803 = vunpack.c.l.b16 %v2451
        %v2804 = vunpack.c.l.b16 %v2452
        %v2805 = vunpack.c.l.b16 %v2453
        %v2806 = vunpack.c.l.b16 %v2454
        %v2807 = vunpack.c.l.b16 %v2455
        %v2808 = vunpack.c.l.b16 %v2456
        %v2809 = vunpack.c.l.b16 %v2457
        %v2810 = vunpack.c.l.b16 %v2458
        %v2811 = vunpack.c.l.b16 %v2459
        %v2812 = vunpack.c.l.b16 %v2460
        %v2813 = vunpack.c.l.b16 %v2461
        %v2814 = vunpack.c.l.b16 %v2462
        %v2815 = vunpack.c.l.b16 %v2463
        %v2816 = vunpack.c.l.b16 %v2464
        %v2817 = vunpack.c.l.b16 %v2465
        %v2818 = vunpack.c.l.b16 %v2466
        %v2819 = vunpack.c.l.b16 %v2467
        %v2820 = vpack.c.b16 %v2773, %v2772
        %v2821 = vpack.c.b16 %v2775, %v2774
        %v2822 = vpack.c.b16 %v2777, %v2776
        %v2823 = vpack.c.b16 %v2779, %v2778
        %v2824 = vpack.c.b16 %v2781, %v2780
        %v2825 = vpack.c.b16 %v2783, %v2782
        %v2826 = vpack.c.b16 %v2785, %v2784
        %v2827 = vpack.c.b16 %v2787, %v2786
        %v2828 = vpack.c.b16 %v2789, %v2788
        %v2829 = vpack.c.b16 %v2791, %v2790
        %v2830 = vpack.c.b16 %v2793, %v2792
        %v2831 = vpack.c.b16 %v2795, %v2794
        %v2832 = vpack.c.b16 %v2797, %v2796
        %v2833 = vpack.c.b16 %v2799, %v2798
        %v2834 = vpack.c.b16 %v2801, %v2800
        %v2835 = vpack.c.b16 %v2803, %v2802
        %v2836 = vpack.c.b16 %v2805, %v2804
        %v2837 = vpack.c.b16 %v2807, %v2806
        %v2838 = vpack.c.b16 %v2809, %v2808
        %v2839 = vpack.c.b16 %v2811, %v2810
        %v2840 = vpack.c.b16 %v2813, %v2812
        %v2841 = vpack.c.b16 %v2815, %v2814
        %v2842 = vpack.c.b16 %v2817, %v2816
        %v2843 = vpack.c.b16 %v2819, %v2818
        %2868 = vmatprep.subr.bf16.mxu0 0
        %2869 = vmatpush1.bf16.msra.mxu0 %v2827
        %2870 = vmatprep.subr.bf16.mxu0 0
        %2871 = vmatpush1.bf16.msra.mxu0 %v2826
        %2872 = vmatprep.subr.bf16.mxu0 0
        %2873 = vmatpush1.bf16.msra.mxu0 %v2825
        %2874 = vmatprep.subr.bf16.mxu0 0
        %2875 = vmatpush1.bf16.msra.mxu0 %v2824
        %2876 = vmatprep.subr.bf16.mxu0 0
        %2877 = vmatpush1.bf16.msra.mxu0 %v2823
        %2878 = vmatprep.subr.bf16.mxu0 0
        %2879 = vmatpush1.bf16.msra.mxu0 %v2822
        %2880 = vmatprep.subr.bf16.mxu0 0
        %2881 = vmatpush1.bf16.msra.mxu0 %v2821
        %2882 = vmatprep.subr.bf16.mxu0 0
        %2883 = vmatpush1.bf16.msra.mxu0 %v2820
        %2884 = vmatprep.subr.bf16.mxu0 0
        %2885 = vmatpush2.bf16.msra.mxu0 %v2835
        %2886 = vmatprep.subr.bf16.mxu0 0
        %2887 = vmatpush2.bf16.msra.mxu0 %v2834
        %2888 = vmatprep.subr.bf16.mxu0 0
        %2889 = vmatpush2.bf16.msra.mxu0 %v2833
        %2890 = vmatprep.subr.bf16.mxu0 0
        %2891 = vmatpush2.bf16.msra.mxu0 %v2832
        %2892 = vmatprep.subr.bf16.mxu0 0
        %2893 = vmatpush2.bf16.msra.mxu0 %v2831
        %2894 = vmatprep.subr.bf16.mxu0 0
        %2895 = vmatpush2.bf16.msra.mxu0 %v2830
        %2896 = vmatprep.subr.bf16.mxu0 0
        %2897 = vmatpush2.bf16.msra.mxu0 %v2829
        %2898 = vmatprep.subr.bf16.mxu0 0
        %2899 = vmatpush2.bf16.msra.mxu0 %v2828
        %2900 = vmatprep.mubr.bf16.mxu0 %v2629
        %2901 = vmatmul.mubr.bf16.gmra.mxu0 %v2628
        %v2902 = vpop.f32.mrf.mxu0
        %v2903 = vadd.f32 0.0, %v2902
        %v2904 = vpop.f32.mrf.mxu0
        %v2905 = vpop.f32.mrf.mxu0
        %v2906 = vadd.f32 0.0, %v2905
        %v2907 = vpop.f32.mrf.mxu0
        %2908 = vmatprep.mubr.bf16.mxu0 %v2632
        %2909 = vmatmul.mubr.bf16.gmra.mxu0 %v2631
        %v2910 = vpop.f32.mrf.mxu0
        %v2911 = vadd.f32 0.0, %v2910
        %v2912 = vpop.f32.mrf.mxu0
        %v2913 = vpop.f32.mrf.mxu0
        %v2914 = vadd.f32 0.0, %v2913
        %v2915 = vpop.f32.mrf.mxu0
        %2916 = vmatprep.mubr.bf16.mxu0 %v2635
        %2917 = vmatmul.mubr.bf16.gmra.mxu0 %v2634
        %v2918 = vpop.f32.mrf.mxu0
        %v2919 = vadd.f32 0.0, %v2918
        %v2920 = vpop.f32.mrf.mxu0
        %v2921 = vpop.f32.mrf.mxu0
        %v2922 = vadd.f32 0.0, %v2921
        %v2923 = vpop.f32.mrf.mxu0
        %2924 = vmatprep.mubr.bf16.mxu0 %v2638
        %2925 = vmatmul.mubr.bf16.gmra.mxu0 %v2637
        %v2926 = vpop.f32.mrf.mxu0
        %v2927 = vadd.f32 0.0, %v2926
        %v2928 = vpop.f32.mrf.mxu0
        %v2929 = vpop.f32.mrf.mxu0
        %v2930 = vadd.f32 0.0, %v2929
        %v2931 = vpop.f32.mrf.mxu0
        %2932 = vmatprep.mubr.bf16.mxu0 %v2641
        %2933 = vmatmul.mubr.bf16.gmra.mxu0 %v2640
        %v2934 = vpop.f32.mrf.mxu0
        %v2935 = vadd.f32 0.0, %v2934
        %v2936 = vpop.f32.mrf.mxu0
        %v2937 = vpop.f32.mrf.mxu0
        %v2938 = vadd.f32 0.0, %v2937
        %v2939 = vpop.f32.mrf.mxu0
        %2940 = vmatprep.mubr.bf16.mxu0 %v2644
        %2941 = vmatmul.mubr.bf16.gmra.mxu0 %v2643
        %v2942 = vpop.f32.mrf.mxu0
        %v2943 = vadd.f32 0.0, %v2942
        %v2944 = vpop.f32.mrf.mxu0
        %v2945 = vpop.f32.mrf.mxu0
        %v2946 = vadd.f32 0.0, %v2945
        %v2947 = vpop.f32.mrf.mxu0
        %2948 = vmatprep.mubr.bf16.mxu0 %v2647
        %2949 = vmatmul.mubr.bf16.gmra.mxu0 %v2646
        %v2950 = vpop.f32.mrf.mxu0
        %v2951 = vadd.f32 0.0, %v2950
        %v2952 = vpop.f32.mrf.mxu0
        %v2953 = vpop.f32.mrf.mxu0
        %v2954 = vadd.f32 0.0, %v2953
        %v2955 = vpop.f32.mrf.mxu0
        %2956 = vmatprep.mubr.bf16.mxu0 %v2650
        %2957 = vmatmul.mubr.bf16.gmra.mxu0 %v2649
        %v2958 = vpop.f32.mrf.mxu0
        %v2959 = vadd.f32 0.0, %v2958
        %v2960 = vpop.f32.mrf.mxu0
        %v2961 = vpop.f32.mrf.mxu0
        %v2962 = vadd.f32 0.0, %v2961
        %v2963 = vpop.f32.mrf.mxu0
        %2964 = vmatprep.mubr.bf16.mxu0 %v2653
        %2965 = vmatmul.mubr.bf16.gmra.mxu0 %v2652
        %v2966 = vpop.f32.mrf.mxu0
        %v2967 = vadd.f32 0.0, %v2966
        %v2968 = vpop.f32.mrf.mxu0
        %v2969 = vpop.f32.mrf.mxu0
        %v2970 = vadd.f32 0.0, %v2969
        %v2971 = vpop.f32.mrf.mxu0
        %2972 = vmatprep.mubr.bf16.mxu0 %v2656
        %2973 = vmatmul.mubr.bf16.gmra.mxu0 %v2655
        %v2974 = vpop.f32.mrf.mxu0
        %v2975 = vadd.f32 0.0, %v2974
        %v2976 = vpop.f32.mrf.mxu0
        %v2977 = vpop.f32.mrf.mxu0
        %v2978 = vadd.f32 0.0, %v2977
        %v2979 = vpop.f32.mrf.mxu0
        %2980 = vmatprep.mubr.bf16.mxu0 %v2659
        %2981 = vmatmul.mubr.bf16.gmra.mxu0 %v2658
        %v2982 = vpop.f32.mrf.mxu0
        %v2983 = vadd.f32 0.0, %v2982
        %v2984 = vpop.f32.mrf.mxu0
        %v2985 = vpop.f32.mrf.mxu0
        %v2986 = vadd.f32 0.0, %v2985
        %v2987 = vpop.f32.mrf.mxu0
        %2988 = vmatprep.mubr.bf16.mxu0 %v2662
        %2989 = vmatmul.mubr.bf16.gmra.mxu0 %v2661
        %v2990 = vpop.f32.mrf.mxu0
        %v2991 = vadd.f32 0.0, %v2990
        %v2992 = vpop.f32.mrf.mxu0
        %v2993 = vpop.f32.mrf.mxu0
        %v2994 = vadd.f32 0.0, %v2993
        %v2995 = vpop.f32.mrf.mxu0
        %2996 = vmatprep.mubr.bf16.mxu0 %v2665
        %2997 = vmatmul.mubr.bf16.gmra.mxu0 %v2664
        %v2998 = vpop.f32.mrf.mxu0
        %v2999 = vadd.f32 0.0, %v2998
        %v3000 = vpop.f32.mrf.mxu0
        %v3001 = vpop.f32.mrf.mxu0
        %v3002 = vadd.f32 0.0, %v3001
        %v3003 = vpop.f32.mrf.mxu0
        %3004 = vmatprep.mubr.bf16.mxu0 %v2668
        %3005 = vmatmul.mubr.bf16.gmra.mxu0 %v2667
        %v3006 = vpop.f32.mrf.mxu0
        %v3007 = vadd.f32 0.0, %v3006
        %v3008 = vpop.f32.mrf.mxu0
        %v3009 = vpop.f32.mrf.mxu0
        %v3010 = vadd.f32 0.0, %v3009
        %v3011 = vpop.f32.mrf.mxu0
        %3012 = vmatprep.mubr.bf16.mxu0 %v2671
        %3013 = vmatmul.mubr.bf16.gmra.mxu0 %v2670
        %v3014 = vpop.f32.mrf.mxu0
        %v3015 = vadd.f32 0.0, %v3014
        %v3016 = vpop.f32.mrf.mxu0
        %v3017 = vpop.f32.mrf.mxu0
        %v3018 = vadd.f32 0.0, %v3017
        %v3019 = vpop.f32.mrf.mxu0
        %3020 = vmatprep.mubr.bf16.mxu0 %v2674
        %3021 = vmatmul.mubr.bf16.gmra.mxu0 %v2673
        %v3022 = vpop.f32.mrf.mxu0
        %v3023 = vadd.f32 0.0, %v3022
        %v3024 = vpop.f32.mrf.mxu0
        %v3025 = vpop.f32.mrf.mxu0
        %v3026 = vadd.f32 0.0, %v3025
        %v3027 = vpop.f32.mrf.mxu0
        %3028 = vdwg.mxu0
        %3029 = vmatprep.subr.bf16.mxu0 0
        %3030 = vmatpush1.bf16.msra.mxu0 %v2843
        %3031 = vmatprep.subr.bf16.mxu0 0
        %3032 = vmatpush1.bf16.msra.mxu0 %v2842
        %3033 = vmatprep.subr.bf16.mxu0 0
        %3034 = vmatpush1.bf16.msra.mxu0 %v2841
        %3035 = vmatprep.subr.bf16.mxu0 0
        %3036 = vmatpush1.bf16.msra.mxu0 %v2840
        %3037 = vmatprep.subr.bf16.mxu0 0
        %3038 = vmatpush1.bf16.msra.mxu0 %v2839
        %3039 = vmatprep.subr.bf16.mxu0 0
        %3040 = vmatpush1.bf16.msra.mxu0 %v2838
        %3041 = vmatprep.subr.bf16.mxu0 0
        %3042 = vmatpush1.bf16.msra.mxu0 %v2837
        %3043 = vmatprep.subr.bf16.mxu0 0
        %3044 = vmatpush1.bf16.msra.mxu0 %v2836
        %3045 = vmatprep.subr.bf16.mxu0 0
        %3046 = vmatpush2.bf16.msra.mxu0 0
        %3047 = vmatprep.subr.bf16.mxu0 0
        %3048 = vmatpush2.bf16.msra.mxu0 0
        %3049 = vmatprep.subr.bf16.mxu0 0
        %3050 = vmatpush2.bf16.msra.mxu0 0
        %3051 = vmatprep.subr.bf16.mxu0 0
        %3052 = vmatpush2.bf16.msra.mxu0 0
        %3053 = vmatprep.subr.bf16.mxu0 0
        %3054 = vmatpush2.bf16.msra.mxu0 0
        %3055 = vmatprep.subr.bf16.mxu0 0
        %3056 = vmatpush2.bf16.msra.mxu0 0
        %3057 = vmatprep.subr.bf16.mxu0 0
        %3058 = vmatpush2.bf16.msra.mxu0 0
        %3059 = vmatprep.subr.bf16.mxu0 0
        %3060 = vmatpush2.bf16.msra.mxu0 0
        %3061 = vmatprep.mubr.bf16.mxu0 0
        %3062 = vmatmul.mubr.bf16.gmra.mxu0 %v2630
        %v3063 = vpop.f32.mrf.mxu0
        %v3064 = vadd.f32 %v2903, %v3063
        %v3065 = vpop.f32.mrf.mxu0
        %v3066 = vpop.f32.mrf.mxu0
        %v3067 = vadd.f32 %v2906, %v3066
        %v3068 = vpop.f32.mrf.mxu0
        %3069 = vmatprep.mubr.bf16.mxu0 0
        %3070 = vmatmul.mubr.bf16.gmra.mxu0 %v2633
        %v3071 = vpop.f32.mrf.mxu0
        %v3072 = vadd.f32 %v2911, %v3071
        %v3073 = vpop.f32.mrf.mxu0
        %v3074 = vpop.f32.mrf.mxu0
        %v3075 = vadd.f32 %v2914, %v3074
        %v3076 = vpop.f32.mrf.mxu0
        %3077 = vmatprep.mubr.bf16.mxu0 0
        %3078 = vmatmul.mubr.bf16.gmra.mxu0 %v2636
        %v3079 = vpop.f32.mrf.mxu0
        %v3080 = vadd.f32 %v2919, %v3079
        %v3081 = vpop.f32.mrf.mxu0
        %v3082 = vpop.f32.mrf.mxu0
        %v3083 = vadd.f32 %v2922, %v3082
        %v3084 = vpop.f32.mrf.mxu0
        %3085 = vmatprep.mubr.bf16.mxu0 0
        %3086 = vmatmul.mubr.bf16.gmra.mxu0 %v2639
        %v3087 = vpop.f32.mrf.mxu0
        %v3088 = vadd.f32 %v2927, %v3087
        %v3089 = vpop.f32.mrf.mxu0
        %v3090 = vpop.f32.mrf.mxu0
        %v3091 = vadd.f32 %v2930, %v3090
        %v3092 = vpop.f32.mrf.mxu0
        %3093 = vmatprep.mubr.bf16.mxu0 0
        %3094 = vmatmul.mubr.bf16.gmra.mxu0 %v2642
        %v3095 = vpop.f32.mrf.mxu0
        %v3096 = vadd.f32 %v2935, %v3095
        %v3097 = vpop.f32.mrf.mxu0
        %v3098 = vpop.f32.mrf.mxu0
        %v3099 = vadd.f32 %v2938, %v3098
        %v3100 = vpop.f32.mrf.mxu0
        %3101 = vmatprep.mubr.bf16.mxu0 0
        %3102 = vmatmul.mubr.bf16.gmra.mxu0 %v2645
        %v3103 = vpop.f32.mrf.mxu0
        %v3104 = vadd.f32 %v2943, %v3103
        %v3105 = vpop.f32.mrf.mxu0
        %v3106 = vpop.f32.mrf.mxu0
        %v3107 = vadd.f32 %v2946, %v3106
        %v3108 = vpop.f32.mrf.mxu0
        %3109 = vmatprep.mubr.bf16.mxu0 0
        %3110 = vmatmul.mubr.bf16.gmra.mxu0 %v2648
        %v3111 = vpop.f32.mrf.mxu0
        %v3112 = vadd.f32 %v2951, %v3111
        %v3113 = vpop.f32.mrf.mxu0
        %v3114 = vpop.f32.mrf.mxu0
        %v3115 = vadd.f32 %v2954, %v3114
        %v3116 = vpop.f32.mrf.mxu0
        %3117 = vmatprep.mubr.bf16.mxu0 0
        %3118 = vmatmul.mubr.bf16.gmra.mxu0 %v2651
        %v3119 = vpop.f32.mrf.mxu0
        %v3120 = vadd.f32 %v2959, %v3119
        %v3121 = vpop.f32.mrf.mxu0
        %v3122 = vpop.f32.mrf.mxu0
        %v3123 = vadd.f32 %v2962, %v3122
        %v3124 = vpop.f32.mrf.mxu0
        %3125 = vmatprep.mubr.bf16.mxu0 0
        %3126 = vmatmul.mubr.bf16.gmra.mxu0 %v2654
        %v3127 = vpop.f32.mrf.mxu0
        %v3128 = vadd.f32 %v2967, %v3127
        %v3129 = vpop.f32.mrf.mxu0
        %v3130 = vpop.f32.mrf.mxu0
        %v3131 = vadd.f32 %v2970, %v3130
        %v3132 = vpop.f32.mrf.mxu0
        %3133 = vmatprep.mubr.bf16.mxu0 0
        %3134 = vmatmul.mubr.bf16.gmra.mxu0 %v2657
        %v3135 = vpop.f32.mrf.mxu0
        %v3136 = vadd.f32 %v2975, %v3135
        %v3137 = vpop.f32.mrf.mxu0
        %v3138 = vpop.f32.mrf.mxu0
        %v3139 = vadd.f32 %v2978, %v3138
        %v3140 = vpop.f32.mrf.mxu0
        %3141 = vmatprep.mubr.bf16.mxu0 0
        %3142 = vmatmul.mubr.bf16.gmra.mxu0 %v2660
        %v3143 = vpop.f32.mrf.mxu0
        %v3144 = vadd.f32 %v2983, %v3143
        %v3145 = vpop.f32.mrf.mxu0
        %v3146 = vpop.f32.mrf.mxu0
        %v3147 = vadd.f32 %v2986, %v3146
        %v3148 = vpop.f32.mrf.mxu0
        %3149 = vmatprep.mubr.bf16.mxu0 0
        %3150 = vmatmul.mubr.bf16.gmra.mxu0 %v2663
        %v3151 = vpop.f32.mrf.mxu0
        %v3152 = vadd.f32 %v2991, %v3151
        %v3153 = vpop.f32.mrf.mxu0
        %v3154 = vpop.f32.mrf.mxu0
        %v3155 = vadd.f32 %v2994, %v3154
        %v3156 = vpop.f32.mrf.mxu0
        %3157 = vmatprep.mubr.bf16.mxu0 0
        %3158 = vmatmul.mubr.bf16.gmra.mxu0 %v2666
        %v3159 = vpop.f32.mrf.mxu0
        %v3160 = vadd.f32 %v2999, %v3159
        %v3161 = vpop.f32.mrf.mxu0
        %v3162 = vpop.f32.mrf.mxu0
        %v3163 = vadd.f32 %v3002, %v3162
        %v3164 = vpop.f32.mrf.mxu0
        %3165 = vmatprep.mubr.bf16.mxu0 0
        %3166 = vmatmul.mubr.bf16.gmra.mxu0 %v2669
        %v3167 = vpop.f32.mrf.mxu0
        %v3168 = vadd.f32 %v3007, %v3167
        %v3169 = vpop.f32.mrf.mxu0
        %v3170 = vpop.f32.mrf.mxu0
        %v3171 = vadd.f32 %v3010, %v3170
        %v3172 = vpop.f32.mrf.mxu0
        %3173 = vmatprep.mubr.bf16.mxu0 0
        %3174 = vmatmul.mubr.bf16.gmra.mxu0 %v2672
        %v3175 = vpop.f32.mrf.mxu0
        %v3176 = vadd.f32 %v3015, %v3175
        %v3177 = vpop.f32.mrf.mxu0
        %v3178 = vpop.f32.mrf.mxu0
        %v3179 = vadd.f32 %v3018, %v3178
        %v3180 = vpop.f32.mrf.mxu0
        %3181 = vmatprep.mubr.bf16.mxu0 0
        %3182 = vmatmul.mubr.bf16.gmra.mxu0 %v2675
        %v3183 = vpop.f32.mrf.mxu0
        %v3184 = vadd.f32 %v3023, %v3183
        %v3185 = vpop.f32.mrf.mxu0
        %v3186 = vpop.f32.mrf.mxu0
        %v3187 = vadd.f32 %v3026, %v3186
        %v3188 = vpop.f32.mrf.mxu0
        %3189 = vdwg.mxu0
        %v3194 = vunpack.c.l.b16 %v2303
        %v3195 = vunpack.c.h.b16 %v2303
        %v3196 = vunpack.c.l.b16 %v2304
        %v3197 = vunpack.c.l.b16 %v2305
        %v3198 = vunpack.c.h.b16 %v2305
        %v3199 = vunpack.c.l.b16 %v2306
        %v3200 = vpack.c.b16 %v3197, %v3194
        %v3201 = vpack.c.b16 %v3198, %v3195
        %v3202 = vpack.c.b16 %v3199, %v3196
        %v3254 = vunpack.c.l.b16 %v2367
        %v3255 = vunpack.c.l.b16 %v2368
        %v3256 = vunpack.c.l.b16 %v2369
        %v3257 = vunpack.c.l.b16 %v2370
        %v3258 = vunpack.c.l.b16 %v2371
        %v3259 = vunpack.c.l.b16 %v2372
        %v3260 = vunpack.c.l.b16 %v2373
        %v3261 = vunpack.c.l.b16 %v2374
        %v3262 = vunpack.c.l.b16 %v2375
        %v3263 = vunpack.c.l.b16 %v2376
        %v3264 = vunpack.c.l.b16 %v2377
        %v3265 = vunpack.c.l.b16 %v2378
        %v3266 = vunpack.c.l.b16 %v2379
        %v3267 = vunpack.c.l.b16 %v2380
        %v3268 = vunpack.c.l.b16 %v2381
        %v3269 = vunpack.c.l.b16 %v2382
        %v3270 = vunpack.c.l.b16 %v2383
        %v3271 = vunpack.c.l.b16 %v2384
        %v3272 = vunpack.c.l.b16 %v2385
        %v3273 = vunpack.c.l.b16 %v2386
        %v3274 = vunpack.c.l.b16 %v2387
        %v3275 = vunpack.c.l.b16 %v2388
        %v3276 = vunpack.c.l.b16 %v2389
        %v3277 = vunpack.c.l.b16 %v2390
        %v3278 = vunpack.c.l.b16 %v2391
        %v3279 = vunpack.c.l.b16 %v2392
        %v3280 = vunpack.c.l.b16 %v2393
        %v3281 = vunpack.c.l.b16 %v2394
        %v3282 = vunpack.c.l.b16 %v2395
        %v3283 = vunpack.c.l.b16 %v2396
        %v3284 = vunpack.c.l.b16 %v2397
        %v3285 = vunpack.c.l.b16 %v2398
        %v3286 = vunpack.c.l.b16 %v2399
        %v3287 = vunpack.c.l.b16 %v2400
        %v3288 = vunpack.c.l.b16 %v2401
        %v3289 = vunpack.c.l.b16 %v2402
        %v3290 = vunpack.c.l.b16 %v2403
        %v3291 = vunpack.c.l.b16 %v2404
        %v3292 = vunpack.c.l.b16 %v2405
        %v3293 = vunpack.c.l.b16 %v2406
        %v3294 = vunpack.c.l.b16 %v2407
        %v3295 = vunpack.c.l.b16 %v2408
        %v3296 = vunpack.c.l.b16 %v2409
        %v3297 = vunpack.c.l.b16 %v2410
        %v3298 = vunpack.c.l.b16 %v2411
        %v3299 = vunpack.c.l.b16 %v2412
        %v3300 = vunpack.c.l.b16 %v2413
        %v3301 = vunpack.c.l.b16 %v2414
        %v3302 = vpack.c.b16 %v3255, %v3254
        %v3303 = vpack.c.b16 %v3257, %v3256
        %v3304 = vpack.c.b16 %v3259, %v3258
        %v3305 = vpack.c.b16 %v3261, %v3260
        %v3306 = vpack.c.b16 %v3263, %v3262
        %v3307 = vpack.c.b16 %v3265, %v3264
        %v3308 = vpack.c.b16 %v3267, %v3266
        %v3309 = vpack.c.b16 %v3269, %v3268
        %v3310 = vpack.c.b16 %v3271, %v3270
        %v3311 = vpack.c.b16 %v3273, %v3272
        %v3312 = vpack.c.b16 %v3275, %v3274
        %v3313 = vpack.c.b16 %v3277, %v3276
        %v3314 = vpack.c.b16 %v3279, %v3278
        %v3315 = vpack.c.b16 %v3281, %v3280
        %v3316 = vpack.c.b16 %v3283, %v3282
        %v3317 = vpack.c.b16 %v3285, %v3284
        %v3318 = vpack.c.b16 %v3287, %v3286
        %v3319 = vpack.c.b16 %v3289, %v3288
        %v3320 = vpack.c.b16 %v3291, %v3290
        %v3321 = vpack.c.b16 %v3293, %v3292
        %v3322 = vpack.c.b16 %v3295, %v3294
        %v3323 = vpack.c.b16 %v3297, %v3296
        %v3324 = vpack.c.b16 %v3299, %v3298
        %v3325 = vpack.c.b16 %v3301, %v3300
        %3350 = vmatprep.subr.bf16.mxu0 0
        %3351 = vmatpush1.bf16.msra.mxu0 %v3309
        %3352 = vmatprep.subr.bf16.mxu0 0
        %3353 = vmatpush1.bf16.msra.mxu0 %v3308
        %3354 = vmatprep.subr.bf16.mxu0 0
        %3355 = vmatpush1.bf16.msra.mxu0 %v3307
        %3356 = vmatprep.subr.bf16.mxu0 0
        %3357 = vmatpush1.bf16.msra.mxu0 %v3306
        %3358 = vmatprep.subr.bf16.mxu0 0
        %3359 = vmatpush1.bf16.msra.mxu0 %v3305
        %3360 = vmatprep.subr.bf16.mxu0 0
        %3361 = vmatpush1.bf16.msra.mxu0 %v3304
        %3362 = vmatprep.subr.bf16.mxu0 0
        %3363 = vmatpush1.bf16.msra.mxu0 %v3303
        %3364 = vmatprep.subr.bf16.mxu0 0
        %3365 = vmatpush1.bf16.msra.mxu0 %v3302
        %3366 = vmatprep.subr.bf16.mxu0 0
        %3367 = vmatpush2.bf16.msra.mxu0 %v3317
        %3368 = vmatprep.subr.bf16.mxu0 0
        %3369 = vmatpush2.bf16.msra.mxu0 %v3316
        %3370 = vmatprep.subr.bf16.mxu0 0
        %3371 = vmatpush2.bf16.msra.mxu0 %v3315
        %3372 = vmatprep.subr.bf16.mxu0 0
        %3373 = vmatpush2.bf16.msra.mxu0 %v3314
        %3374 = vmatprep.subr.bf16.mxu0 0
        %3375 = vmatpush2.bf16.msra.mxu0 %v3313
        %3376 = vmatprep.subr.bf16.mxu0 0
        %3377 = vmatpush2.bf16.msra.mxu0 %v3312
        %3378 = vmatprep.subr.bf16.mxu0 0
        %3379 = vmatpush2.bf16.msra.mxu0 %v3311
        %3380 = vmatprep.subr.bf16.mxu0 0
        %3381 = vmatpush2.bf16.msra.mxu0 %v3310
        %3382 = vmatprep.mubr.bf16.mxu0 %v3201
        %3383 = vmatmul.mubr.bf16.gmra.mxu0 %v3200
        %v3384 = vpop.f32.mrf.mxu0
        %v3385 = vadd.f32 %v3064, %v3384
        %v3386 = vpop.f32.mrf.mxu0
        %v3387 = vpop.f32.mrf.mxu0
        %v3388 = vadd.f32 %v3067, %v3387
        %v3389 = vpop.f32.mrf.mxu0
        %3390 = vmatprep.mubr.bf16.mxu0 %v2629
        %3391 = vmatmul.mubr.bf16.gmra.mxu0 %v2628
        %v3392 = vpop.f32.mrf.mxu0
        %v3393 = vadd.f32 %v3072, %v3392
        %v3394 = vpop.f32.mrf.mxu0
        %v3395 = vpop.f32.mrf.mxu0
        %v3396 = vadd.f32 %v3075, %v3395
        %v3397 = vpop.f32.mrf.mxu0
        %3398 = vmatprep.mubr.bf16.mxu0 %v2632
        %3399 = vmatmul.mubr.bf16.gmra.mxu0 %v2631
        %v3400 = vpop.f32.mrf.mxu0
        %v3401 = vadd.f32 %v3080, %v3400
        %v3402 = vpop.f32.mrf.mxu0
        %v3403 = vpop.f32.mrf.mxu0
        %v3404 = vadd.f32 %v3083, %v3403
        %v3405 = vpop.f32.mrf.mxu0
        %3406 = vmatprep.mubr.bf16.mxu0 %v2635
        %3407 = vmatmul.mubr.bf16.gmra.mxu0 %v2634
        %v3408 = vpop.f32.mrf.mxu0
        %v3409 = vadd.f32 %v3088, %v3408
        %v3410 = vpop.f32.mrf.mxu0
        %v3411 = vpop.f32.mrf.mxu0
        %v3412 = vadd.f32 %v3091, %v3411
        %v3413 = vpop.f32.mrf.mxu0
        %3414 = vmatprep.mubr.bf16.mxu0 %v2638
        %3415 = vmatmul.mubr.bf16.gmra.mxu0 %v2637
        %v3416 = vpop.f32.mrf.mxu0
        %v3417 = vadd.f32 %v3096, %v3416
        %v3418 = vpop.f32.mrf.mxu0
        %v3419 = vpop.f32.mrf.mxu0
        %v3420 = vadd.f32 %v3099, %v3419
        %v3421 = vpop.f32.mrf.mxu0
        %3422 = vmatprep.mubr.bf16.mxu0 %v2641
        %3423 = vmatmul.mubr.bf16.gmra.mxu0 %v2640
        %v3424 = vpop.f32.mrf.mxu0
        %v3425 = vadd.f32 %v3104, %v3424
        %v3426 = vpop.f32.mrf.mxu0
        %v3427 = vpop.f32.mrf.mxu0
        %v3428 = vadd.f32 %v3107, %v3427
        %v3429 = vpop.f32.mrf.mxu0
        %3430 = vmatprep.mubr.bf16.mxu0 %v2644
        %3431 = vmatmul.mubr.bf16.gmra.mxu0 %v2643
        %v3432 = vpop.f32.mrf.mxu0
        %v3433 = vadd.f32 %v3112, %v3432
        %v3434 = vpop.f32.mrf.mxu0
        %v3435 = vpop.f32.mrf.mxu0
        %v3436 = vadd.f32 %v3115, %v3435
        %v3437 = vpop.f32.mrf.mxu0
        %3438 = vmatprep.mubr.bf16.mxu0 %v2647
        %3439 = vmatmul.mubr.bf16.gmra.mxu0 %v2646
        %v3440 = vpop.f32.mrf.mxu0
        %v3441 = vadd.f32 %v3120, %v3440
        %v3442 = vpop.f32.mrf.mxu0
        %v3443 = vpop.f32.mrf.mxu0
        %v3444 = vadd.f32 %v3123, %v3443
        %v3445 = vpop.f32.mrf.mxu0
        %3446 = vmatprep.mubr.bf16.mxu0 %v2650
        %3447 = vmatmul.mubr.bf16.gmra.mxu0 %v2649
        %v3448 = vpop.f32.mrf.mxu0
        %v3449 = vadd.f32 %v3128, %v3448
        %v3450 = vpop.f32.mrf.mxu0
        %v3451 = vpop.f32.mrf.mxu0
        %v3452 = vadd.f32 %v3131, %v3451
        %v3453 = vpop.f32.mrf.mxu0
        %3454 = vmatprep.mubr.bf16.mxu0 %v2653
        %3455 = vmatmul.mubr.bf16.gmra.mxu0 %v2652
        %v3456 = vpop.f32.mrf.mxu0
        %v3457 = vadd.f32 %v3136, %v3456
        %v3458 = vpop.f32.mrf.mxu0
        %v3459 = vpop.f32.mrf.mxu0
        %v3460 = vadd.f32 %v3139, %v3459
        %v3461 = vpop.f32.mrf.mxu0
        %3462 = vmatprep.mubr.bf16.mxu0 %v2656
        %3463 = vmatmul.mubr.bf16.gmra.mxu0 %v2655
        %v3464 = vpop.f32.mrf.mxu0
        %v3465 = vadd.f32 %v3144, %v3464
        %v3466 = vpop.f32.mrf.mxu0
        %v3467 = vpop.f32.mrf.mxu0
        %v3468 = vadd.f32 %v3147, %v3467
        %v3469 = vpop.f32.mrf.mxu0
        %3470 = vmatprep.mubr.bf16.mxu0 %v2659
        %3471 = vmatmul.mubr.bf16.gmra.mxu0 %v2658
        %v3472 = vpop.f32.mrf.mxu0
        %v3473 = vadd.f32 %v3152, %v3472
        %v3474 = vpop.f32.mrf.mxu0
        %v3475 = vpop.f32.mrf.mxu0
        %v3476 = vadd.f32 %v3155, %v3475
        %v3477 = vpop.f32.mrf.mxu0
        %3478 = vmatprep.mubr.bf16.mxu0 %v2662
        %3479 = vmatmul.mubr.bf16.gmra.mxu0 %v2661
        %v3480 = vpop.f32.mrf.mxu0
        %v3481 = vadd.f32 %v3160, %v3480
        %v3482 = vpop.f32.mrf.mxu0
        %v3483 = vpop.f32.mrf.mxu0
        %v3484 = vadd.f32 %v3163, %v3483
        %v3485 = vpop.f32.mrf.mxu0
        %3486 = vmatprep.mubr.bf16.mxu0 %v2665
        %3487 = vmatmul.mubr.bf16.gmra.mxu0 %v2664
        %v3488 = vpop.f32.mrf.mxu0
        %v3489 = vadd.f32 %v3168, %v3488
        %v3490 = vpop.f32.mrf.mxu0
        %v3491 = vpop.f32.mrf.mxu0
        %v3492 = vadd.f32 %v3171, %v3491
        %v3493 = vpop.f32.mrf.mxu0
        %3494 = vmatprep.mubr.bf16.mxu0 %v2668
        %3495 = vmatmul.mubr.bf16.gmra.mxu0 %v2667
        %v3496 = vpop.f32.mrf.mxu0
        %v3497 = vadd.f32 %v3176, %v3496
        %v3498 = vpop.f32.mrf.mxu0
        %v3499 = vpop.f32.mrf.mxu0
        %v3500 = vadd.f32 %v3179, %v3499
        %v3501 = vpop.f32.mrf.mxu0
        %3502 = vmatprep.mubr.bf16.mxu0 %v2671
        %3503 = vmatmul.mubr.bf16.gmra.mxu0 %v2670
        %v3504 = vpop.f32.mrf.mxu0
        %v3505 = vadd.f32 %v3184, %v3504
        %v3506 = vpop.f32.mrf.mxu0
        %v3507 = vpop.f32.mrf.mxu0
        %v3508 = vadd.f32 %v3187, %v3507
        %v3509 = vpop.f32.mrf.mxu0
        %3510 = vdwg.mxu0
        %3511 = vmatprep.subr.bf16.mxu0 0
        %3512 = vmatpush1.bf16.msra.mxu0 %v3325
        %3513 = vmatprep.subr.bf16.mxu0 0
        %3514 = vmatpush1.bf16.msra.mxu0 %v3324
        %3515 = vmatprep.subr.bf16.mxu0 0
        %3516 = vmatpush1.bf16.msra.mxu0 %v3323
        %3517 = vmatprep.subr.bf16.mxu0 0
        %3518 = vmatpush1.bf16.msra.mxu0 %v3322
        %3519 = vmatprep.subr.bf16.mxu0 0
        %3520 = vmatpush1.bf16.msra.mxu0 %v3321
        %3521 = vmatprep.subr.bf16.mxu0 0
        %3522 = vmatpush1.bf16.msra.mxu0 %v3320
        %3523 = vmatprep.subr.bf16.mxu0 0
        %3524 = vmatpush1.bf16.msra.mxu0 %v3319
        %3525 = vmatprep.subr.bf16.mxu0 0
        %3526 = vmatpush1.bf16.msra.mxu0 %v3318
        %3527 = vmatprep.subr.bf16.mxu0 0
        %3528 = vmatpush2.bf16.msra.mxu0 0
        %3529 = vmatprep.subr.bf16.mxu0 0
        %3530 = vmatpush2.bf16.msra.mxu0 0
        %3531 = vmatprep.subr.bf16.mxu0 0
        %3532 = vmatpush2.bf16.msra.mxu0 0
        %3533 = vmatprep.subr.bf16.mxu0 0
        %3534 = vmatpush2.bf16.msra.mxu0 0
        %3535 = vmatprep.subr.bf16.mxu0 0
        %3536 = vmatpush2.bf16.msra.mxu0 0
        %3537 = vmatprep.subr.bf16.mxu0 0
        %3538 = vmatpush2.bf16.msra.mxu0 0
        %3539 = vmatprep.subr.bf16.mxu0 0
        %3540 = vmatpush2.bf16.msra.mxu0 0
        %3541 = vmatprep.subr.bf16.mxu0 0
        %3542 = vmatpush2.bf16.msra.mxu0 0
        %3543 = vmatprep.mubr.bf16.mxu0 0
        %3544 = vmatmul.mubr.bf16.gmra.mxu0 %v3202
        %v3545 = vpop.f32.mrf.mxu0
        %v3546 = vadd.f32 %v3385, %v3545
        %v3547 = vpop.f32.mrf.mxu0
        %v3548 = vpop.f32.mrf.mxu0
        %v3549 = vadd.f32 %v3388, %v3548
        %v3550 = vpop.f32.mrf.mxu0
        %3551 = vmatprep.mubr.bf16.mxu0 0
        %3552 = vmatmul.mubr.bf16.gmra.mxu0 %v2630
        %v3553 = vpop.f32.mrf.mxu0
        %v3554 = vadd.f32 %v3393, %v3553
        %v3555 = vpop.f32.mrf.mxu0
        %v3556 = vpop.f32.mrf.mxu0
        %v3557 = vadd.f32 %v3396, %v3556
        %v3558 = vpop.f32.mrf.mxu0
        %3559 = vmatprep.mubr.bf16.mxu0 0
        %3560 = vmatmul.mubr.bf16.gmra.mxu0 %v2633
        %v3561 = vpop.f32.mrf.mxu0
        %v3562 = vadd.f32 %v3401, %v3561
        %v3563 = vpop.f32.mrf.mxu0
        %v3564 = vpop.f32.mrf.mxu0
        %v3565 = vadd.f32 %v3404, %v3564
        %v3566 = vpop.f32.mrf.mxu0
        %3567 = vmatprep.mubr.bf16.mxu0 0
        %3568 = vmatmul.mubr.bf16.gmra.mxu0 %v2636
        %v3569 = vpop.f32.mrf.mxu0
        %v3570 = vadd.f32 %v3409, %v3569
        %v3571 = vpop.f32.mrf.mxu0
        %v3572 = vpop.f32.mrf.mxu0
        %v3573 = vadd.f32 %v3412, %v3572
        %v3574 = vpop.f32.mrf.mxu0
        %3575 = vmatprep.mubr.bf16.mxu0 0
        %3576 = vmatmul.mubr.bf16.gmra.mxu0 %v2639
        %v3577 = vpop.f32.mrf.mxu0
        %v3578 = vadd.f32 %v3417, %v3577
        %v3579 = vpop.f32.mrf.mxu0
        %v3580 = vpop.f32.mrf.mxu0
        %v3581 = vadd.f32 %v3420, %v3580
        %v3582 = vpop.f32.mrf.mxu0
        %3583 = vmatprep.mubr.bf16.mxu0 0
        %3584 = vmatmul.mubr.bf16.gmra.mxu0 %v2642
        %v3585 = vpop.f32.mrf.mxu0
        %v3586 = vadd.f32 %v3425, %v3585
        %v3587 = vpop.f32.mrf.mxu0
        %v3588 = vpop.f32.mrf.mxu0
        %v3589 = vadd.f32 %v3428, %v3588
        %v3590 = vpop.f32.mrf.mxu0
        %3591 = vmatprep.mubr.bf16.mxu0 0
        %3592 = vmatmul.mubr.bf16.gmra.mxu0 %v2645
        %v3593 = vpop.f32.mrf.mxu0
        %v3594 = vadd.f32 %v3433, %v3593
        %v3595 = vpop.f32.mrf.mxu0
        %v3596 = vpop.f32.mrf.mxu0
        %v3597 = vadd.f32 %v3436, %v3596
        %v3598 = vpop.f32.mrf.mxu0
        %3599 = vmatprep.mubr.bf16.mxu0 0
        %3600 = vmatmul.mubr.bf16.gmra.mxu0 %v2648
        %v3601 = vpop.f32.mrf.mxu0
        %v3602 = vadd.f32 %v3441, %v3601
        %v3603 = vpop.f32.mrf.mxu0
        %v3604 = vpop.f32.mrf.mxu0
        %v3605 = vadd.f32 %v3444, %v3604
        %v3606 = vpop.f32.mrf.mxu0
        %3607 = vmatprep.mubr.bf16.mxu0 0
        %3608 = vmatmul.mubr.bf16.gmra.mxu0 %v2651
        %v3609 = vpop.f32.mrf.mxu0
        %v3610 = vadd.f32 %v3449, %v3609
        %v3611 = vpop.f32.mrf.mxu0
        %v3612 = vpop.f32.mrf.mxu0
        %v3613 = vadd.f32 %v3452, %v3612
        %v3614 = vpop.f32.mrf.mxu0
        %3615 = vmatprep.mubr.bf16.mxu0 0
        %3616 = vmatmul.mubr.bf16.gmra.mxu0 %v2654
        %v3617 = vpop.f32.mrf.mxu0
        %v3618 = vadd.f32 %v3457, %v3617
        %v3619 = vpop.f32.mrf.mxu0
        %v3620 = vpop.f32.mrf.mxu0
        %v3621 = vadd.f32 %v3460, %v3620
        %v3622 = vpop.f32.mrf.mxu0
        %3623 = vmatprep.mubr.bf16.mxu0 0
        %3624 = vmatmul.mubr.bf16.gmra.mxu0 %v2657
        %v3625 = vpop.f32.mrf.mxu0
        %v3626 = vadd.f32 %v3465, %v3625
        %v3627 = vpop.f32.mrf.mxu0
        %v3628 = vpop.f32.mrf.mxu0
        %v3629 = vadd.f32 %v3468, %v3628
        %v3630 = vpop.f32.mrf.mxu0
        %3631 = vmatprep.mubr.bf16.mxu0 0
        %3632 = vmatmul.mubr.bf16.gmra.mxu0 %v2660
        %v3633 = vpop.f32.mrf.mxu0
        %v3634 = vadd.f32 %v3473, %v3633
        %v3635 = vpop.f32.mrf.mxu0
        %v3636 = vpop.f32.mrf.mxu0
        %v3637 = vadd.f32 %v3476, %v3636
        %v3638 = vpop.f32.mrf.mxu0
        %3639 = vmatprep.mubr.bf16.mxu0 0
        %3640 = vmatmul.mubr.bf16.gmra.mxu0 %v2663
        %v3641 = vpop.f32.mrf.mxu0
        %v3642 = vadd.f32 %v3481, %v3641
        %v3643 = vpop.f32.mrf.mxu0
        %v3644 = vpop.f32.mrf.mxu0
        %v3645 = vadd.f32 %v3484, %v3644
        %v3646 = vpop.f32.mrf.mxu0
        %3647 = vmatprep.mubr.bf16.mxu0 0
        %3648 = vmatmul.mubr.bf16.gmra.mxu0 %v2666
        %v3649 = vpop.f32.mrf.mxu0
        %v3650 = vadd.f32 %v3489, %v3649
        %v3651 = vpop.f32.mrf.mxu0
        %v3652 = vpop.f32.mrf.mxu0
        %v3653 = vadd.f32 %v3492, %v3652
        %v3654 = vpop.f32.mrf.mxu0
        %3655 = vmatprep.mubr.bf16.mxu0 0
        %3656 = vmatmul.mubr.bf16.gmra.mxu0 %v2669
        %v3657 = vpop.f32.mrf.mxu0
        %v3658 = vadd.f32 %v3497, %v3657
        %v3659 = vpop.f32.mrf.mxu0
        %v3660 = vpop.f32.mrf.mxu0
        %v3661 = vadd.f32 %v3500, %v3660
        %v3662 = vpop.f32.mrf.mxu0
        %3663 = vmatprep.mubr.bf16.mxu0 0
        %3664 = vmatmul.mubr.bf16.gmra.mxu0 %v2672
        %v3665 = vpop.f32.mrf.mxu0
        %v3666 = vadd.f32 %v3505, %v3665
        %v3667 = vpop.f32.mrf.mxu0
        %v3668 = vpop.f32.mrf.mxu0
        %v3669 = vadd.f32 %v3508, %v3668
        %v3670 = vpop.f32.mrf.mxu0
        %3671 = vdwg.mxu0
        %v3672 = vld [vmem:[#allocation2 + $0x30] sm:$0xff]
        %v3673 = vld [vmem:[#allocation2 + $0x38] sm:$0xf]
        %v3674 = vld [vmem:[#allocation2 + $0x3c] sm:$0xff]
        %v3675 = vld [vmem:[#allocation2 + $0x44] sm:$0xf]
        %v3676 = vld [vmem:[#allocation2 + $0x48] sm:$0xff]
        %v3677 = vld [vmem:[#allocation2 + $0x50] sm:$0xf]
        %v3678 = vld [vmem:[#allocation2 + $0x54] sm:$0xff]
        %v3679 = vld [vmem:[#allocation2 + $0x5c] sm:$0xf]
        %v3680 = vld [vmem:[#allocation2 + $0x60] sm:$0xff]
        %v3681 = vld [vmem:[#allocation2 + $0x68] sm:$0xf]
        %v3682 = vld [vmem:[#allocation2 + $0x6c] sm:$0xff]
        %v3683 = vld [vmem:[#allocation2 + $0x74] sm:$0xf]
        %v3684 = vld [vmem:[#allocation2 + $0x78] sm:$0xff]
        %v3685 = vld [vmem:[#allocation2 + $0x80] sm:$0xf]
        %v3686 = vld [vmem:[#allocation2 + $0x84] sm:$0xff]
        %v3687 = vld [vmem:[#allocation2 + $0x8c] sm:$0xf]
        %v3688 = vld [vmem:[#allocation2 + $0x90] sm:$0xff]
        %v3689 = vld [vmem:[#allocation2 + $0x98] sm:$0xf]
        %v3690 = vld [vmem:[#allocation2 + $0x9c] sm:$0xff]
        %v3691 = vld [vmem:[#allocation2 + $0xa4] sm:$0xf]
        %v3692 = vld [vmem:[#allocation2 + $0xa8] sm:$0xff]
        %v3693 = vld [vmem:[#allocation2 + $0xb0] sm:$0xf]
        %v3694 = vld [vmem:[#allocation2 + $0xb4] sm:$0xff]
        %v3695 = vld [vmem:[#allocation2 + $0xbc] sm:$0xf]
        %v3696 = vld [vmem:[#allocation2 + $0xc0] sm:$0xff]
        %v3697 = vld [vmem:[#allocation2 + $0xc8] sm:$0xf]
        %v3698 = vld [vmem:[#allocation2 + $0xcc] sm:$0xff]
        %v3699 = vld [vmem:[#allocation2 + $0xd4] sm:$0xf]
        %v3700 = vld [vmem:[#allocation2 + $0xd8] sm:$0xff]
        %v3701 = vld [vmem:[#allocation2 + $0xe0] sm:$0xf]
        %v3702 = vld [vmem:[#allocation2 + $0xe4] sm:$0xff]
        %v3703 = vld [vmem:[#allocation2 + $0xec] sm:$0xf]
        %v3704 = vld [vmem:[#allocation2 + $0xf0] sm:$0xff]
        %v3705 = vld [vmem:[#allocation2 + $0xf8] sm:$0xf]
        %v3706 = vld [vmem:[#allocation2 + $0xfc] sm:$0xff]
        %v3707 = vld [vmem:[#allocation2 + $0x104] sm:$0xf]
        %v3708 = vld [vmem:[#allocation2 + $0x108] sm:$0xff]
        %v3709 = vld [vmem:[#allocation2 + $0x110] sm:$0xf]
        %v3710 = vld [vmem:[#allocation2 + $0x114] sm:$0xff]
        %v3711 = vld [vmem:[#allocation2 + $0x11c] sm:$0xf]
        %v3712 = vld [vmem:[#allocation2 + $0x120] sm:$0xff]
        %v3713 = vld [vmem:[#allocation2 + $0x128] sm:$0xf]
        %v3714 = vld [vmem:[#allocation2 + $0x12c] sm:$0xff]
        %v3715 = vld [vmem:[#allocation2 + $0x134] sm:$0xf]
        %v3716 = vld [vmem:[#allocation2 + $0x138] sm:$0xff]
        %v3717 = vld [vmem:[#allocation2 + $0x140] sm:$0xf]
        %v3718 = vld [vmem:[#allocation2 + $0x144] sm:$0xff]
        %v3719 = vld [vmem:[#allocation2 + $0x14c] sm:$0xf]
        %v3720 = vld [vmem:[#allocation2 + $0x150] sm:$0xff]
        %v3721 = vld [vmem:[#allocation2 + $0x158] sm:$0xf]
        %v3722 = vld [vmem:[#allocation2 + $0x15c] sm:$0xff]
        %v3723 = vld [vmem:[#allocation2 + $0x164] sm:$0xf]
        %v3724 = vld [vmem:[#allocation2 + $0x168] sm:$0xff]
        %v3725 = vld [vmem:[#allocation2 + $0x170] sm:$0xf]
        %v3726 = vld [vmem:[#allocation2 + $0x174] sm:$0xff]
        %v3727 = vld [vmem:[#allocation2 + $0x17c] sm:$0xf]
        %v3728 = vld [vmem:[#allocation2 + $0x180] sm:$0xff]
        %v3729 = vld [vmem:[#allocation2 + $0x188] sm:$0xf]
        %v3730 = vld [vmem:[#allocation2 + $0x18c] sm:$0xff]
        %v3731 = vld [vmem:[#allocation2 + $0x194] sm:$0xf]
        %v3732 = vld [vmem:[#allocation2 + $0x198] sm:$0xff]
        %v3733 = vld [vmem:[#allocation2 + $0x1a0] sm:$0xf]
        %v3734 = vld [vmem:[#allocation2 + $0x1a4] sm:$0xff]
        %v3735 = vld [vmem:[#allocation2 + $0x1ac] sm:$0xf]
        %s3736 = scalar_lea.vmem [#allocation8], 384
        %v3737 = vld [vmem:[%s3736] sm:$0xf]
        %v3738 = vld [vmem:[%s3736 + $0x4] sm:$0xf]
        %v3739 = vld [vmem:[%s3736 + $0x8] sm:$0xf]
        %v3740 = vld [vmem:[%s3736 + $0xc] sm:$0xf]
        %v3741 = vld [vmem:[%s3736 + $0x10] sm:$0xf]
        %v3742 = vld [vmem:[%s3736 + $0x14] sm:$0xf]
        %v3743 = vld [vmem:[%s3736 + $0x18] sm:$0xf]
        %v3744 = vld [vmem:[%s3736 + $0x1c] sm:$0xf]
        %v3745 = vld [vmem:[%s3736 + $0x20] sm:$0xf]
        %v3746 = vld [vmem:[%s3736 + $0x24] sm:$0xf]
        %v3747 = vld [vmem:[%s3736 + $0x28] sm:$0xf]
        %v3748 = vld [vmem:[%s3736 + $0x2c] sm:$0xf]
        %v3749 = vld [vmem:[%s3736 + $0x30] sm:$0xf]
        %v3750 = vld [vmem:[%s3736 + $0x34] sm:$0xf]
        %v3751 = vld [vmem:[%s3736 + $0x38] sm:$0xf]
        %v3752 = vld [vmem:[%s3736 + $0x3c] sm:$0xf]
        %v3753 = vld [vmem:[%s3736 + $0x40] sm:$0xf]
        %v3754 = vld [vmem:[%s3736 + $0x44] sm:$0xf]
        %v3755 = vld [vmem:[%s3736 + $0x48] sm:$0xf]
        %v3756 = vld [vmem:[%s3736 + $0x4c] sm:$0xf]
        %v3757 = vld [vmem:[%s3736 + $0x50] sm:$0xf]
        %v3758 = vld [vmem:[%s3736 + $0x54] sm:$0xf]
        %v3759 = vld [vmem:[%s3736 + $0x58] sm:$0xf]
        %v3760 = vld [vmem:[%s3736 + $0x5c] sm:$0xf]
        %v3761 = vld [vmem:[%s3736 + $0x60] sm:$0xf]
        %v3762 = vld [vmem:[%s3736 + $0x64] sm:$0xf]
        %v3763 = vld [vmem:[%s3736 + $0x68] sm:$0xf]
        %v3764 = vld [vmem:[%s3736 + $0x6c] sm:$0xf]
        %v3765 = vld [vmem:[%s3736 + $0x70] sm:$0xf]
        %v3766 = vld [vmem:[%s3736 + $0x74] sm:$0xf]
        %v3767 = vld [vmem:[%s3736 + $0x78] sm:$0xf]
        %v3768 = vld [vmem:[%s3736 + $0x7c] sm:$0xf]
        %v3769 = vld [vmem:[%s3736 + $0x80] sm:$0xf]
        %v3770 = vld [vmem:[%s3736 + $0x84] sm:$0xf]
        %v3771 = vld [vmem:[%s3736 + $0x88] sm:$0xf]
        %v3772 = vld [vmem:[%s3736 + $0x8c] sm:$0xf]
        %v3773 = vld [vmem:[%s3736 + $0x90] sm:$0xf]
        %v3774 = vld [vmem:[%s3736 + $0x94] sm:$0xf]
        %v3775 = vld [vmem:[%s3736 + $0x98] sm:$0xf]
        %v3776 = vld [vmem:[%s3736 + $0x9c] sm:$0xf]
        %v3777 = vld [vmem:[%s3736 + $0xa0] sm:$0xf]
        %v3778 = vld [vmem:[%s3736 + $0xa4] sm:$0xf]
        %v3779 = vld [vmem:[%s3736 + $0xa8] sm:$0xf]
        %v3780 = vld [vmem:[%s3736 + $0xac] sm:$0xf]
        %v3781 = vld [vmem:[%s3736 + $0xb0] sm:$0xf]
        %v3782 = vld [vmem:[%s3736 + $0xb4] sm:$0xf]
        %v3783 = vld [vmem:[%s3736 + $0xb8] sm:$0xf]
        %v3784 = vld [vmem:[%s3736 + $0xbc] sm:$0xf]
        %v3849 = vunpack.c.l.b16 %v3672
        %v3850 = vunpack.c.h.b16 %v3672
        %v3851 = vunpack.c.l.b16 %v3673
        %v3852 = vunpack.c.l.b16 %v3674
        %v3853 = vunpack.c.h.b16 %v3674
        %v3854 = vunpack.c.l.b16 %v3675
        %v3855 = vunpack.c.l.b16 %v3676
        %v3856 = vunpack.c.h.b16 %v3676
        %v3857 = vunpack.c.l.b16 %v3677
        %v3858 = vunpack.c.l.b16 %v3678
        %v3859 = vunpack.c.h.b16 %v3678
        %v3860 = vunpack.c.l.b16 %v3679
        %v3861 = vunpack.c.l.b16 %v3680
        %v3862 = vunpack.c.h.b16 %v3680
        %v3863 = vunpack.c.l.b16 %v3681
        %v3864 = vunpack.c.l.b16 %v3682
        %v3865 = vunpack.c.h.b16 %v3682
        %v3866 = vunpack.c.l.b16 %v3683
        %v3867 = vunpack.c.l.b16 %v3684
        %v3868 = vunpack.c.h.b16 %v3684
        %v3869 = vunpack.c.l.b16 %v3685
        %v3870 = vunpack.c.l.b16 %v3686
        %v3871 = vunpack.c.h.b16 %v3686
        %v3872 = vunpack.c.l.b16 %v3687
        %v3873 = vunpack.c.l.b16 %v3688
        %v3874 = vunpack.c.h.b16 %v3688
        %v3875 = vunpack.c.l.b16 %v3689
        %v3876 = vunpack.c.l.b16 %v3690
        %v3877 = vunpack.c.h.b16 %v3690
        %v3878 = vunpack.c.l.b16 %v3691
        %v3879 = vunpack.c.l.b16 %v3692
        %v3880 = vunpack.c.h.b16 %v3692
        %v3881 = vunpack.c.l.b16 %v3693
        %v3882 = vunpack.c.l.b16 %v3694
        %v3883 = vunpack.c.h.b16 %v3694
        %v3884 = vunpack.c.l.b16 %v3695
        %v3885 = vunpack.c.l.b16 %v3696
        %v3886 = vunpack.c.h.b16 %v3696
        %v3887 = vunpack.c.l.b16 %v3697
        %v3888 = vunpack.c.l.b16 %v3698
        %v3889 = vunpack.c.h.b16 %v3698
        %v3890 = vunpack.c.l.b16 %v3699
        %v3891 = vunpack.c.l.b16 %v3700
        %v3892 = vunpack.c.h.b16 %v3700
        %v3893 = vunpack.c.l.b16 %v3701
        %v3894 = vunpack.c.l.b16 %v3702
        %v3895 = vunpack.c.h.b16 %v3702
        %v3896 = vunpack.c.l.b16 %v3703
        %v3897 = vunpack.c.l.b16 %v3704
        %v3898 = vunpack.c.h.b16 %v3704
        %v3899 = vunpack.c.l.b16 %v3705
        %v3900 = vunpack.c.l.b16 %v3706
        %v3901 = vunpack.c.h.b16 %v3706
        %v3902 = vunpack.c.l.b16 %v3707
        %v3903 = vunpack.c.l.b16 %v3708
        %v3904 = vunpack.c.h.b16 %v3708
        %v3905 = vunpack.c.l.b16 %v3709
        %v3906 = vunpack.c.l.b16 %v3710
        %v3907 = vunpack.c.h.b16 %v3710
        %v3908 = vunpack.c.l.b16 %v3711
        %v3909 = vunpack.c.l.b16 %v3712
        %v3910 = vunpack.c.h.b16 %v3712
        %v3911 = vunpack.c.l.b16 %v3713
        %v3912 = vunpack.c.l.b16 %v3714
        %v3913 = vunpack.c.h.b16 %v3714
        %v3914 = vunpack.c.l.b16 %v3715
        %v3915 = vunpack.c.l.b16 %v3716
        %v3916 = vunpack.c.h.b16 %v3716
        %v3917 = vunpack.c.l.b16 %v3717
        %v3918 = vunpack.c.l.b16 %v3718
        %v3919 = vunpack.c.h.b16 %v3718
        %v3920 = vunpack.c.l.b16 %v3719
        %v3921 = vunpack.c.l.b16 %v3720
        %v3922 = vunpack.c.h.b16 %v3720
        %v3923 = vunpack.c.l.b16 %v3721
        %v3924 = vunpack.c.l.b16 %v3722
        %v3925 = vunpack.c.h.b16 %v3722
        %v3926 = vunpack.c.l.b16 %v3723
        %v3927 = vunpack.c.l.b16 %v3724
        %v3928 = vunpack.c.h.b16 %v3724
        %v3929 = vunpack.c.l.b16 %v3725
        %v3930 = vunpack.c.l.b16 %v3726
        %v3931 = vunpack.c.h.b16 %v3726
        %v3932 = vunpack.c.l.b16 %v3727
        %v3933 = vunpack.c.l.b16 %v3728
        %v3934 = vunpack.c.h.b16 %v3728
        %v3935 = vunpack.c.l.b16 %v3729
        %v3936 = vunpack.c.l.b16 %v3730
        %v3937 = vunpack.c.h.b16 %v3730
        %v3938 = vunpack.c.l.b16 %v3731
        %v3939 = vunpack.c.l.b16 %v3732
        %v3940 = vunpack.c.h.b16 %v3732
        %v3941 = vunpack.c.l.b16 %v3733
        %v3942 = vunpack.c.l.b16 %v3734
        %v3943 = vunpack.c.h.b16 %v3734
        %v3944 = vunpack.c.l.b16 %v3735
        %v3945 = vpack.c.b16 %v3852, %v3849
        %v3946 = vpack.c.b16 %v3853, %v3850
        %v3947 = vpack.c.b16 %v3854, %v3851
        %v3948 = vpack.c.b16 %v3858, %v3855
        %v3949 = vpack.c.b16 %v3859, %v3856
        %v3950 = vpack.c.b16 %v3860, %v3857
        %v3951 = vpack.c.b16 %v3864, %v3861
        %v3952 = vpack.c.b16 %v3865, %v3862
        %v3953 = vpack.c.b16 %v3866, %v3863
        %v3954 = vpack.c.b16 %v3870, %v3867
        %v3955 = vpack.c.b16 %v3871, %v3868
        %v3956 = vpack.c.b16 %v3872, %v3869
        %v3957 = vpack.c.b16 %v3876, %v3873
        %v3958 = vpack.c.b16 %v3877, %v3874
        %v3959 = vpack.c.b16 %v3878, %v3875
        %v3960 = vpack.c.b16 %v3882, %v3879
        %v3961 = vpack.c.b16 %v3883, %v3880
        %v3962 = vpack.c.b16 %v3884, %v3881
        %v3963 = vpack.c.b16 %v3888, %v3885
        %v3964 = vpack.c.b16 %v3889, %v3886
        %v3965 = vpack.c.b16 %v3890, %v3887
        %v3966 = vpack.c.b16 %v3894, %v3891
        %v3967 = vpack.c.b16 %v3895, %v3892
        %v3968 = vpack.c.b16 %v3896, %v3893
        %v3969 = vpack.c.b16 %v3900, %v3897
        %v3970 = vpack.c.b16 %v3901, %v3898
        %v3971 = vpack.c.b16 %v3902, %v3899
        %v3972 = vpack.c.b16 %v3906, %v3903
        %v3973 = vpack.c.b16 %v3907, %v3904
        %v3974 = vpack.c.b16 %v3908, %v3905
        %v3975 = vpack.c.b16 %v3912, %v3909
        %v3976 = vpack.c.b16 %v3913, %v3910
        %v3977 = vpack.c.b16 %v3914, %v3911
        %v3978 = vpack.c.b16 %v3918, %v3915
        %v3979 = vpack.c.b16 %v3919, %v3916
        %v3980 = vpack.c.b16 %v3920, %v3917
        %v3981 = vpack.c.b16 %v3924, %v3921
        %v3982 = vpack.c.b16 %v3925, %v3922
        %v3983 = vpack.c.b16 %v3926, %v3923
        %v3984 = vpack.c.b16 %v3930, %v3927
        %v3985 = vpack.c.b16 %v3931, %v3928
        %v3986 = vpack.c.b16 %v3932, %v3929
        %v3987 = vpack.c.b16 %v3936, %v3933
        %v3988 = vpack.c.b16 %v3937, %v3934
        %v3989 = vpack.c.b16 %v3938, %v3935
        %v3990 = vpack.c.b16 %v3942, %v3939
        %v3991 = vpack.c.b16 %v3943, %v3940
        %v3992 = vpack.c.b16 %v3944, %v3941
        %v4089 = vunpack.c.l.b16 %v3737
        %v4090 = vunpack.c.l.b16 %v3738
        %v4091 = vunpack.c.l.b16 %v3739
        %v4092 = vunpack.c.l.b16 %v3740
        %v4093 = vunpack.c.l.b16 %v3741
        %v4094 = vunpack.c.l.b16 %v3742
        %v4095 = vunpack.c.l.b16 %v3743
        %v4096 = vunpack.c.l.b16 %v3744
        %v4097 = vunpack.c.l.b16 %v3745
        %v4098 = vunpack.c.l.b16 %v3746
        %v4099 = vunpack.c.l.b16 %v3747
        %v4100 = vunpack.c.l.b16 %v3748
        %v4101 = vunpack.c.l.b16 %v3749
        %v4102 = vunpack.c.l.b16 %v3750
        %v4103 = vunpack.c.l.b16 %v3751
        %v4104 = vunpack.c.l.b16 %v3752
        %v4105 = vunpack.c.l.b16 %v3753
        %v4106 = vunpack.c.l.b16 %v3754
        %v4107 = vunpack.c.l.b16 %v3755
        %v4108 = vunpack.c.l.b16 %v3756
        %v4109 = vunpack.c.l.b16 %v3757
        %v4110 = vunpack.c.l.b16 %v3758
        %v4111 = vunpack.c.l.b16 %v3759
        %v4112 = vunpack.c.l.b16 %v3760
        %v4113 = vunpack.c.l.b16 %v3761
        %v4114 = vunpack.c.l.b16 %v3762
        %v4115 = vunpack.c.l.b16 %v3763
        %v4116 = vunpack.c.l.b16 %v3764
        %v4117 = vunpack.c.l.b16 %v3765
        %v4118 = vunpack.c.l.b16 %v3766
        %v4119 = vunpack.c.l.b16 %v3767
        %v4120 = vunpack.c.l.b16 %v3768
        %v4121 = vunpack.c.l.b16 %v3769
        %v4122 = vunpack.c.l.b16 %v3770
        %v4123 = vunpack.c.l.b16 %v3771
        %v4124 = vunpack.c.l.b16 %v3772
        %v4125 = vunpack.c.l.b16 %v3773
        %v4126 = vunpack.c.l.b16 %v3774
        %v4127 = vunpack.c.l.b16 %v3775
        %v4128 = vunpack.c.l.b16 %v3776
        %v4129 = vunpack.c.l.b16 %v3777
        %v4130 = vunpack.c.l.b16 %v3778
        %v4131 = vunpack.c.l.b16 %v3779
        %v4132 = vunpack.c.l.b16 %v3780
        %v4133 = vunpack.c.l.b16 %v3781
        %v4134 = vunpack.c.l.b16 %v3782
        %v4135 = vunpack.c.l.b16 %v3783
        %v4136 = vunpack.c.l.b16 %v3784
        %v4137 = vpack.c.b16 %v4090, %v4089
        %v4138 = vpack.c.b16 %v4092, %v4091
        %v4139 = vpack.c.b16 %v4094, %v4093
        %v4140 = vpack.c.b16 %v4096, %v4095
        %v4141 = vpack.c.b16 %v4098, %v4097
        %v4142 = vpack.c.b16 %v4100, %v4099
        %v4143 = vpack.c.b16 %v4102, %v4101
        %v4144 = vpack.c.b16 %v4104, %v4103
        %v4145 = vpack.c.b16 %v4106, %v4105
        %v4146 = vpack.c.b16 %v4108, %v4107
        %v4147 = vpack.c.b16 %v4110, %v4109
        %v4148 = vpack.c.b16 %v4112, %v4111
        %v4149 = vpack.c.b16 %v4114, %v4113
        %v4150 = vpack.c.b16 %v4116, %v4115
        %v4151 = vpack.c.b16 %v4118, %v4117
        %v4152 = vpack.c.b16 %v4120, %v4119
        %v4153 = vpack.c.b16 %v4122, %v4121
        %v4154 = vpack.c.b16 %v4124, %v4123
        %v4155 = vpack.c.b16 %v4126, %v4125
        %v4156 = vpack.c.b16 %v4128, %v4127
        %v4157 = vpack.c.b16 %v4130, %v4129
        %v4158 = vpack.c.b16 %v4132, %v4131
        %v4159 = vpack.c.b16 %v4134, %v4133
        %v4160 = vpack.c.b16 %v4136, %v4135
        %4185 = vmatprep.subr.bf16.mxu0 0
        %4186 = vmatpush1.bf16.msra.mxu0 %v4144
        %4187 = vmatprep.subr.bf16.mxu0 0
        %4188 = vmatpush1.bf16.msra.mxu0 %v4143
        %4189 = vmatprep.subr.bf16.mxu0 0
        %4190 = vmatpush1.bf16.msra.mxu0 %v4142
        %4191 = vmatprep.subr.bf16.mxu0 0
        %4192 = vmatpush1.bf16.msra.mxu0 %v4141
        %4193 = vmatprep.subr.bf16.mxu0 0
        %4194 = vmatpush1.bf16.msra.mxu0 %v4140
        %4195 = vmatprep.subr.bf16.mxu0 0
        %4196 = vmatpush1.bf16.msra.mxu0 %v4139
        %4197 = vmatprep.subr.bf16.mxu0 0
        %4198 = vmatpush1.bf16.msra.mxu0 %v4138
        %4199 = vmatprep.subr.bf16.mxu0 0
        %4200 = vmatpush1.bf16.msra.mxu0 %v4137
        %4201 = vmatprep.subr.bf16.mxu0 0
        %4202 = vmatpush2.bf16.msra.mxu0 %v4152
        %4203 = vmatprep.subr.bf16.mxu0 0
        %4204 = vmatpush2.bf16.msra.mxu0 %v4151
        %4205 = vmatprep.subr.bf16.mxu0 0
        %4206 = vmatpush2.bf16.msra.mxu0 %v4150
        %4207 = vmatprep.subr.bf16.mxu0 0
        %4208 = vmatpush2.bf16.msra.mxu0 %v4149
        %4209 = vmatprep.subr.bf16.mxu0 0
        %4210 = vmatpush2.bf16.msra.mxu0 %v4148
        %4211 = vmatprep.subr.bf16.mxu0 0
        %4212 = vmatpush2.bf16.msra.mxu0 %v4147
        %4213 = vmatprep.subr.bf16.mxu0 0
        %4214 = vmatpush2.bf16.msra.mxu0 %v4146
        %4215 = vmatprep.subr.bf16.mxu0 0
        %4216 = vmatpush2.bf16.msra.mxu0 %v4145
        %4217 = vmatprep.mubr.bf16.mxu0 %v3946
        %4218 = vmatmul.mubr.bf16.gmra.mxu0 %v3945
        %v4219 = vpop.f32.mrf.mxu0
        %v4220 = vadd.f32 0.0, %v4219
        %v4221 = vpop.f32.mrf.mxu0
        %v4222 = vpop.f32.mrf.mxu0
        %v4223 = vadd.f32 0.0, %v4222
        %v4224 = vpop.f32.mrf.mxu0
        %4225 = vmatprep.mubr.bf16.mxu0 %v3949
        %4226 = vmatmul.mubr.bf16.gmra.mxu0 %v3948
        %v4227 = vpop.f32.mrf.mxu0
        %v4228 = vadd.f32 0.0, %v4227
        %v4229 = vpop.f32.mrf.mxu0
        %v4230 = vpop.f32.mrf.mxu0
        %v4231 = vadd.f32 0.0, %v4230
        %v4232 = vpop.f32.mrf.mxu0
        %4233 = vmatprep.mubr.bf16.mxu0 %v3952
        %4234 = vmatmul.mubr.bf16.gmra.mxu0 %v3951
        %v4235 = vpop.f32.mrf.mxu0
        %v4236 = vadd.f32 0.0, %v4235
        %v4237 = vpop.f32.mrf.mxu0
        %v4238 = vpop.f32.mrf.mxu0
        %v4239 = vadd.f32 0.0, %v4238
        %v4240 = vpop.f32.mrf.mxu0
        %4241 = vmatprep.mubr.bf16.mxu0 %v3955
        %4242 = vmatmul.mubr.bf16.gmra.mxu0 %v3954
        %v4243 = vpop.f32.mrf.mxu0
        %v4244 = vadd.f32 0.0, %v4243
        %v4245 = vpop.f32.mrf.mxu0
        %v4246 = vpop.f32.mrf.mxu0
        %v4247 = vadd.f32 0.0, %v4246
        %v4248 = vpop.f32.mrf.mxu0
        %4249 = vmatprep.mubr.bf16.mxu0 %v3958
        %4250 = vmatmul.mubr.bf16.gmra.mxu0 %v3957
        %v4251 = vpop.f32.mrf.mxu0
        %v4252 = vadd.f32 0.0, %v4251
        %v4253 = vpop.f32.mrf.mxu0
        %v4254 = vpop.f32.mrf.mxu0
        %v4255 = vadd.f32 0.0, %v4254
        %v4256 = vpop.f32.mrf.mxu0
        %4257 = vmatprep.mubr.bf16.mxu0 %v3961
        %4258 = vmatmul.mubr.bf16.gmra.mxu0 %v3960
        %v4259 = vpop.f32.mrf.mxu0
        %v4260 = vadd.f32 0.0, %v4259
        %v4261 = vpop.f32.mrf.mxu0
        %v4262 = vpop.f32.mrf.mxu0
        %v4263 = vadd.f32 0.0, %v4262
        %v4264 = vpop.f32.mrf.mxu0
        %4265 = vmatprep.mubr.bf16.mxu0 %v3964
        %4266 = vmatmul.mubr.bf16.gmra.mxu0 %v3963
        %v4267 = vpop.f32.mrf.mxu0
        %v4268 = vadd.f32 0.0, %v4267
        %v4269 = vpop.f32.mrf.mxu0
        %v4270 = vpop.f32.mrf.mxu0
        %v4271 = vadd.f32 0.0, %v4270
        %v4272 = vpop.f32.mrf.mxu0
        %4273 = vmatprep.mubr.bf16.mxu0 %v3967
        %4274 = vmatmul.mubr.bf16.gmra.mxu0 %v3966
        %v4275 = vpop.f32.mrf.mxu0
        %v4276 = vadd.f32 0.0, %v4275
        %v4277 = vpop.f32.mrf.mxu0
        %v4278 = vpop.f32.mrf.mxu0
        %v4279 = vadd.f32 0.0, %v4278
        %v4280 = vpop.f32.mrf.mxu0
        %4281 = vmatprep.mubr.bf16.mxu0 %v3970
        %4282 = vmatmul.mubr.bf16.gmra.mxu0 %v3969
        %v4283 = vpop.f32.mrf.mxu0
        %v4284 = vadd.f32 0.0, %v4283
        %v4285 = vpop.f32.mrf.mxu0
        %v4286 = vpop.f32.mrf.mxu0
        %v4287 = vadd.f32 0.0, %v4286
        %v4288 = vpop.f32.mrf.mxu0
        %4289 = vmatprep.mubr.bf16.mxu0 %v3973
        %4290 = vmatmul.mubr.bf16.gmra.mxu0 %v3972
        %v4291 = vpop.f32.mrf.mxu0
        %v4292 = vadd.f32 0.0, %v4291
        %v4293 = vpop.f32.mrf.mxu0
        %v4294 = vpop.f32.mrf.mxu0
        %v4295 = vadd.f32 0.0, %v4294
        %v4296 = vpop.f32.mrf.mxu0
        %4297 = vmatprep.mubr.bf16.mxu0 %v3976
        %4298 = vmatmul.mubr.bf16.gmra.mxu0 %v3975
        %v4299 = vpop.f32.mrf.mxu0
        %v4300 = vadd.f32 0.0, %v4299
        %v4301 = vpop.f32.mrf.mxu0
        %v4302 = vpop.f32.mrf.mxu0
        %v4303 = vadd.f32 0.0, %v4302
        %v4304 = vpop.f32.mrf.mxu0
        %4305 = vmatprep.mubr.bf16.mxu0 %v3979
        %4306 = vmatmul.mubr.bf16.gmra.mxu0 %v3978
        %v4307 = vpop.f32.mrf.mxu0
        %v4308 = vadd.f32 0.0, %v4307
        %v4309 = vpop.f32.mrf.mxu0
        %v4310 = vpop.f32.mrf.mxu0
        %v4311 = vadd.f32 0.0, %v4310
        %v4312 = vpop.f32.mrf.mxu0
        %4313 = vmatprep.mubr.bf16.mxu0 %v3982
        %4314 = vmatmul.mubr.bf16.gmra.mxu0 %v3981
        %v4315 = vpop.f32.mrf.mxu0
        %v4316 = vadd.f32 0.0, %v4315
        %v4317 = vpop.f32.mrf.mxu0
        %v4318 = vpop.f32.mrf.mxu0
        %v4319 = vadd.f32 0.0, %v4318
        %v4320 = vpop.f32.mrf.mxu0
        %4321 = vmatprep.mubr.bf16.mxu0 %v3985
        %4322 = vmatmul.mubr.bf16.gmra.mxu0 %v3984
        %v4323 = vpop.f32.mrf.mxu0
        %v4324 = vadd.f32 0.0, %v4323
        %v4325 = vpop.f32.mrf.mxu0
        %v4326 = vpop.f32.mrf.mxu0
        %v4327 = vadd.f32 0.0, %v4326
        %v4328 = vpop.f32.mrf.mxu0
        %4329 = vmatprep.mubr.bf16.mxu0 %v3988
        %4330 = vmatmul.mubr.bf16.gmra.mxu0 %v3987
        %v4331 = vpop.f32.mrf.mxu0
        %v4332 = vadd.f32 0.0, %v4331
        %v4333 = vpop.f32.mrf.mxu0
        %v4334 = vpop.f32.mrf.mxu0
        %v4335 = vadd.f32 0.0, %v4334
        %v4336 = vpop.f32.mrf.mxu0
        %4337 = vmatprep.mubr.bf16.mxu0 %v3991
        %4338 = vmatmul.mubr.bf16.gmra.mxu0 %v3990
        %v4339 = vpop.f32.mrf.mxu0
        %v4340 = vadd.f32 0.0, %v4339
        %v4341 = vpop.f32.mrf.mxu0
        %v4342 = vpop.f32.mrf.mxu0
        %v4343 = vadd.f32 0.0, %v4342
        %v4344 = vpop.f32.mrf.mxu0
        %4345 = vdwg.mxu0
        %4346 = vmatprep.subr.bf16.mxu0 0
        %4347 = vmatpush1.bf16.msra.mxu0 %v4160
        %4348 = vmatprep.subr.bf16.mxu0 0
        %4349 = vmatpush1.bf16.msra.mxu0 %v4159
        %4350 = vmatprep.subr.bf16.mxu0 0
        %4351 = vmatpush1.bf16.msra.mxu0 %v4158
        %4352 = vmatprep.subr.bf16.mxu0 0
        %4353 = vmatpush1.bf16.msra.mxu0 %v4157
        %4354 = vmatprep.subr.bf16.mxu0 0
        %4355 = vmatpush1.bf16.msra.mxu0 %v4156
        %4356 = vmatprep.subr.bf16.mxu0 0
        %4357 = vmatpush1.bf16.msra.mxu0 %v4155
        %4358 = vmatprep.subr.bf16.mxu0 0
        %4359 = vmatpush1.bf16.msra.mxu0 %v4154
        %4360 = vmatprep.subr.bf16.mxu0 0
        %4361 = vmatpush1.bf16.msra.mxu0 %v4153
        %4362 = vmatprep.subr.bf16.mxu0 0
        %4363 = vmatpush2.bf16.msra.mxu0 0
        %4364 = vmatprep.subr.bf16.mxu0 0
        %4365 = vmatpush2.bf16.msra.mxu0 0
        %4366 = vmatprep.subr.bf16.mxu0 0
        %4367 = vmatpush2.bf16.msra.mxu0 0
        %4368 = vmatprep.subr.bf16.mxu0 0
        %4369 = vmatpush2.bf16.msra.mxu0 0
        %4370 = vmatprep.subr.bf16.mxu0 0
        %4371 = vmatpush2.bf16.msra.mxu0 0
        %4372 = vmatprep.subr.bf16.mxu0 0
        %4373 = vmatpush2.bf16.msra.mxu0 0
        %4374 = vmatprep.subr.bf16.mxu0 0
        %4375 = vmatpush2.bf16.msra.mxu0 0
        %4376 = vmatprep.subr.bf16.mxu0 0
        %4377 = vmatpush2.bf16.msra.mxu0 0
        %4378 = vmatprep.mubr.bf16.mxu0 0
        %4379 = vmatmul.mubr.bf16.gmra.mxu0 %v3947
        %v4380 = vpop.f32.mrf.mxu0
        %v4381 = vadd.f32 %v4220, %v4380
        %v4382 = vpop.f32.mrf.mxu0
        %v4383 = vpop.f32.mrf.mxu0
        %v4384 = vadd.f32 %v4223, %v4383
        %v4385 = vpop.f32.mrf.mxu0
        %4386 = vmatprep.mubr.bf16.mxu0 0
        %4387 = vmatmul.mubr.bf16.gmra.mxu0 %v3950
        %v4388 = vpop.f32.mrf.mxu0
        %v4389 = vadd.f32 %v4228, %v4388
        %v4390 = vpop.f32.mrf.mxu0
        %v4391 = vpop.f32.mrf.mxu0
        %v4392 = vadd.f32 %v4231, %v4391
        %v4393 = vpop.f32.mrf.mxu0
        %4394 = vmatprep.mubr.bf16.mxu0 0
        %4395 = vmatmul.mubr.bf16.gmra.mxu0 %v3953
        %v4396 = vpop.f32.mrf.mxu0
        %v4397 = vadd.f32 %v4236, %v4396
        %v4398 = vpop.f32.mrf.mxu0
        %v4399 = vpop.f32.mrf.mxu0
        %v4400 = vadd.f32 %v4239, %v4399
        %v4401 = vpop.f32.mrf.mxu0
        %4402 = vmatprep.mubr.bf16.mxu0 0
        %4403 = vmatmul.mubr.bf16.gmra.mxu0 %v3956
        %v4404 = vpop.f32.mrf.mxu0
        %v4405 = vadd.f32 %v4244, %v4404
        %v4406 = vpop.f32.mrf.mxu0
        %v4407 = vpop.f32.mrf.mxu0
        %v4408 = vadd.f32 %v4247, %v4407
        %v4409 = vpop.f32.mrf.mxu0
        %4410 = vmatprep.mubr.bf16.mxu0 0
        %4411 = vmatmul.mubr.bf16.gmra.mxu0 %v3959
        %v4412 = vpop.f32.mrf.mxu0
        %v4413 = vadd.f32 %v4252, %v4412
        %v4414 = vpop.f32.mrf.mxu0
        %v4415 = vpop.f32.mrf.mxu0
        %v4416 = vadd.f32 %v4255, %v4415
        %v4417 = vpop.f32.mrf.mxu0
        %4418 = vmatprep.mubr.bf16.mxu0 0
        %4419 = vmatmul.mubr.bf16.gmra.mxu0 %v3962
        %v4420 = vpop.f32.mrf.mxu0
        %v4421 = vadd.f32 %v4260, %v4420
        %v4422 = vpop.f32.mrf.mxu0
        %v4423 = vpop.f32.mrf.mxu0
        %v4424 = vadd.f32 %v4263, %v4423
        %v4425 = vpop.f32.mrf.mxu0
        %4426 = vmatprep.mubr.bf16.mxu0 0
        %4427 = vmatmul.mubr.bf16.gmra.mxu0 %v3965
        %v4428 = vpop.f32.mrf.mxu0
        %v4429 = vadd.f32 %v4268, %v4428
        %v4430 = vpop.f32.mrf.mxu0
        %v4431 = vpop.f32.mrf.mxu0
        %v4432 = vadd.f32 %v4271, %v4431
        %v4433 = vpop.f32.mrf.mxu0
        %4434 = vmatprep.mubr.bf16.mxu0 0
        %4435 = vmatmul.mubr.bf16.gmra.mxu0 %v3968
        %v4436 = vpop.f32.mrf.mxu0
        %v4437 = vadd.f32 %v4276, %v4436
        %v4438 = vpop.f32.mrf.mxu0
        %v4439 = vpop.f32.mrf.mxu0
        %v4440 = vadd.f32 %v4279, %v4439
        %v4441 = vpop.f32.mrf.mxu0
        %4442 = vmatprep.mubr.bf16.mxu0 0
        %4443 = vmatmul.mubr.bf16.gmra.mxu0 %v3971
        %v4444 = vpop.f32.mrf.mxu0
        %v4445 = vadd.f32 %v4284, %v4444
        %v4446 = vpop.f32.mrf.mxu0
        %v4447 = vpop.f32.mrf.mxu0
        %v4448 = vadd.f32 %v4287, %v4447
        %v4449 = vpop.f32.mrf.mxu0
        %4450 = vmatprep.mubr.bf16.mxu0 0
        %4451 = vmatmul.mubr.bf16.gmra.mxu0 %v3974
        %v4452 = vpop.f32.mrf.mxu0
        %v4453 = vadd.f32 %v4292, %v4452
        %v4454 = vpop.f32.mrf.mxu0
        %v4455 = vpop.f32.mrf.mxu0
        %v4456 = vadd.f32 %v4295, %v4455
        %v4457 = vpop.f32.mrf.mxu0
        %4458 = vmatprep.mubr.bf16.mxu0 0
        %4459 = vmatmul.mubr.bf16.gmra.mxu0 %v3977
        %v4460 = vpop.f32.mrf.mxu0
        %v4461 = vadd.f32 %v4300, %v4460
        %v4462 = vpop.f32.mrf.mxu0
        %v4463 = vpop.f32.mrf.mxu0
        %v4464 = vadd.f32 %v4303, %v4463
        %v4465 = vpop.f32.mrf.mxu0
        %4466 = vmatprep.mubr.bf16.mxu0 0
        %4467 = vmatmul.mubr.bf16.gmra.mxu0 %v3980
        %v4468 = vpop.f32.mrf.mxu0
        %v4469 = vadd.f32 %v4308, %v4468
        %v4470 = vpop.f32.mrf.mxu0
        %v4471 = vpop.f32.mrf.mxu0
        %v4472 = vadd.f32 %v4311, %v4471
        %v4473 = vpop.f32.mrf.mxu0
        %4474 = vmatprep.mubr.bf16.mxu0 0
        %4475 = vmatmul.mubr.bf16.gmra.mxu0 %v3983
        %v4476 = vpop.f32.mrf.mxu0
        %v4477 = vadd.f32 %v4316, %v4476
        %v4478 = vpop.f32.mrf.mxu0
        %v4479 = vpop.f32.mrf.mxu0
        %v4480 = vadd.f32 %v4319, %v4479
        %v4481 = vpop.f32.mrf.mxu0
        %4482 = vmatprep.mubr.bf16.mxu0 0
        %4483 = vmatmul.mubr.bf16.gmra.mxu0 %v3986
        %v4484 = vpop.f32.mrf.mxu0
        %v4485 = vadd.f32 %v4324, %v4484
        %v4486 = vpop.f32.mrf.mxu0
        %v4487 = vpop.f32.mrf.mxu0
        %v4488 = vadd.f32 %v4327, %v4487
        %v4489 = vpop.f32.mrf.mxu0
        %4490 = vmatprep.mubr.bf16.mxu0 0
        %4491 = vmatmul.mubr.bf16.gmra.mxu0 %v3989
        %v4492 = vpop.f32.mrf.mxu0
        %v4493 = vadd.f32 %v4332, %v4492
        %v4494 = vpop.f32.mrf.mxu0
        %v4495 = vpop.f32.mrf.mxu0
        %v4496 = vadd.f32 %v4335, %v4495
        %v4497 = vpop.f32.mrf.mxu0
        %4498 = vmatprep.mubr.bf16.mxu0 0
        %4499 = vmatmul.mubr.bf16.gmra.mxu0 %v3992
        %v4500 = vpop.f32.mrf.mxu0
        %v4501 = vadd.f32 %v4340, %v4500
        %v4502 = vpop.f32.mrf.mxu0
        %v4503 = vpop.f32.mrf.mxu0
        %v4504 = vadd.f32 %v4343, %v4503
        %v4505 = vpop.f32.mrf.mxu0
        %4506 = vdwg.mxu0
        %v4507 = vadd.f32 %v3546, %v4381
        %v4508 = vadd.f32 %v3549, %v4384
        %v4509 = vadd.f32 %v3554, %v4389
        %v4510 = vadd.f32 %v3557, %v4392
        %v4511 = vadd.f32 %v3562, %v4397
        %v4512 = vadd.f32 %v3565, %v4400
        %v4513 = vadd.f32 %v3570, %v4405
        %v4514 = vadd.f32 %v3573, %v4408
        %v4515 = vadd.f32 %v3578, %v4413
        %v4516 = vadd.f32 %v3581, %v4416
        %v4517 = vadd.f32 %v3586, %v4421
        %v4518 = vadd.f32 %v3589, %v4424
        %v4519 = vadd.f32 %v3594, %v4429
        %v4520 = vadd.f32 %v3597, %v4432
        %v4521 = vadd.f32 %v3602, %v4437
        %v4522 = vadd.f32 %v3605, %v4440
        %v4523 = vadd.f32 %v3610, %v4445
        %v4524 = vadd.f32 %v3613, %v4448
        %v4525 = vadd.f32 %v3618, %v4453
        %v4526 = vadd.f32 %v3621, %v4456
        %v4527 = vadd.f32 %v3626, %v4461
        %v4528 = vadd.f32 %v3629, %v4464
        %v4529 = vadd.f32 %v3634, %v4469
        %v4530 = vadd.f32 %v3637, %v4472
        %v4531 = vadd.f32 %v3642, %v4477
        %v4532 = vadd.f32 %v3645, %v4480
        %v4533 = vadd.f32 %v3650, %v4485
        %v4534 = vadd.f32 %v3653, %v4488
        %v4535 = vadd.f32 %v3658, %v4493
        %v4536 = vadd.f32 %v3661, %v4496
        %v4537 = vadd.f32 %v3666, %v4501
        %v4538 = vadd.f32 %v3669, %v4504
        %v4539 = vld [vmem:[%s4] sm:$0x1]
        %v4541 = vlaneseq
        %v4542 = vshrl.u32 %v4541, 7
        %v4543 = vsub.s32 0, %v4542
        %v4544 = vrot.slane %v4539, %v4543
        %v4546 = vadd.f32 %v4507, %v4544
        %v4547 = vadd.f32 %v4508, %v4544
        %v4548 = vadd.f32 %v4509, %v4544
        %v4549 = vadd.f32 %v4510, %v4544
        %v4550 = vadd.f32 %v4511, %v4544
        %v4551 = vadd.f32 %v4512, %v4544
        %v4552 = vadd.f32 %v4513, %v4544
        %v4553 = vadd.f32 %v4514, %v4544
        %v4554 = vadd.f32 %v4515, %v4544
        %v4555 = vadd.f32 %v4516, %v4544
        %v4556 = vadd.f32 %v4517, %v4544
        %v4557 = vadd.f32 %v4518, %v4544
        %v4558 = vadd.f32 %v4519, %v4544
        %v4559 = vadd.f32 %v4520, %v4544
        %v4560 = vadd.f32 %v4521, %v4544
        %v4561 = vadd.f32 %v4522, %v4544
        %v4562 = vadd.f32 %v4523, %v4544
        %v4563 = vadd.f32 %v4524, %v4544
        %v4564 = vadd.f32 %v4525, %v4544
        %v4565 = vadd.f32 %v4526, %v4544
        %v4566 = vadd.f32 %v4527, %v4544
        %v4567 = vadd.f32 %v4528, %v4544
        %v4568 = vadd.f32 %v4529, %v4544
        %v4569 = vadd.f32 %v4530, %v4544
        %v4570 = vadd.f32 %v4531, %v4544
        %v4571 = vadd.f32 %v4532, %v4544
        %v4572 = vadd.f32 %v4533, %v4544
        %v4573 = vadd.f32 %v4534, %v4544
        %v4574 = vadd.f32 %v4535, %v4544
        %v4575 = vadd.f32 %v4536, %v4544
        %v4576 = vadd.f32 %v4537, %v4544
        %v4577 = vadd.f32 %v4538, %v4544
        %v4578 = vpack.c.bf16 %v4547, %v4546
        %v4579 = vpack.c.bf16 %v4549, %v4548
        %v4580 = vpack.c.bf16 %v4551, %v4550
        %v4581 = vpack.c.bf16 %v4553, %v4552
        %v4582 = vpack.c.bf16 %v4555, %v4554
        %v4583 = vpack.c.bf16 %v4557, %v4556
        %v4584 = vpack.c.bf16 %v4559, %v4558
        %v4585 = vpack.c.bf16 %v4561, %v4560
        %v4586 = vpack.c.bf16 %v4563, %v4562
        %v4587 = vpack.c.bf16 %v4565, %v4564
        %v4588 = vpack.c.bf16 %v4567, %v4566
        %v4589 = vpack.c.bf16 %v4569, %v4568
        %v4590 = vpack.c.bf16 %v4571, %v4570
        %v4591 = vpack.c.bf16 %v4573, %v4572
        %v4592 = vpack.c.bf16 %v4575, %v4574
        %v4593 = vpack.c.bf16 %v4577, %v4576
        %v4594 = vld [vmem:[#allocation9] sm:$0xf]
        %v4595 = vld [vmem:[#allocation9 + $0x4] sm:$0xf]
        %v4596 = vld [vmem:[#allocation9 + $0x8] sm:$0xf]
        %v4597 = vld [vmem:[#allocation9 + $0xc] sm:$0xf]
        %v4598 = vld [vmem:[#allocation9 + $0x10] sm:$0xf]
        %v4599 = vld [vmem:[#allocation9 + $0x14] sm:$0xf]
        %v4600 = vld [vmem:[#allocation9 + $0x18] sm:$0xf]
        %v4601 = vld [vmem:[#allocation9 + $0x1c] sm:$0xf]
        %v4602 = vld [vmem:[#allocation9 + $0x20] sm:$0xf]
        %v4603 = vld [vmem:[#allocation9 + $0x24] sm:$0xf]
        %v4604 = vld [vmem:[#allocation9 + $0x28] sm:$0xf]
        %v4605 = vld [vmem:[#allocation9 + $0x2c] sm:$0xf]
        %v4606 = vld [vmem:[#allocation9 + $0x30] sm:$0xf]
        %v4607 = vld [vmem:[#allocation9 + $0x34] sm:$0xf]
        %v4608 = vld [vmem:[#allocation9 + $0x38] sm:$0xf]
        %v4609 = vld [vmem:[#allocation9 + $0x3c] sm:$0xf]
        %v4610 = vld [vmem:[%s6] sm:$0x1]
        %v4612 = vlaneseq
        %v4613 = vshrl.u32 %v4612, 7
        %v4614 = vsub.s32 0, %v4613
        %v4615 = vrot.slane %v4610, %v4614
        %v4633 = vunpack.c.l.b16 %v4594
        %v4634 = vunpack.c.l.b16 %v4595
        %v4635 = vunpack.c.l.b16 %v4596
        %v4636 = vunpack.c.l.b16 %v4597
        %v4637 = vunpack.c.l.b16 %v4598
        %v4638 = vunpack.c.l.b16 %v4599
        %v4639 = vunpack.c.l.b16 %v4600
        %v4640 = vunpack.c.l.b16 %v4601
        %v4641 = vunpack.c.l.b16 %v4602
        %v4642 = vunpack.c.l.b16 %v4603
        %v4643 = vunpack.c.l.b16 %v4604
        %v4644 = vunpack.c.l.b16 %v4605
        %v4645 = vunpack.c.l.b16 %v4606
        %v4646 = vunpack.c.l.b16 %v4607
        %v4647 = vunpack.c.l.b16 %v4608
        %v4648 = vunpack.c.l.b16 %v4609
        %v4649 = vpack.c.b16 %v4634, %v4633
        %v4650 = vpack.c.b16 %v4636, %v4635
        %v4651 = vpack.c.b16 %v4638, %v4637
        %v4652 = vpack.c.b16 %v4640, %v4639
        %v4653 = vpack.c.b16 %v4642, %v4641
        %v4654 = vpack.c.b16 %v4644, %v4643
        %v4655 = vpack.c.b16 %v4646, %v4645
        %v4656 = vpack.c.b16 %v4648, %v4647
        %4665 = vmatprep.subr.bf16.mxu0 0
        %4666 = vmatpush1.bf16.msra.mxu0 %v4656
        %4667 = vmatprep.subr.bf16.mxu0 0
        %4668 = vmatpush1.bf16.msra.mxu0 %v4655
        %4669 = vmatprep.subr.bf16.mxu0 0
        %4670 = vmatpush1.bf16.msra.mxu0 %v4654
        %4671 = vmatprep.subr.bf16.mxu0 0
        %4672 = vmatpush1.bf16.msra.mxu0 %v4653
        %4673 = vmatprep.subr.bf16.mxu0 0
        %4674 = vmatpush1.bf16.msra.mxu0 %v4652
        %4675 = vmatprep.subr.bf16.mxu0 0
        %4676 = vmatpush1.bf16.msra.mxu0 %v4651
        %4677 = vmatprep.subr.bf16.mxu0 0
        %4678 = vmatpush1.bf16.msra.mxu0 %v4650
        %4679 = vmatprep.subr.bf16.mxu0 0
        %4680 = vmatpush1.bf16.msra.mxu0 %v4649
        %4681 = vmatprep.subr.bf16.mxu0 0
        %4682 = vmatpush2.bf16.msra.mxu0 0
        %4683 = vmatprep.subr.bf16.mxu0 0
        %4684 = vmatpush2.bf16.msra.mxu0 0
        %4685 = vmatprep.subr.bf16.mxu0 0
        %4686 = vmatpush2.bf16.msra.mxu0 0
        %4687 = vmatprep.subr.bf16.mxu0 0
        %4688 = vmatpush2.bf16.msra.mxu0 0
        %4689 = vmatprep.subr.bf16.mxu0 0
        %4690 = vmatpush2.bf16.msra.mxu0 0
        %4691 = vmatprep.subr.bf16.mxu0 0
        %4692 = vmatpush2.bf16.msra.mxu0 0
        %4693 = vmatprep.subr.bf16.mxu0 0
        %4694 = vmatpush2.bf16.msra.mxu0 0
        %4695 = vmatprep.subr.bf16.mxu0 0
        %4696 = vmatpush2.bf16.msra.mxu0 0
        %4697 = vmatprep.mubr.bf16.mxu0 0
        %4698 = vmatmul.mubr.bf16.gmra.mxu0 %v4578
        %v4699 = vpop.f32.mrf.mxu0
        %v4700 = vadd.f32 %v4615, %v4699
        %v4701 = vpop.f32.mrf.mxu0
        %v4702 = vpop.f32.mrf.mxu0
        %v4703 = vadd.f32 %v4615, %v4702
        %v4704 = vpop.f32.mrf.mxu0
        %4705 = vmatprep.mubr.bf16.mxu0 0
        %4706 = vmatmul.mubr.bf16.gmra.mxu0 %v4579
        %v4707 = vpop.f32.mrf.mxu0
        %v4708 = vadd.f32 %v4615, %v4707
        %v4709 = vpop.f32.mrf.mxu0
        %v4710 = vpop.f32.mrf.mxu0
        %v4711 = vadd.f32 %v4615, %v4710
        %v4712 = vpop.f32.mrf.mxu0
        %4713 = vmatprep.mubr.bf16.mxu0 0
        %4714 = vmatmul.mubr.bf16.gmra.mxu0 %v4580
        %v4715 = vpop.f32.mrf.mxu0
        %v4716 = vadd.f32 %v4615, %v4715
        %v4717 = vpop.f32.mrf.mxu0
        %v4718 = vpop.f32.mrf.mxu0
        %v4719 = vadd.f32 %v4615, %v4718
        %v4720 = vpop.f32.mrf.mxu0
        %4721 = vmatprep.mubr.bf16.mxu0 0
        %4722 = vmatmul.mubr.bf16.gmra.mxu0 %v4581
        %v4723 = vpop.f32.mrf.mxu0
        %v4724 = vadd.f32 %v4615, %v4723
        %v4725 = vpop.f32.mrf.mxu0
        %v4726 = vpop.f32.mrf.mxu0
        %v4727 = vadd.f32 %v4615, %v4726
        %v4728 = vpop.f32.mrf.mxu0
        %4729 = vmatprep.mubr.bf16.mxu0 0
        %4730 = vmatmul.mubr.bf16.gmra.mxu0 %v4582
        %v4731 = vpop.f32.mrf.mxu0
        %v4732 = vadd.f32 %v4615, %v4731
        %v4733 = vpop.f32.mrf.mxu0
        %v4734 = vpop.f32.mrf.mxu0
        %v4735 = vadd.f32 %v4615, %v4734
        %v4736 = vpop.f32.mrf.mxu0
        %4737 = vmatprep.mubr.bf16.mxu0 0
        %4738 = vmatmul.mubr.bf16.gmra.mxu0 %v4583
        %v4739 = vpop.f32.mrf.mxu0
        %v4740 = vadd.f32 %v4615, %v4739
        %v4741 = vpop.f32.mrf.mxu0
        %v4742 = vpop.f32.mrf.mxu0
        %v4743 = vadd.f32 %v4615, %v4742
        %v4744 = vpop.f32.mrf.mxu0
        %4745 = vmatprep.mubr.bf16.mxu0 0
        %4746 = vmatmul.mubr.bf16.gmra.mxu0 %v4584
        %v4747 = vpop.f32.mrf.mxu0
        %v4748 = vadd.f32 %v4615, %v4747
        %v4749 = vpop.f32.mrf.mxu0
        %v4750 = vpop.f32.mrf.mxu0
        %v4751 = vadd.f32 %v4615, %v4750
        %v4752 = vpop.f32.mrf.mxu0
        %4753 = vmatprep.mubr.bf16.mxu0 0
        %4754 = vmatmul.mubr.bf16.gmra.mxu0 %v4585
        %v4755 = vpop.f32.mrf.mxu0
        %v4756 = vadd.f32 %v4615, %v4755
        %v4757 = vpop.f32.mrf.mxu0
        %v4758 = vpop.f32.mrf.mxu0
        %v4759 = vadd.f32 %v4615, %v4758
        %v4760 = vpop.f32.mrf.mxu0
        %4761 = vmatprep.mubr.bf16.mxu0 0
        %4762 = vmatmul.mubr.bf16.gmra.mxu0 %v4586
        %v4763 = vpop.f32.mrf.mxu0
        %v4764 = vadd.f32 %v4615, %v4763
        %v4765 = vpop.f32.mrf.mxu0
        %v4766 = vpop.f32.mrf.mxu0
        %v4767 = vadd.f32 %v4615, %v4766
        %v4768 = vpop.f32.mrf.mxu0
        %4769 = vmatprep.mubr.bf16.mxu0 0
        %4770 = vmatmul.mubr.bf16.gmra.mxu0 %v4587
        %v4771 = vpop.f32.mrf.mxu0
        %v4772 = vadd.f32 %v4615, %v4771
        %v4773 = vpop.f32.mrf.mxu0
        %v4774 = vpop.f32.mrf.mxu0
        %v4775 = vadd.f32 %v4615, %v4774
        %v4776 = vpop.f32.mrf.mxu0
        %4777 = vmatprep.mubr.bf16.mxu0 0
        %4778 = vmatmul.mubr.bf16.gmra.mxu0 %v4588
        %v4779 = vpop.f32.mrf.mxu0
        %v4780 = vadd.f32 %v4615, %v4779
        %v4781 = vpop.f32.mrf.mxu0
        %v4782 = vpop.f32.mrf.mxu0
        %v4783 = vadd.f32 %v4615, %v4782
        %v4784 = vpop.f32.mrf.mxu0
        %4785 = vmatprep.mubr.bf16.mxu0 0
        %4786 = vmatmul.mubr.bf16.gmra.mxu0 %v4589
        %v4787 = vpop.f32.mrf.mxu0
        %v4788 = vadd.f32 %v4615, %v4787
        %v4789 = vpop.f32.mrf.mxu0
        %v4790 = vpop.f32.mrf.mxu0
        %v4791 = vadd.f32 %v4615, %v4790
        %v4792 = vpop.f32.mrf.mxu0
        %4793 = vmatprep.mubr.bf16.mxu0 0
        %4794 = vmatmul.mubr.bf16.gmra.mxu0 %v4590
        %v4795 = vpop.f32.mrf.mxu0
        %v4796 = vadd.f32 %v4615, %v4795
        %v4797 = vpop.f32.mrf.mxu0
        %v4798 = vpop.f32.mrf.mxu0
        %v4799 = vadd.f32 %v4615, %v4798
        %v4800 = vpop.f32.mrf.mxu0
        %4801 = vmatprep.mubr.bf16.mxu0 0
        %4802 = vmatmul.mubr.bf16.gmra.mxu0 %v4591
        %v4803 = vpop.f32.mrf.mxu0
        %v4804 = vadd.f32 %v4615, %v4803
        %v4805 = vpop.f32.mrf.mxu0
        %v4806 = vpop.f32.mrf.mxu0
        %v4807 = vadd.f32 %v4615, %v4806
        %v4808 = vpop.f32.mrf.mxu0
        %4809 = vmatprep.mubr.bf16.mxu0 0
        %4810 = vmatmul.mubr.bf16.gmra.mxu0 %v4592
        %v4811 = vpop.f32.mrf.mxu0
        %v4812 = vadd.f32 %v4615, %v4811
        %v4813 = vpop.f32.mrf.mxu0
        %v4814 = vpop.f32.mrf.mxu0
        %v4815 = vadd.f32 %v4615, %v4814
        %v4816 = vpop.f32.mrf.mxu0
        %4817 = vmatprep.mubr.bf16.mxu0 0
        %4818 = vmatmul.mubr.bf16.gmra.mxu0 %v4593
        %v4819 = vpop.f32.mrf.mxu0
        %v4820 = vadd.f32 %v4615, %v4819
        %v4821 = vpop.f32.mrf.mxu0
        %v4822 = vpop.f32.mrf.mxu0
        %v4823 = vadd.f32 %v4615, %v4822
        %v4824 = vpop.f32.mrf.mxu0
        %4825 = vdwg.mxu0
        %v4826 = vunpack.c.l.bf16 %v344
        %v4827 = vunpack.c.l.bf16 %v345
        %v4828 = vunpack.c.l.bf16 %v346
        %v4829 = vunpack.c.l.bf16 %v347
        %v4830 = vunpack.c.l.bf16 %v348
        %v4831 = vunpack.c.l.bf16 %v349
        %v4832 = vunpack.c.l.bf16 %v350
        %v4833 = vunpack.c.l.bf16 %v351
        %v4834 = vunpack.c.l.bf16 %v352
        %v4835 = vunpack.c.l.bf16 %v353
        %v4836 = vunpack.c.l.bf16 %v354
        %v4837 = vunpack.c.l.bf16 %v355
        %v4838 = vunpack.c.l.bf16 %v356
        %v4839 = vunpack.c.l.bf16 %v357
        %v4840 = vunpack.c.l.bf16 %v358
        %v4841 = vunpack.c.l.bf16 %v359
        %v4842 = vunpack.c.l.bf16 %v360
        %v4843 = vunpack.c.l.bf16 %v361
        %v4844 = vunpack.c.l.bf16 %v362
        %v4845 = vunpack.c.l.bf16 %v363
        %v4846 = vunpack.c.l.bf16 %v364
        %v4847 = vunpack.c.l.bf16 %v365
        %v4848 = vunpack.c.l.bf16 %v366
        %v4849 = vunpack.c.l.bf16 %v367
        %v4850 = vunpack.c.l.bf16 %v368
        %v4851 = vunpack.c.l.bf16 %v369
        %v4852 = vunpack.c.l.bf16 %v370
        %v4853 = vunpack.c.l.bf16 %v371
        %v4854 = vunpack.c.l.bf16 %v372
        %v4855 = vunpack.c.l.bf16 %v373
        %v4856 = vunpack.c.l.bf16 %v374
        %v4857 = vunpack.c.l.bf16 %v375
        %v4858 = vadd.f32 %v4700, %v4826
        %v4859 = vadd.f32 %v4703, %v4827
        %v4860 = vadd.f32 %v4708, %v4828
        %v4861 = vadd.f32 %v4711, %v4829
        %v4862 = vadd.f32 %v4716, %v4830
        %v4863 = vadd.f32 %v4719, %v4831
        %v4864 = vadd.f32 %v4724, %v4832
        %v4865 = vadd.f32 %v4727, %v4833
        %v4866 = vadd.f32 %v4732, %v4834
        %v4867 = vadd.f32 %v4735, %v4835
        %v4868 = vadd.f32 %v4740, %v4836
        %v4869 = vadd.f32 %v4743, %v4837
        %v4870 = vadd.f32 %v4748, %v4838
        %v4871 = vadd.f32 %v4751, %v4839
        %v4872 = vadd.f32 %v4756, %v4840
        %v4873 = vadd.f32 %v4759, %v4841
        %v4874 = vadd.f32 %v4764, %v4842
        %v4875 = vadd.f32 %v4767, %v4843
        %v4876 = vadd.f32 %v4772, %v4844
        %v4877 = vadd.f32 %v4775, %v4845
        %v4878 = vadd.f32 %v4780, %v4846
        %v4879 = vadd.f32 %v4783, %v4847
        %v4880 = vadd.f32 %v4788, %v4848
        %v4881 = vadd.f32 %v4791, %v4849
        %v4882 = vadd.f32 %v4796, %v4850
        %v4883 = vadd.f32 %v4799, %v4851
        %v4884 = vadd.f32 %v4804, %v4852
        %v4885 = vadd.f32 %v4807, %v4853
        %v4886 = vadd.f32 %v4812, %v4854
        %v4887 = vadd.f32 %v4815, %v4855
        %v4888 = vadd.f32 %v4820, %v4856
        %v4889 = vadd.f32 %v4823, %v4857
        %v4890 = vmax.f32 %v4858, 0.0
        %v4891 = vmax.f32 %v4859, 0.0
        %v4892 = vmax.f32 %v4860, 0.0
        %v4893 = vmax.f32 %v4861, 0.0
        %v4894 = vmax.f32 %v4862, 0.0
        %v4895 = vmax.f32 %v4863, 0.0
        %v4896 = vmax.f32 %v4864, 0.0
        %v4897 = vmax.f32 %v4865, 0.0
        %v4898 = vmax.f32 %v4866, 0.0
        %v4899 = vmax.f32 %v4867, 0.0
        %v4900 = vmax.f32 %v4868, 0.0
        %v4901 = vmax.f32 %v4869, 0.0
        %v4902 = vmax.f32 %v4870, 0.0
        %v4903 = vmax.f32 %v4871, 0.0
        %v4904 = vmax.f32 %v4872, 0.0
        %v4905 = vmax.f32 %v4873, 0.0
        %v4906 = vmax.f32 %v4874, 0.0
        %v4907 = vmax.f32 %v4875, 0.0
        %v4908 = vmax.f32 %v4876, 0.0
        %v4909 = vmax.f32 %v4877, 0.0
        %v4910 = vmax.f32 %v4878, 0.0
        %v4911 = vmax.f32 %v4879, 0.0
        %v4912 = vmax.f32 %v4880, 0.0
        %v4913 = vmax.f32 %v4881, 0.0
        %v4914 = vmax.f32 %v4882, 0.0
        %v4915 = vmax.f32 %v4883, 0.0
        %v4916 = vmax.f32 %v4884, 0.0
        %v4917 = vmax.f32 %v4885, 0.0
        %v4918 = vmax.f32 %v4886, 0.0
        %v4919 = vmax.f32 %v4887, 0.0
        %v4920 = vmax.f32 %v4888, 0.0
        %v4921 = vmax.f32 %v4889, 0.0
        %v4922 = vpack.c.bf16 %v4891, %v4890
        %v4923 = vpack.c.bf16 %v4893, %v4892
        %v4924 = vpack.c.bf16 %v4895, %v4894
        %v4925 = vpack.c.bf16 %v4897, %v4896
        %v4926 = vpack.c.bf16 %v4899, %v4898
        %v4927 = vpack.c.bf16 %v4901, %v4900
        %v4928 = vpack.c.bf16 %v4903, %v4902
        %v4929 = vpack.c.bf16 %v4905, %v4904
        %v4930 = vpack.c.bf16 %v4907, %v4906
        %v4931 = vpack.c.bf16 %v4909, %v4908
        %v4932 = vpack.c.bf16 %v4911, %v4910
        %v4933 = vpack.c.bf16 %v4913, %v4912
        %v4934 = vpack.c.bf16 %v4915, %v4914
        %v4935 = vpack.c.bf16 %v4917, %v4916
        %v4936 = vpack.c.bf16 %v4919, %v4918
        %v4937 = vpack.c.bf16 %v4921, %v4920
        %v4954 = vunpack.c.l.b16 %v4922
        %v4955 = vunpack.c.h.b16 %v4922
        %v4956 = vunpack.c.l.b16 %v4923
        %v4957 = vunpack.c.h.b16 %v4923
        %v4958 = vunpack.c.l.b16 %v4924
        %v4959 = vunpack.c.h.b16 %v4924
        %v4960 = vunpack.c.l.b16 %v4925
        %v4961 = vunpack.c.h.b16 %v4925
        %v4962 = vunpack.c.l.b16 %v4926
        %v4963 = vunpack.c.h.b16 %v4926
        %v4964 = vunpack.c.l.b16 %v4927
        %v4965 = vunpack.c.h.b16 %v4927
        %v4966 = vunpack.c.l.b16 %v4928
        %v4967 = vunpack.c.h.b16 %v4928
        %v4968 = vunpack.c.l.b16 %v4929
        %v4969 = vunpack.c.h.b16 %v4929
        %v4970 = vunpack.c.l.b16 %v4930
        %v4971 = vunpack.c.h.b16 %v4930
        %v4972 = vunpack.c.l.b16 %v4931
        %v4973 = vunpack.c.h.b16 %v4931
        %v4974 = vunpack.c.l.b16 %v4932
        %v4975 = vunpack.c.h.b16 %v4932
        %v4976 = vunpack.c.l.b16 %v4933
        %v4977 = vunpack.c.h.b16 %v4933
        %v4978 = vunpack.c.l.b16 %v4934
        %v4979 = vunpack.c.h.b16 %v4934
        %v4980 = vunpack.c.l.b16 %v4935
        %v4981 = vunpack.c.h.b16 %v4935
        %v4982 = vunpack.c.l.b16 %v4936
        %v4983 = vunpack.c.h.b16 %v4936
        %v4984 = vunpack.c.l.b16 %v4937
        %v4985 = vunpack.c.h.b16 %v4937
        %v4986 = vpack.c.b16 %v4954, %v4954
        %v4987 = vpack.c.b16 %v4955, %v4955
        %v4988 = vpack.c.b16 %v4956, %v4956
        %v4989 = vpack.c.b16 %v4957, %v4957
        %v4990 = vpack.c.b16 %v4958, %v4958
        %v4991 = vpack.c.b16 %v4959, %v4959
        %v4992 = vpack.c.b16 %v4960, %v4960
        %v4993 = vpack.c.b16 %v4961, %v4961
        %v4994 = vpack.c.b16 %v4962, %v4962
        %v4995 = vpack.c.b16 %v4963, %v4963
        %v4996 = vpack.c.b16 %v4964, %v4964
        %v4997 = vpack.c.b16 %v4965, %v4965
        %v4998 = vpack.c.b16 %v4966, %v4966
        %v4999 = vpack.c.b16 %v4967, %v4967
        %v5000 = vpack.c.b16 %v4968, %v4968
        %v5001 = vpack.c.b16 %v4969, %v4969
        %v5002 = vpack.c.b16 %v4970, %v4970
        %v5003 = vpack.c.b16 %v4971, %v4971
        %v5004 = vpack.c.b16 %v4972, %v4972
        %v5005 = vpack.c.b16 %v4973, %v4973
        %v5006 = vpack.c.b16 %v4974, %v4974
        %v5007 = vpack.c.b16 %v4975, %v4975
        %v5008 = vpack.c.b16 %v4976, %v4976
        %v5009 = vpack.c.b16 %v4977, %v4977
        %v5010 = vpack.c.b16 %v4978, %v4978
        %v5011 = vpack.c.b16 %v4979, %v4979
        %v5012 = vpack.c.b16 %v4980, %v4980
        %v5013 = vpack.c.b16 %v4981, %v4981
        %v5014 = vpack.c.b16 %v4982, %v4982
        %v5015 = vpack.c.b16 %v4983, %v4983
        %v5016 = vpack.c.b16 %v4984, %v4984
        %v5017 = vpack.c.b16 %v4985, %v4985
        %5050 = vst [vmem:[%s340] sm:$0xf] %v4986
        %5051 = vst [vmem:[%s340 + $0x4] sm:$0xf] %v4987
        %5052 = vst [vmem:[%s340 + $0x8] sm:$0xf] %v4988
        %5053 = vst [vmem:[%s340 + $0xc] sm:$0xf] %v4989
        %5054 = vst [vmem:[%s340 + $0x10] sm:$0xf] %v4990
        %5055 = vst [vmem:[%s340 + $0x14] sm:$0xf] %v4991
        %5056 = vst [vmem:[%s340 + $0x18] sm:$0xf] %v4992
        %5057 = vst [vmem:[%s340 + $0x1c] sm:$0xf] %v4993
        %5058 = vst [vmem:[%s340 + $0x20] sm:$0xf] %v4994
        %5059 = vst [vmem:[%s340 + $0x24] sm:$0xf] %v4995
        %5060 = vst [vmem:[%s340 + $0x28] sm:$0xf] %v4996
        %5061 = vst [vmem:[%s340 + $0x2c] sm:$0xf] %v4997
        %5062 = vst [vmem:[%s340 + $0x30] sm:$0xf] %v4998
        %5063 = vst [vmem:[%s340 + $0x34] sm:$0xf] %v4999
        %5064 = vst [vmem:[%s340 + $0x38] sm:$0xf] %v5000
        %5065 = vst [vmem:[%s340 + $0x3c] sm:$0xf] %v5001
        %5066 = vst [vmem:[%s340 + $0x40] sm:$0xf] %v5002
        %5067 = vst [vmem:[%s340 + $0x44] sm:$0xf] %v5003
        %5068 = vst [vmem:[%s340 + $0x48] sm:$0xf] %v5004
        %5069 = vst [vmem:[%s340 + $0x4c] sm:$0xf] %v5005
        %5070 = vst [vmem:[%s340 + $0x50] sm:$0xf] %v5006
        %5071 = vst [vmem:[%s340 + $0x54] sm:$0xf] %v5007
        %5072 = vst [vmem:[%s340 + $0x58] sm:$0xf] %v5008
        %5073 = vst [vmem:[%s340 + $0x5c] sm:$0xf] %v5009
        %5074 = vst [vmem:[%s340 + $0x60] sm:$0xf] %v5010
        %5075 = vst [vmem:[%s340 + $0x64] sm:$0xf] %v5011
        %5076 = vst [vmem:[%s340 + $0x68] sm:$0xf] %v5012
        %5077 = vst [vmem:[%s340 + $0x6c] sm:$0xf] %v5013
        %5078 = vst [vmem:[%s340 + $0x70] sm:$0xf] %v5014
        %5079 = vst [vmem:[%s340 + $0x74] sm:$0xf] %v5015
        %5080 = vst [vmem:[%s340 + $0x78] sm:$0xf] %v5016
        %5081 = vst [vmem:[%s340 + $0x7c] sm:$0xf] %v5017
        %s5082 = sand.u32 %s186, 1
        %s5083 = scalar_lea.sflag [#allocation5], %s5082
        %s5084 = sand.u32 %s186, 1
        %s5085 = smul.addr %s5084, 128
        %s5086 = scalar_lea.vmem [#allocation11], %s5085
        // Predicated region
        $region65: #{tpu_custom_call.1} parent=47 // pred_check
          %p5087 = pneg %p196
        $region66: #{tpu_custom_call.1} parent=47 // pred_check_branch
          %5089 = sbr.rel (%p5087) target = $region68
        $region67: #{tpu_custom_call.1} parent=47 // pred_region
          %s5091 = ssub.s32 2048, 2048
          %5092 = vsyncadd %s5083, %s5091
          %s5093 = smul.addr %s26, 32
          %s5094 = smul.addr %s5093, 64
          %s5095 = scalar_lea.hbm %s7, %s5094
          %s5096 = sshll.u32 %s5086, 4
          %s5097 = int_to_ptr.vmem [resolvable:$true] %s5096
          %5102 = dma.vmem_to_hbm [thread:$0]  %s5097, 2048, %s5095, %s5083, 64, 64, 4
        $region68: #{tpu_custom_call.1} parent=47 // pred_fallthru
          _
      $region48: #{tpu_custom_call.1} parent=5 // pred_fallthru
        _
      %p5103 = scmp.le.s32.totalorder 2, %s21
      // Predicated region
      $region69: #{tpu_custom_call.1} parent=5 // pred_check
        %p5104 = pneg %p5103
      $region70: #{tpu_custom_call.1} parent=5 // pred_check_branch
        %5106 = sbr.rel (%p5104) target = $region72
      $region71: #{tpu_custom_call.1} parent=5 // pred_region
        %s5107 = ssub.s32 %s21, 2
        // Predicated region
        $region73: #{tpu_custom_call.1} parent=71 // pred_check
          %p5108 = pneg %p202
        $region74: #{tpu_custom_call.1} parent=71 // pred_check_branch
          %5110 = sbr.rel (%p5108) target = $region76
        $region75: #{tpu_custom_call.1} parent=71 // pred_region
          %s5111 = sand.u32 %s187, 1
          %s5112 = scalar_lea.sflag [#allocation5], %s5111
          %s5113 = sand.u32 %s187, 1
          %s5114 = smul.addr %s5113, 128
          %s5115 = scalar_lea.vmem [#allocation11], %s5114
          %5116 = dma.done %s5112, 2048
        $region76: #{tpu_custom_call.1} parent=71 // pred_fallthru
          _
      $region72: #{tpu_custom_call.1} parent=5 // pred_fallthru
        _
    $region6: #{tpu_custom_call.1} parent=1 // loop_footer
      %s25 = sadd.s32 1, %s21
    $region7: #{tpu_custom_call.1} parent=1 // loop_footer_branch
      %20 = sbr.rel target = $region3
    $region8: #{tpu_custom_call.1} parent=1 // loop_exit
      _
    %5117 = vsyncpa [#allocation4], 1
    %s5118 = scalar_lea.sflag [#allocation4], 1
    %5119 = vsyncpa %s5118, 1
    %5120 = vsyncpa [#allocation7], 1
    %5121 = vsyncpa [#allocation10], 1
    %5122 = vsyncpa [#allocation5], 1
    %s5123 = scalar_lea.sflag [#allocation5], 1
    %5124 = vsyncpa %s5123, 1

</llo_original>
